<compile_context>
chip_gen: v7x
topology: tpu7x:2x2x1
jax: 0.10.0
libtpu: 0.0.40
codegen_flags: <defaults>
</compile_context>

<pallas_src>
import jax
import jax.numpy as jnp
from jax import lax
from jax.experimental import pallas as pl
from jax.experimental.pallas import tpu as pltpu

SOS_token = 1

V = 128        # vocabulary size (lane-dense logits, == 128 lanes)
H = 32         # hidden size
S = 8          # input sequence length
L = 8          # max_length (number of greedy decode steps)
GP = 4 * H     # fused-gate width: [r | z | n_in | n_hid] = 128 lanes


def _gru_step(x, h, w_ref, b_ref):
    """One PyTorch-semantics GRU cell step as a SINGLE fused MXU push.

    x, h: (1, H) f32.
    w_ref: (2H, GP) bf16 with columns [W_r | W_z | W_in | W_hn] where the top H
      rows are the input weights and the bottom H rows the hidden weights
      (the n-gate halves live in separate column slots, the r/z halves are
      summed by the contraction itself).
    b_ref: (1, GP) f32 = [b_ir+b_hr | b_iz+b_hz | b_in | b_hn].
    """
    xh = jnp.concatenate([x, h], axis=1).astype(jnp.bfloat16)          # (1, 2H)
    g = jnp.dot(xh, w_ref[...], preferred_element_type=jnp.float32) + b_ref[...]
    rz = jax.nn.sigmoid(g[:, :2 * H])          # one EUP push for both r and z
    r = rz[:, :H]
    z = rz[:, H:2 * H]
    n = jnp.tanh(g[:, 2 * H:3 * H] + r * g[:, 3 * H:4 * H])
    return (1.0 - z) * n + z * h


def greedy_decoder_kernel(
    enc_x_ref,                                   # (S, H) f32 pre-gathered embeddings
    enc_w_ref, enc_b_ref,                        # (2H, GP) bf16, (1, GP) f32
    dec_emb_ref,                                 # (V, H) bf16
    dec_w_ref, dec_b_ref,                        # (2H, GP) bf16, (1, GP) f32
    wc_h_ref, wc_c_ref, bc_ref,                  # (H,H) bf16, (H,H) bf16, (1,H) f32
    wo_ref, bo_ref,                              # (H,V) bf16, (1,V) f32
    tokens_ref, scores_ref,                      # (1,128) int32 / f32 VMEM outputs
):
    # ---------------- encoder GRU recurrence (fully unrolled) ----------------
    h = jnp.zeros((1, H), jnp.float32)
    enc_rows = []
    for s in range(S):
        h = _gru_step(enc_x_ref[s:s + 1, :], h, enc_w_ref, enc_b_ref)
        enc_rows.append(h)
    enc_out = jnp.concatenate(enc_rows, axis=0)                       # (S, H) f32
    enc_out_bf = enc_out.astype(jnp.bfloat16)
    # Fold the context projection: (att @ enc_out) @ Wc == att @ (enc_out @ Wc).
    enc_proj_bf = jnp.dot(enc_out_bf, wc_c_ref[...],
                          preferred_element_type=jnp.float32
                          ).astype(jnp.bfloat16)                      # (S, H)

    # ---------------- greedy decode loop (fully unrolled, L static) ----------
    ids = lax.broadcasted_iota(jnp.int32, (1, V), 1)                  # V == 128 lanes
    tokens_acc = jnp.zeros((1, V), jnp.int32)
    scores_acc = jnp.zeros((1, V), jnp.float32)
    x = dec_emb_ref[SOS_token:SOS_token + 1, :].astype(jnp.float32)   # static slice

    for t in range(L):
        h = _gru_step(x, h, dec_w_ref, dec_b_ref)
        h_bf = h.astype(jnp.bfloat16)

        # Attention(method='dot').forward: dot_score -> softmax over seq axis.
        # Contract dim 1 of both operands (MXU transposed-RHS path on the
        # loop-invariant enc_out; no per-step XLU transpose materialized).
        att_logits = lax.dot_general(
            h_bf, enc_out_bf, (((1,), (1,)), ((), ())),
            preferred_element_type=jnp.float32)                       # (1, S)
        att_logits = att_logits - jnp.max(att_logits, axis=-1, keepdims=True)
        e_att = jnp.exp(att_logits)
        # Deferred normalization: the lane-reduce and the MXU push overlap.
        denom_att = jnp.sum(e_att, axis=-1, keepdims=True)            # (1, 1)
        ctx_proj = jnp.dot(e_att.astype(jnp.bfloat16), enc_proj_bf,
                           preferred_element_type=jnp.float32)        # (1, H)

        # tanh(W_c [h ; ctx]) with the ctx half folded into enc_proj above.
        concat_out = jnp.tanh(
            jnp.dot(h_bf, wc_h_ref[...], preferred_element_type=jnp.float32)
            + ctx_proj / denom_att + bc_ref[...])

        logits = (jnp.dot(concat_out.astype(jnp.bfloat16), wo_ref[...],
                          preferred_element_type=jnp.float32)
                  + bo_ref[...])                                      # (1, V)

        # torch.max(softmax(logits), dim=1): softmax is monotone, so take the
        # FIRST argmax over raw logits; max prob = 1 / sum(exp(l - max)).
        maxl = jnp.max(logits, axis=-1, keepdims=True)                # (1, 1)
        e = jnp.exp(logits - maxl)
        score = pl.reciprocal(jnp.sum(e, axis=-1, keepdims=True),
                              approx=True)                            # ~1e-3 rel err
        idx = jnp.min(jnp.where(logits >= maxl, ids, V),
                      axis=-1, keepdims=True)                         # (1,1) int32

        # Accumulate outputs in lane-dense vregs; single store after the loop.
        tokens_acc = jnp.where(ids == t, idx, tokens_acc)
        scores_acc = jnp.where(ids == t, score, scores_acc)

        # Next-token embedding via one-hot MXU gather (exact; no scalar round
        # trip through SMEM/sreg on the recurrence path).
        if t + 1 < L:
            onehot = jnp.where(ids == idx, 1.0, 0.0).astype(jnp.bfloat16)  # (1, V)
            x = jnp.dot(onehot, dec_emb_ref[...],
                        preferred_element_type=jnp.float32)           # (1, H)

    tokens_ref[...] = tokens_acc
    scores_ref[...] = scores_acc


def _pack_gru(wi, wh, bi, bh):
    """Pack per-gate GRU params into the single fused-matmul layout.

    wi, wh: (3, H, H) gate order (r, z, n), stored (in_features, out_features)
            (i.e. PyTorch weight_ih/weight_hh transposed and split per gate).
    bi, bh: (3, 1, H).
    Returns w (2H, GP) bf16 and b (1, GP) f32 such that for g = [x|h] @ w + b:
      g[:, 0:H]   = x@W_ir + h@W_hr + b_ir + b_hr   (r pre-activation)
      g[:, H:2H]  = x@W_iz + h@W_hz + b_iz + b_hz   (z pre-activation)
      g[:, 2H:3H] = x@W_in + b_in
      g[:, 3H:4H] = h@W_hn + b_hn                   (scaled by r in-kernel)
    """
    w = jnp.zeros((2 * H, GP), jnp.float32)
    w = w.at[:H, 0:H].set(wi[0]).at[H:, 0:H].set(wh[0])
    w = w.at[:H, H:2 * H].set(wi[1]).at[H:, H:2 * H].set(wh[1])
    w = w.at[:H, 2 * H:3 * H].set(wi[2])
    w = w.at[H:, 3 * H:4 * H].set(wh[2])
    b = jnp.zeros((1, GP), jnp.float32)
    b = b.at[:, 0:H].set(bi[0] + bh[0])
    b = b.at[:, H:2 * H].set(bi[1] + bh[1])
    b = b.at[:, 2 * H:3 * H].set(bi[2])
    b = b.at[:, 3 * H:4 * H].set(bh[2])
    return w.astype(jnp.bfloat16), b


def make_params(key):
    ks = jax.random.split(key, 15)
    scale = 1.0 / (H ** 0.5)

    def u(k, shape, s):
        return jax.random.uniform(k, shape, jnp.float32, -1.0, 1.0) * s

    enc_w, enc_b = _pack_gru(
        u(ks[1], (3, H, H), scale), u(ks[2], (3, H, H), scale),
        u(ks[3], (3, 1, H), scale), u(ks[4], (3, 1, H), scale))
    dec_w, dec_b = _pack_gru(
        u(ks[6], (3, H, H), scale), u(ks[7], (3, H, H), scale),
        u(ks[8], (3, 1, H), scale), u(ks[9], (3, 1, H), scale))

    return dict(
        enc_emb=u(ks[0], (V, H), 0.1),                          # f32, gathered host-side
        enc_w=enc_w, enc_b=enc_b,
        dec_emb=u(ks[5], (V, H), 0.1).astype(jnp.bfloat16),     # bf16, one-hot MXU gather
        dec_w=dec_w, dec_b=dec_b,
        wc_h=u(ks[10], (H, H), scale).astype(jnp.bfloat16),
        wc_c=u(ks[11], (H, H), scale).astype(jnp.bfloat16),
        bc=u(ks[12], (1, H), scale),
        wo=u(ks[13], (H, V), scale).astype(jnp.bfloat16),
        bo=u(ks[14], (1, V), scale),
    )


@jax.jit
def greedy_search_decode(input_seq, params):
    """Returns (all_tokens[int32, (L,)], all_scores[float32, (L,)])."""
    vmem = pl.BlockSpec(memory_space=pltpu.MemorySpace.VMEM)

    # Encoder embedding gather hoisted out of the kernel (free in the XLA wrapper).
    enc_x = jnp.take(params["enc_emb"], input_seq.astype(jnp.int32), axis=0)  # (S, H)

    # Everything stays VMEM-resident (~70 KiB total): no grid, no tiling — this
    # kernel is latency-bound on the 16-step recurrence, not DMA/VMEM-bound.
    fn = pl.pallas_call(
        greedy_decoder_kernel,
        out_shape=(jax.ShapeDtypeStruct((1, 128), jnp.int32),
                   jax.ShapeDtypeStruct((1, 128), jnp.float32)),
        in_specs=[vmem] * 11,
        out_specs=(vmem, vmem),
    )
    tokens_row, scores_row = fn(
        enc_x,
        params["enc_w"], params["enc_b"],
        params["dec_emb"], params["dec_w"], params["dec_b"],
        params["wc_h"], params["wc_c"], params["bc"],
        params["wo"], params["bo"],
    )
    return tokens_row[0, :L], scores_row[0, :L]


if __name__ == "__main__":
    key = jax.random.PRNGKey(0)
    kp, ki = jax.random.split(key)
    params = make_params(kp)

    # input_seq: (S,) token ids (batch of 1, seq-major); input_length == S
    # (i.e. unpadded — padded positions would need an attention mask).
    input_seq = jax.random.randint(ki, (S,), 3, V, dtype=jnp.int32)

    all_tokens, all_scores = jax.block_until_ready(
        greedy_search_decode(input_seq, params))

    assert all_tokens.shape == (L,) and all_tokens.dtype == jnp.int32
    assert all_scores.shape == (L,) and all_scores.dtype == jnp.float32
    print("KERNEL_OK")
</pallas_src>

<mosaic_0001>
module attributes {stable_mosaic.version = 11 : i64} {
  func.func @greedy_decoder_kernel(%arg0: memref<8x32xf32, #tpu.memory_space<vmem>>, %arg1: memref<64x128xbf16, #tpu.memory_space<vmem>>, %arg2: memref<1x128xf32, #tpu.memory_space<vmem>>, %arg3: memref<128x32xbf16, #tpu.memory_space<vmem>>, %arg4: memref<64x128xbf16, #tpu.memory_space<vmem>>, %arg5: memref<1x128xf32, #tpu.memory_space<vmem>>, %arg6: memref<32x32xbf16, #tpu.memory_space<vmem>>, %arg7: memref<32x32xbf16, #tpu.memory_space<vmem>>, %arg8: memref<1x32xf32, #tpu.memory_space<vmem>>, %arg9: memref<32x128xbf16, #tpu.memory_space<vmem>>, %arg10: memref<1x128xf32, #tpu.memory_space<vmem>>, %arg11: memref<1x128xi32, #tpu.memory_space<vmem>>, %arg12: memref<1x128xf32, #tpu.memory_space<vmem>>) attributes {dimension_semantics = [], scalar_prefetch = 0 : i64, scratch_operands = 0 : i64, tpu.core_type = #tpu.core_type<tc>} {
    %cst = arith.constant 0.000000e+00 : f32
    %0 = vector.broadcast %cst : f32 to vector<1x32xf32>
    %c0 = arith.constant 0 : index
    %c0_0 = arith.constant 0 : index
    %1 = vector.load %arg0[%c0, %c0_0] : memref<8x32xf32, #tpu.memory_space<vmem>>, vector<1x32xf32>
    %2 = tpu.concatenate %1, %0 in 1 : vector<1x32xf32>, vector<1x32xf32> -> vector<1x64xf32>
    %3 = arith.truncf %2 : vector<1x64xf32> to vector<1x64xbf16>
    %c0_1 = arith.constant 0 : index
    %c0_2 = arith.constant 0 : index
    %4 = vector.load %arg1[%c0_1, %c0_2] : memref<64x128xbf16, #tpu.memory_space<vmem>>, vector<64x128xbf16>
    %cst_3 = arith.constant dense<0.000000e+00> : vector<1x128xf32>
    %5 = tpu.matmul %3, %4, %cst_3 {dimension_numbers = #tpu.dot_dimension_numbers<[1], [0], [0], [1], [0, 0, 1, 1], [], []>} : vector<1x64xbf16>, vector<64x128xbf16>, vector<1x128xf32> -> vector<1x128xf32>
    %c0_4 = arith.constant 0 : index
    %c0_5 = arith.constant 0 : index
    %6 = vector.load %arg2[%c0_4, %c0_5] : memref<1x128xf32, #tpu.memory_space<vmem>>, vector<1x128xf32>
    %7 = arith.addf %5, %6 : vector<1x128xf32>
    %8 = vector.extract_strided_slice %7 {offsets = [0, 0], sizes = [1, 64], strides = [1, 1]} : vector<1x128xf32> to vector<1x64xf32>
    %9 = arith.negf %8 : vector<1x64xf32>
    %10 = math.exp %9 : vector<1x64xf32>
    %cst_6 = arith.constant 1.000000e+00 : f32
    %11 = vector.broadcast %cst_6 : f32 to vector<1x64xf32>
    %12 = arith.addf %11, %10 : vector<1x64xf32>
    %13 = arith.divf %11, %12 : vector<1x64xf32>
    %14 = vector.extract_strided_slice %13 {offsets = [0, 0], sizes = [1, 32], strides = [1, 1]} : vector<1x64xf32> to vector<1x32xf32>
    %15 = vector.extract_strided_slice %13 {offsets = [0, 32], sizes = [1, 32], strides = [1, 1]} : vector<1x64xf32> to vector<1x32xf32>
    %16 = vector.extract_strided_slice %7 {offsets = [0, 64], sizes = [1, 32], strides = [1, 1]} : vector<1x128xf32> to vector<1x32xf32>
    %17 = vector.extract_strided_slice %7 {offsets = [0, 96], sizes = [1, 32], strides = [1, 1]} : vector<1x128xf32> to vector<1x32xf32>
    %18 = arith.mulf %14, %17 : vector<1x32xf32>
    %19 = arith.addf %16, %18 : vector<1x32xf32>
    %20 = math.tanh %19 : vector<1x32xf32>
    %cst_7 = arith.constant 1.000000e+00 : f32
    %21 = vector.broadcast %cst_7 : f32 to vector<1x32xf32>
    %22 = arith.subf %21, %15 : vector<1x32xf32>
    %23 = arith.mulf %22, %20 : vector<1x32xf32>
    %24 = arith.mulf %15, %0 : vector<1x32xf32>
    %25 = arith.addf %23, %24 : vector<1x32xf32>
    %c1 = arith.constant 1 : index
    %c0_8 = arith.constant 0 : index
    %26 = vector.load %arg0[%c1, %c0_8] : memref<8x32xf32, #tpu.memory_space<vmem>>, vector<1x32xf32>
    %27 = tpu.concatenate %26, %25 in 1 : vector<1x32xf32>, vector<1x32xf32> -> vector<1x64xf32>
    %28 = arith.truncf %27 : vector<1x64xf32> to vector<1x64xbf16>
    %c0_9 = arith.constant 0 : index
    %c0_10 = arith.constant 0 : index
    %29 = vector.load %arg1[%c0_9, %c0_10] : memref<64x128xbf16, #tpu.memory_space<vmem>>, vector<64x128xbf16>
    %cst_11 = arith.constant dense<0.000000e+00> : vector<1x128xf32>
    %30 = tpu.matmul %28, %29, %cst_11 {dimension_numbers = #tpu.dot_dimension_numbers<[1], [0], [0], [1], [0, 0, 1, 1], [], []>} : vector<1x64xbf16>, vector<64x128xbf16>, vector<1x128xf32> -> vector<1x128xf32>
    %c0_12 = arith.constant 0 : index
    %c0_13 = arith.constant 0 : index
    %31 = vector.load %arg2[%c0_12, %c0_13] : memref<1x128xf32, #tpu.memory_space<vmem>>, vector<1x128xf32>
    %32 = arith.addf %30, %31 : vector<1x128xf32>
    %33 = vector.extract_strided_slice %32 {offsets = [0, 0], sizes = [1, 64], strides = [1, 1]} : vector<1x128xf32> to vector<1x64xf32>
    %34 = arith.negf %33 : vector<1x64xf32>
    %35 = math.exp %34 : vector<1x64xf32>
    %cst_14 = arith.constant 1.000000e+00 : f32
    %36 = vector.broadcast %cst_14 : f32 to vector<1x64xf32>
    %37 = arith.addf %36, %35 : vector<1x64xf32>
    %38 = arith.divf %36, %37 : vector<1x64xf32>
    %39 = vector.extract_strided_slice %38 {offsets = [0, 0], sizes = [1, 32], strides = [1, 1]} : vector<1x64xf32> to vector<1x32xf32>
    %40 = vector.extract_strided_slice %38 {offsets = [0, 32], sizes = [1, 32], strides = [1, 1]} : vector<1x64xf32> to vector<1x32xf32>
    %41 = vector.extract_strided_slice %32 {offsets = [0, 64], sizes = [1, 32], strides = [1, 1]} : vector<1x128xf32> to vector<1x32xf32>
    %42 = vector.extract_strided_slice %32 {offsets = [0, 96], sizes = [1, 32], strides = [1, 1]} : vector<1x128xf32> to vector<1x32xf32>
    %43 = arith.mulf %39, %42 : vector<1x32xf32>
    %44 = arith.addf %41, %43 : vector<1x32xf32>
    %45 = math.tanh %44 : vector<1x32xf32>
    %cst_15 = arith.constant 1.000000e+00 : f32
    %46 = vector.broadcast %cst_15 : f32 to vector<1x32xf32>
    %47 = arith.subf %46, %40 : vector<1x32xf32>
    %48 = arith.mulf %47, %45 : vector<1x32xf32>
    %49 = arith.mulf %40, %25 : vector<1x32xf32>
    %50 = arith.addf %48, %49 : vector<1x32xf32>
    %c2 = arith.constant 2 : index
    %c0_16 = arith.constant 0 : index
    %51 = vector.load %arg0[%c2, %c0_16] : memref<8x32xf32, #tpu.memory_space<vmem>>, vector<1x32xf32>
    %52 = tpu.concatenate %51, %50 in 1 : vector<1x32xf32>, vector<1x32xf32> -> vector<1x64xf32>
    %53 = arith.truncf %52 : vector<1x64xf32> to vector<1x64xbf16>
    %c0_17 = arith.constant 0 : index
    %c0_18 = arith.constant 0 : index
    %54 = vector.load %arg1[%c0_17, %c0_18] : memref<64x128xbf16, #tpu.memory_space<vmem>>, vector<64x128xbf16>
    %cst_19 = arith.constant dense<0.000000e+00> : vector<1x128xf32>
    %55 = tpu.matmul %53, %54, %cst_19 {dimension_numbers = #tpu.dot_dimension_numbers<[1], [0], [0], [1], [0, 0, 1, 1], [], []>} : vector<1x64xbf16>, vector<64x128xbf16>, vector<1x128xf32> -> vector<1x128xf32>
    %c0_20 = arith.constant 0 : index
    %c0_21 = arith.constant 0 : index
    %56 = vector.load %arg2[%c0_20, %c0_21] : memref<1x128xf32, #tpu.memory_space<vmem>>, vector<1x128xf32>
    %57 = arith.addf %55, %56 : vector<1x128xf32>
    %58 = vector.extract_strided_slice %57 {offsets = [0, 0], sizes = [1, 64], strides = [1, 1]} : vector<1x128xf32> to vector<1x64xf32>
    %59 = arith.negf %58 : vector<1x64xf32>
    %60 = math.exp %59 : vector<1x64xf32>
    %cst_22 = arith.constant 1.000000e+00 : f32
    %61 = vector.broadcast %cst_22 : f32 to vector<1x64xf32>
    %62 = arith.addf %61, %60 : vector<1x64xf32>
    %63 = arith.divf %61, %62 : vector<1x64xf32>
    %64 = vector.extract_strided_slice %63 {offsets = [0, 0], sizes = [1, 32], strides = [1, 1]} : vector<1x64xf32> to vector<1x32xf32>
    %65 = vector.extract_strided_slice %63 {offsets = [0, 32], sizes = [1, 32], strides = [1, 1]} : vector<1x64xf32> to vector<1x32xf32>
    %66 = vector.extract_strided_slice %57 {offsets = [0, 64], sizes = [1, 32], strides = [1, 1]} : vector<1x128xf32> to vector<1x32xf32>
    %67 = vector.extract_strided_slice %57 {offsets = [0, 96], sizes = [1, 32], strides = [1, 1]} : vector<1x128xf32> to vector<1x32xf32>
    %68 = arith.mulf %64, %67 : vector<1x32xf32>
    %69 = arith.addf %66, %68 : vector<1x32xf32>
    %70 = math.tanh %69 : vector<1x32xf32>
    %cst_23 = arith.constant 1.000000e+00 : f32
    %71 = vector.broadcast %cst_23 : f32 to vector<1x32xf32>
    %72 = arith.subf %71, %65 : vector<1x32xf32>
    %73 = arith.mulf %72, %70 : vector<1x32xf32>
    %74 = arith.mulf %65, %50 : vector<1x32xf32>
    %75 = arith.addf %73, %74 : vector<1x32xf32>
    %c3 = arith.constant 3 : index
    %c0_24 = arith.constant 0 : index
    %76 = vector.load %arg0[%c3, %c0_24] : memref<8x32xf32, #tpu.memory_space<vmem>>, vector<1x32xf32>
    %77 = tpu.concatenate %76, %75 in 1 : vector<1x32xf32>, vector<1x32xf32> -> vector<1x64xf32>
    %78 = arith.truncf %77 : vector<1x64xf32> to vector<1x64xbf16>
    %c0_25 = arith.constant 0 : index
    %c0_26 = arith.constant 0 : index
    %79 = vector.load %arg1[%c0_25, %c0_26] : memref<64x128xbf16, #tpu.memory_space<vmem>>, vector<64x128xbf16>
    %cst_27 = arith.constant dense<0.000000e+00> : vector<1x128xf32>
    %80 = tpu.matmul %78, %79, %cst_27 {dimension_numbers = #tpu.dot_dimension_numbers<[1], [0], [0], [1], [0, 0, 1, 1], [], []>} : vector<1x64xbf16>, vector<64x128xbf16>, vector<1x128xf32> -> vector<1x128xf32>
    %c0_28 = arith.constant 0 : index
    %c0_29 = arith.constant 0 : index
    %81 = vector.load %arg2[%c0_28, %c0_29] : memref<1x128xf32, #tpu.memory_space<vmem>>, vector<1x128xf32>
    %82 = arith.addf %80, %81 : vector<1x128xf32>
    %83 = vector.extract_strided_slice %82 {offsets = [0, 0], sizes = [1, 64], strides = [1, 1]} : vector<1x128xf32> to vector<1x64xf32>
    %84 = arith.negf %83 : vector<1x64xf32>
    %85 = math.exp %84 : vector<1x64xf32>
    %cst_30 = arith.constant 1.000000e+00 : f32
    %86 = vector.broadcast %cst_30 : f32 to vector<1x64xf32>
    %87 = arith.addf %86, %85 : vector<1x64xf32>
    %88 = arith.divf %86, %87 : vector<1x64xf32>
    %89 = vector.extract_strided_slice %88 {offsets = [0, 0], sizes = [1, 32], strides = [1, 1]} : vector<1x64xf32> to vector<1x32xf32>
    %90 = vector.extract_strided_slice %88 {offsets = [0, 32], sizes = [1, 32], strides = [1, 1]} : vector<1x64xf32> to vector<1x32xf32>
    %91 = vector.extract_strided_slice %82 {offsets = [0, 64], sizes = [1, 32], strides = [1, 1]} : vector<1x128xf32> to vector<1x32xf32>
    %92 = vector.extract_strided_slice %82 {offsets = [0, 96], sizes = [1, 32], strides = [1, 1]} : vector<1x128xf32> to vector<1x32xf32>
    %93 = arith.mulf %89, %92 : vector<1x32xf32>
    %94 = arith.addf %91, %93 : vector<1x32xf32>
    %95 = math.tanh %94 : vector<1x32xf32>
    %cst_31 = arith.constant 1.000000e+00 : f32
    %96 = vector.broadcast %cst_31 : f32 to vector<1x32xf32>
    %97 = arith.subf %96, %90 : vector<1x32xf32>
    %98 = arith.mulf %97, %95 : vector<1x32xf32>
    %99 = arith.mulf %90, %75 : vector<1x32xf32>
    %100 = arith.addf %98, %99 : vector<1x32xf32>
    %c4 = arith.constant 4 : index
    %c0_32 = arith.constant 0 : index
    %101 = vector.load %arg0[%c4, %c0_32] : memref<8x32xf32, #tpu.memory_space<vmem>>, vector<1x32xf32>
    %102 = tpu.concatenate %101, %100 in 1 : vector<1x32xf32>, vector<1x32xf32> -> vector<1x64xf32>
    %103 = arith.truncf %102 : vector<1x64xf32> to vector<1x64xbf16>
    %c0_33 = arith.constant 0 : index
    %c0_34 = arith.constant 0 : index
    %104 = vector.load %arg1[%c0_33, %c0_34] : memref<64x128xbf16, #tpu.memory_space<vmem>>, vector<64x128xbf16>
    %cst_35 = arith.constant dense<0.000000e+00> : vector<1x128xf32>
    %105 = tpu.matmul %103, %104, %cst_35 {dimension_numbers = #tpu.dot_dimension_numbers<[1], [0], [0], [1], [0, 0, 1, 1], [], []>} : vector<1x64xbf16>, vector<64x128xbf16>, vector<1x128xf32> -> vector<1x128xf32>
    %c0_36 = arith.constant 0 : index
    %c0_37 = arith.constant 0 : index
    %106 = vector.load %arg2[%c0_36, %c0_37] : memref<1x128xf32, #tpu.memory_space<vmem>>, vector<1x128xf32>
    %107 = arith.addf %105, %106 : vector<1x128xf32>
    %108 = vector.extract_strided_slice %107 {offsets = [0, 0], sizes = [1, 64], strides = [1, 1]} : vector<1x128xf32> to vector<1x64xf32>
    %109 = arith.negf %108 : vector<1x64xf32>
    %110 = math.exp %109 : vector<1x64xf32>
    %cst_38 = arith.constant 1.000000e+00 : f32
    %111 = vector.broadcast %cst_38 : f32 to vector<1x64xf32>
    %112 = arith.addf %111, %110 : vector<1x64xf32>
    %113 = arith.divf %111, %112 : vector<1x64xf32>
    %114 = vector.extract_strided_slice %113 {offsets = [0, 0], sizes = [1, 32], strides = [1, 1]} : vector<1x64xf32> to vector<1x32xf32>
    %115 = vector.extract_strided_slice %113 {offsets = [0, 32], sizes = [1, 32], strides = [1, 1]} : vector<1x64xf32> to vector<1x32xf32>
    %116 = vector.extract_strided_slice %107 {offsets = [0, 64], sizes = [1, 32], strides = [1, 1]} : vector<1x128xf32> to vector<1x32xf32>
    %117 = vector.extract_strided_slice %107 {offsets = [0, 96], sizes = [1, 32], strides = [1, 1]} : vector<1x128xf32> to vector<1x32xf32>
    %118 = arith.mulf %114, %117 : vector<1x32xf32>
    %119 = arith.addf %116, %118 : vector<1x32xf32>
    %120 = math.tanh %119 : vector<1x32xf32>
    %cst_39 = arith.constant 1.000000e+00 : f32
    %121 = vector.broadcast %cst_39 : f32 to vector<1x32xf32>
    %122 = arith.subf %121, %115 : vector<1x32xf32>
    %123 = arith.mulf %122, %120 : vector<1x32xf32>
    %124 = arith.mulf %115, %100 : vector<1x32xf32>
    %125 = arith.addf %123, %124 : vector<1x32xf32>
    %c5 = arith.constant 5 : index
    %c0_40 = arith.constant 0 : index
    %126 = vector.load %arg0[%c5, %c0_40] : memref<8x32xf32, #tpu.memory_space<vmem>>, vector<1x32xf32>
    %127 = tpu.concatenate %126, %125 in 1 : vector<1x32xf32>, vector<1x32xf32> -> vector<1x64xf32>
    %128 = arith.truncf %127 : vector<1x64xf32> to vector<1x64xbf16>
    %c0_41 = arith.constant 0 : index
    %c0_42 = arith.constant 0 : index
    %129 = vector.load %arg1[%c0_41, %c0_42] : memref<64x128xbf16, #tpu.memory_space<vmem>>, vector<64x128xbf16>
    %cst_43 = arith.constant dense<0.000000e+00> : vector<1x128xf32>
    %130 = tpu.matmul %128, %129, %cst_43 {dimension_numbers = #tpu.dot_dimension_numbers<[1], [0], [0], [1], [0, 0, 1, 1], [], []>} : vector<1x64xbf16>, vector<64x128xbf16>, vector<1x128xf32> -> vector<1x128xf32>
    %c0_44 = arith.constant 0 : index
    %c0_45 = arith.constant 0 : index
    %131 = vector.load %arg2[%c0_44, %c0_45] : memref<1x128xf32, #tpu.memory_space<vmem>>, vector<1x128xf32>
    %132 = arith.addf %130, %131 : vector<1x128xf32>
    %133 = vector.extract_strided_slice %132 {offsets = [0, 0], sizes = [1, 64], strides = [1, 1]} : vector<1x128xf32> to vector<1x64xf32>
    %134 = arith.negf %133 : vector<1x64xf32>
    %135 = math.exp %134 : vector<1x64xf32>
    %cst_46 = arith.constant 1.000000e+00 : f32
    %136 = vector.broadcast %cst_46 : f32 to vector<1x64xf32>
    %137 = arith.addf %136, %135 : vector<1x64xf32>
    %138 = arith.divf %136, %137 : vector<1x64xf32>
    %139 = vector.extract_strided_slice %138 {offsets = [0, 0], sizes = [1, 32], strides = [1, 1]} : vector<1x64xf32> to vector<1x32xf32>
    %140 = vector.extract_strided_slice %138 {offsets = [0, 32], sizes = [1, 32], strides = [1, 1]} : vector<1x64xf32> to vector<1x32xf32>
    %141 = vector.extract_strided_slice %132 {offsets = [0, 64], sizes = [1, 32], strides = [1, 1]} : vector<1x128xf32> to vector<1x32xf32>
    %142 = vector.extract_strided_slice %132 {offsets = [0, 96], sizes = [1, 32], strides = [1, 1]} : vector<1x128xf32> to vector<1x32xf32>
    %143 = arith.mulf %139, %142 : vector<1x32xf32>
    %144 = arith.addf %141, %143 : vector<1x32xf32>
    %145 = math.tanh %144 : vector<1x32xf32>
    %cst_47 = arith.constant 1.000000e+00 : f32
    %146 = vector.broadcast %cst_47 : f32 to vector<1x32xf32>
    %147 = arith.subf %146, %140 : vector<1x32xf32>
    %148 = arith.mulf %147, %145 : vector<1x32xf32>
    %149 = arith.mulf %140, %125 : vector<1x32xf32>
    %150 = arith.addf %148, %149 : vector<1x32xf32>
    %c6 = arith.constant 6 : index
    %c0_48 = arith.constant 0 : index
    %151 = vector.load %arg0[%c6, %c0_48] : memref<8x32xf32, #tpu.memory_space<vmem>>, vector<1x32xf32>
    %152 = tpu.concatenate %151, %150 in 1 : vector<1x32xf32>, vector<1x32xf32> -> vector<1x64xf32>
    %153 = arith.truncf %152 : vector<1x64xf32> to vector<1x64xbf16>
    %c0_49 = arith.constant 0 : index
    %c0_50 = arith.constant 0 : index
    %154 = vector.load %arg1[%c0_49, %c0_50] : memref<64x128xbf16, #tpu.memory_space<vmem>>, vector<64x128xbf16>
    %cst_51 = arith.constant dense<0.000000e+00> : vector<1x128xf32>
    %155 = tpu.matmul %153, %154, %cst_51 {dimension_numbers = #tpu.dot_dimension_numbers<[1], [0], [0], [1], [0, 0, 1, 1], [], []>} : vector<1x64xbf16>, vector<64x128xbf16>, vector<1x128xf32> -> vector<1x128xf32>
    %c0_52 = arith.constant 0 : index
    %c0_53 = arith.constant 0 : index
    %156 = vector.load %arg2[%c0_52, %c0_53] : memref<1x128xf32, #tpu.memory_space<vmem>>, vector<1x128xf32>
    %157 = arith.addf %155, %156 : vector<1x128xf32>
    %158 = vector.extract_strided_slice %157 {offsets = [0, 0], sizes = [1, 64], strides = [1, 1]} : vector<1x128xf32> to vector<1x64xf32>
    %159 = arith.negf %158 : vector<1x64xf32>
    %160 = math.exp %159 : vector<1x64xf32>
    %cst_54 = arith.constant 1.000000e+00 : f32
    %161 = vector.broadcast %cst_54 : f32 to vector<1x64xf32>
    %162 = arith.addf %161, %160 : vector<1x64xf32>
    %163 = arith.divf %161, %162 : vector<1x64xf32>
    %164 = vector.extract_strided_slice %163 {offsets = [0, 0], sizes = [1, 32], strides = [1, 1]} : vector<1x64xf32> to vector<1x32xf32>
    %165 = vector.extract_strided_slice %163 {offsets = [0, 32], sizes = [1, 32], strides = [1, 1]} : vector<1x64xf32> to vector<1x32xf32>
    %166 = vector.extract_strided_slice %157 {offsets = [0, 64], sizes = [1, 32], strides = [1, 1]} : vector<1x128xf32> to vector<1x32xf32>
    %167 = vector.extract_strided_slice %157 {offsets = [0, 96], sizes = [1, 32], strides = [1, 1]} : vector<1x128xf32> to vector<1x32xf32>
    %168 = arith.mulf %164, %167 : vector<1x32xf32>
    %169 = arith.addf %166, %168 : vector<1x32xf32>
    %170 = math.tanh %169 : vector<1x32xf32>
    %cst_55 = arith.constant 1.000000e+00 : f32
    %171 = vector.broadcast %cst_55 : f32 to vector<1x32xf32>
    %172 = arith.subf %171, %165 : vector<1x32xf32>
    %173 = arith.mulf %172, %170 : vector<1x32xf32>
    %174 = arith.mulf %165, %150 : vector<1x32xf32>
    %175 = arith.addf %173, %174 : vector<1x32xf32>
    %c7 = arith.constant 7 : index
    %c0_56 = arith.constant 0 : index
    %176 = vector.load %arg0[%c7, %c0_56] : memref<8x32xf32, #tpu.memory_space<vmem>>, vector<1x32xf32>
    %177 = tpu.concatenate %176, %175 in 1 : vector<1x32xf32>, vector<1x32xf32> -> vector<1x64xf32>
    %178 = arith.truncf %177 : vector<1x64xf32> to vector<1x64xbf16>
    %c0_57 = arith.constant 0 : index
    %c0_58 = arith.constant 0 : index
    %179 = vector.load %arg1[%c0_57, %c0_58] : memref<64x128xbf16, #tpu.memory_space<vmem>>, vector<64x128xbf16>
    %cst_59 = arith.constant dense<0.000000e+00> : vector<1x128xf32>
    %180 = tpu.matmul %178, %179, %cst_59 {dimension_numbers = #tpu.dot_dimension_numbers<[1], [0], [0], [1], [0, 0, 1, 1], [], []>} : vector<1x64xbf16>, vector<64x128xbf16>, vector<1x128xf32> -> vector<1x128xf32>
    %c0_60 = arith.constant 0 : index
    %c0_61 = arith.constant 0 : index
    %181 = vector.load %arg2[%c0_60, %c0_61] : memref<1x128xf32, #tpu.memory_space<vmem>>, vector<1x128xf32>
    %182 = arith.addf %180, %181 : vector<1x128xf32>
    %183 = vector.extract_strided_slice %182 {offsets = [0, 0], sizes = [1, 64], strides = [1, 1]} : vector<1x128xf32> to vector<1x64xf32>
    %184 = arith.negf %183 : vector<1x64xf32>
    %185 = math.exp %184 : vector<1x64xf32>
    %cst_62 = arith.constant 1.000000e+00 : f32
    %186 = vector.broadcast %cst_62 : f32 to vector<1x64xf32>
    %187 = arith.addf %186, %185 : vector<1x64xf32>
    %188 = arith.divf %186, %187 : vector<1x64xf32>
    %189 = vector.extract_strided_slice %188 {offsets = [0, 0], sizes = [1, 32], strides = [1, 1]} : vector<1x64xf32> to vector<1x32xf32>
    %190 = vector.extract_strided_slice %188 {offsets = [0, 32], sizes = [1, 32], strides = [1, 1]} : vector<1x64xf32> to vector<1x32xf32>
    %191 = vector.extract_strided_slice %182 {offsets = [0, 64], sizes = [1, 32], strides = [1, 1]} : vector<1x128xf32> to vector<1x32xf32>
    %192 = vector.extract_strided_slice %182 {offsets = [0, 96], sizes = [1, 32], strides = [1, 1]} : vector<1x128xf32> to vector<1x32xf32>
    %193 = arith.mulf %189, %192 : vector<1x32xf32>
    %194 = arith.addf %191, %193 : vector<1x32xf32>
    %195 = math.tanh %194 : vector<1x32xf32>
    %cst_63 = arith.constant 1.000000e+00 : f32
    %196 = vector.broadcast %cst_63 : f32 to vector<1x32xf32>
    %197 = arith.subf %196, %190 : vector<1x32xf32>
    %198 = arith.mulf %197, %195 : vector<1x32xf32>
    %199 = arith.mulf %190, %175 : vector<1x32xf32>
    %200 = arith.addf %198, %199 : vector<1x32xf32>
    %201 = tpu.concatenate %25, %50, %75, %100, %125, %150, %175, %200 in 0 : vector<1x32xf32>, vector<1x32xf32>, vector<1x32xf32>, vector<1x32xf32>, vector<1x32xf32>, vector<1x32xf32>, vector<1x32xf32>, vector<1x32xf32> -> vector<8x32xf32>
    %202 = arith.truncf %201 : vector<8x32xf32> to vector<8x32xbf16>
    %c0_64 = arith.constant 0 : index
    %c0_65 = arith.constant 0 : index
    %203 = vector.load %arg7[%c0_64, %c0_65] : memref<32x32xbf16, #tpu.memory_space<vmem>>, vector<32x32xbf16>
    %cst_66 = arith.constant dense<0.000000e+00> : vector<8x32xf32>
    %204 = tpu.matmul %202, %203, %cst_66 {dimension_numbers = #tpu.dot_dimension_numbers<[1], [0], [0], [1], [0, 0, 1, 1], [], []>} : vector<8x32xbf16>, vector<32x32xbf16>, vector<8x32xf32> -> vector<8x32xf32>
    %205 = arith.truncf %204 : vector<8x32xf32> to vector<8x32xbf16>
    %206 = tpu.iota {dimensions = array<i32: 1>} : vector<1x128xi32>
    %c0_i32 = arith.constant 0 : i32
    %207 = vector.broadcast %c0_i32 : i32 to vector<1x128xi32>
    %cst_67 = arith.constant 0.000000e+00 : f32
    %208 = vector.broadcast %cst_67 : f32 to vector<1x128xf32>
    %c1_68 = arith.constant 1 : index
    %c0_69 = arith.constant 0 : index
    %209 = vector.load %arg3[%c1_68, %c0_69] : memref<128x32xbf16, #tpu.memory_space<vmem>>, vector<1x32xbf16>
    %210 = arith.extf %209 : vector<1x32xbf16> to vector<1x32xf32>
    %211 = tpu.concatenate %210, %200 in 1 : vector<1x32xf32>, vector<1x32xf32> -> vector<1x64xf32>
    %212 = arith.truncf %211 : vector<1x64xf32> to vector<1x64xbf16>
    %c0_70 = arith.constant 0 : index
    %c0_71 = arith.constant 0 : index
    %213 = vector.load %arg4[%c0_70, %c0_71] : memref<64x128xbf16, #tpu.memory_space<vmem>>, vector<64x128xbf16>
    %cst_72 = arith.constant dense<0.000000e+00> : vector<1x128xf32>
    %214 = tpu.matmul %212, %213, %cst_72 {dimension_numbers = #tpu.dot_dimension_numbers<[1], [0], [0], [1], [0, 0, 1, 1], [], []>} : vector<1x64xbf16>, vector<64x128xbf16>, vector<1x128xf32> -> vector<1x128xf32>
    %c0_73 = arith.constant 0 : index
    %c0_74 = arith.constant 0 : index
    %215 = vector.load %arg5[%c0_73, %c0_74] : memref<1x128xf32, #tpu.memory_space<vmem>>, vector<1x128xf32>
    %216 = arith.addf %214, %215 : vector<1x128xf32>
    %217 = vector.extract_strided_slice %216 {offsets = [0, 0], sizes = [1, 64], strides = [1, 1]} : vector<1x128xf32> to vector<1x64xf32>
    %218 = arith.negf %217 : vector<1x64xf32>
    %219 = math.exp %218 : vector<1x64xf32>
    %cst_75 = arith.constant 1.000000e+00 : f32
    %220 = vector.broadcast %cst_75 : f32 to vector<1x64xf32>
    %221 = arith.addf %220, %219 : vector<1x64xf32>
    %222 = arith.divf %220, %221 : vector<1x64xf32>
    %223 = vector.extract_strided_slice %222 {offsets = [0, 0], sizes = [1, 32], strides = [1, 1]} : vector<1x64xf32> to vector<1x32xf32>
    %224 = vector.extract_strided_slice %222 {offsets = [0, 32], sizes = [1, 32], strides = [1, 1]} : vector<1x64xf32> to vector<1x32xf32>
    %225 = vector.extract_strided_slice %216 {offsets = [0, 64], sizes = [1, 32], strides = [1, 1]} : vector<1x128xf32> to vector<1x32xf32>
    %226 = vector.extract_strided_slice %216 {offsets = [0, 96], sizes = [1, 32], strides = [1, 1]} : vector<1x128xf32> to vector<1x32xf32>
    %227 = arith.mulf %223, %226 : vector<1x32xf32>
    %228 = arith.addf %225, %227 : vector<1x32xf32>
    %229 = math.tanh %228 : vector<1x32xf32>
    %cst_76 = arith.constant 1.000000e+00 : f32
    %230 = vector.broadcast %cst_76 : f32 to vector<1x32xf32>
    %231 = arith.subf %230, %224 : vector<1x32xf32>
    %232 = arith.mulf %231, %229 : vector<1x32xf32>
    %233 = arith.mulf %224, %200 : vector<1x32xf32>
    %234 = arith.addf %232, %233 : vector<1x32xf32>
    %235 = arith.truncf %234 : vector<1x32xf32> to vector<1x32xbf16>
    %cst_77 = arith.constant dense<0.000000e+00> : vector<1x8xf32>
    %236 = tpu.matmul %235, %202, %cst_77 {dimension_numbers = #tpu.dot_dimension_numbers<[1], [1], [0], [0], [0, 0, 1, 0], [], []>} : vector<1x32xbf16>, vector<8x32xbf16>, vector<1x8xf32> -> vector<1x8xf32>
    %cst_78 = arith.constant dense<0xFF800000> : vector<1xf32>
    %237 = vector.multi_reduction <maximumf>, %236, %cst_78 [1] : vector<1x8xf32> to vector<1xf32>
    %238 = vector.shape_cast %237 : vector<1xf32> to vector<1x1xf32>
    %239 = vector.broadcast %238 : vector<1x1xf32> to vector<1x8xf32>
    %240 = arith.subf %236, %239 : vector<1x8xf32>
    %241 = math.exp %240 : vector<1x8xf32>
    %cst_79 = arith.constant dense<0.000000e+00> : vector<1xf32>
    %242 = vector.multi_reduction <add>, %241, %cst_79 [1] : vector<1x8xf32> to vector<1xf32>
    %243 = vector.shape_cast %242 : vector<1xf32> to vector<1x1xf32>
    %244 = arith.truncf %241 : vector<1x8xf32> to vector<1x8xbf16>
    %cst_80 = arith.constant dense<0.000000e+00> : vector<1x32xf32>
    %245 = tpu.matmul %244, %205, %cst_80 {dimension_numbers = #tpu.dot_dimension_numbers<[1], [0], [0], [1], [0, 0, 1, 1], [], []>} : vector<1x8xbf16>, vector<8x32xbf16>, vector<1x32xf32> -> vector<1x32xf32>
    %c0_81 = arith.constant 0 : index
    %c0_82 = arith.constant 0 : index
    %246 = vector.load %arg6[%c0_81, %c0_82] : memref<32x32xbf16, #tpu.memory_space<vmem>>, vector<32x32xbf16>
    %cst_83 = arith.constant dense<0.000000e+00> : vector<1x32xf32>
    %247 = tpu.matmul %235, %246, %cst_83 {dimension_numbers = #tpu.dot_dimension_numbers<[1], [0], [0], [1], [0, 0, 1, 1], [], []>} : vector<1x32xbf16>, vector<32x32xbf16>, vector<1x32xf32> -> vector<1x32xf32>
    %248 = vector.broadcast %243 : vector<1x1xf32> to vector<1x32xf32>
    %249 = arith.divf %245, %248 : vector<1x32xf32>
    %250 = arith.addf %247, %249 : vector<1x32xf32>
    %c0_84 = arith.constant 0 : index
    %c0_85 = arith.constant 0 : index
    %251 = vector.load %arg8[%c0_84, %c0_85] : memref<1x32xf32, #tpu.memory_space<vmem>>, vector<1x32xf32>
    %252 = arith.addf %250, %251 : vector<1x32xf32>
    %253 = math.tanh %252 : vector<1x32xf32>
    %254 = arith.truncf %253 : vector<1x32xf32> to vector<1x32xbf16>
    %c0_86 = arith.constant 0 : index
    %c0_87 = arith.constant 0 : index
    %255 = vector.load %arg9[%c0_86, %c0_87] : memref<32x128xbf16, #tpu.memory_space<vmem>>, vector<32x128xbf16>
    %cst_88 = arith.constant dense<0.000000e+00> : vector<1x128xf32>
    %256 = tpu.matmul %254, %255, %cst_88 {dimension_numbers = #tpu.dot_dimension_numbers<[1], [0], [0], [1], [0, 0, 1, 1], [], []>} : vector<1x32xbf16>, vector<32x128xbf16>, vector<1x128xf32> -> vector<1x128xf32>
    %c0_89 = arith.constant 0 : index
    %c0_90 = arith.constant 0 : index
    %257 = vector.load %arg10[%c0_89, %c0_90] : memref<1x128xf32, #tpu.memory_space<vmem>>, vector<1x128xf32>
    %258 = arith.addf %256, %257 : vector<1x128xf32>
    %cst_91 = arith.constant dense<0xFF800000> : vector<1xf32>
    %259 = vector.multi_reduction <maximumf>, %258, %cst_91 [1] : vector<1x128xf32> to vector<1xf32>
    %260 = vector.shape_cast %259 : vector<1xf32> to vector<1x1xf32>
    %261 = vector.broadcast %260 : vector<1x1xf32> to vector<1x128xf32>
    %262 = arith.subf %258, %261 : vector<1x128xf32>
    %263 = math.exp %262 : vector<1x128xf32>
    %cst_92 = arith.constant dense<0.000000e+00> : vector<1xf32>
    %264 = vector.multi_reduction <add>, %263, %cst_92 [1] : vector<1x128xf32> to vector<1xf32>
    %265 = vector.shape_cast %264 : vector<1xf32> to vector<1x1xf32>
    %266 = tpu.reciprocal %265 {approx = true} : vector<1x1xf32> -> vector<1x1xf32>
    %267 = vector.broadcast %260 : vector<1x1xf32> to vector<1x128xf32>
    %268 = arith.cmpf oge, %258, %267 : vector<1x128xf32>
    %c128_i32 = arith.constant 128 : i32
    %269 = vector.broadcast %c128_i32 : i32 to vector<1x128xi32>
    %270 = arith.select %268, %206, %269 : vector<1x128xi1>, vector<1x128xi32>
    %cst_93 = arith.constant dense<2147483647> : vector<1xi32>
    %271 = vector.multi_reduction <minsi>, %270, %cst_93 [1] : vector<1x128xi32> to vector<1xi32>
    %272 = vector.shape_cast %271 : vector<1xi32> to vector<1x1xi32>
    %c0_i32_94 = arith.constant 0 : i32
    %273 = vector.broadcast %c0_i32_94 : i32 to vector<1x128xi32>
    %274 = arith.cmpi eq, %206, %273 : vector<1x128xi32>
    %275 = vector.shape_cast %272 : vector<1x1xi32> to vector<1x1xi32>
    %276 = vector.broadcast %275 : vector<1x1xi32> to vector<1x128xi32>
    %277 = arith.select %274, %276, %207 : vector<1x128xi1>, vector<1x128xi32>
    %c0_i32_95 = arith.constant 0 : i32
    %278 = vector.broadcast %c0_i32_95 : i32 to vector<1x128xi32>
    %279 = arith.cmpi eq, %206, %278 : vector<1x128xi32>
    %280 = vector.shape_cast %266 : vector<1x1xf32> to vector<1x1xf32>
    %281 = vector.broadcast %280 : vector<1x1xf32> to vector<1x128xf32>
    %282 = arith.select %279, %281, %208 : vector<1x128xi1>, vector<1x128xf32>
    %283 = vector.broadcast %272 : vector<1x1xi32> to vector<1x128xi32>
    %284 = arith.cmpi eq, %206, %283 : vector<1x128xi32>
    %cst_96 = arith.constant 1.000000e+00 : f32
    %cst_97 = arith.constant 0.000000e+00 : f32
    %285 = vector.broadcast %cst_96 : f32 to vector<1x128xf32>
    %286 = vector.broadcast %cst_97 : f32 to vector<1x128xf32>
    %287 = arith.select %284, %285, %286 : vector<1x128xi1>, vector<1x128xf32>
    %288 = arith.truncf %287 : vector<1x128xf32> to vector<1x128xbf16>
    %c0_98 = arith.constant 0 : index
    %c0_99 = arith.constant 0 : index
    %289 = vector.load %arg3[%c0_98, %c0_99] : memref<128x32xbf16, #tpu.memory_space<vmem>>, vector<128x32xbf16>
    %cst_100 = arith.constant dense<0.000000e+00> : vector<1x32xf32>
    %290 = tpu.matmul %288, %289, %cst_100 {dimension_numbers = #tpu.dot_dimension_numbers<[1], [0], [0], [1], [0, 0, 1, 1], [], []>} : vector<1x128xbf16>, vector<128x32xbf16>, vector<1x32xf32> -> vector<1x32xf32>
    %291 = tpu.concatenate %290, %234 in 1 : vector<1x32xf32>, vector<1x32xf32> -> vector<1x64xf32>
    %292 = arith.truncf %291 : vector<1x64xf32> to vector<1x64xbf16>
    %c0_101 = arith.constant 0 : index
    %c0_102 = arith.constant 0 : index
    %293 = vector.load %arg4[%c0_101, %c0_102] : memref<64x128xbf16, #tpu.memory_space<vmem>>, vector<64x128xbf16>
    %cst_103 = arith.constant dense<0.000000e+00> : vector<1x128xf32>
    %294 = tpu.matmul %292, %293, %cst_103 {dimension_numbers = #tpu.dot_dimension_numbers<[1], [0], [0], [1], [0, 0, 1, 1], [], []>} : vector<1x64xbf16>, vector<64x128xbf16>, vector<1x128xf32> -> vector<1x128xf32>
    %c0_104 = arith.constant 0 : index
    %c0_105 = arith.constant 0 : index
    %295 = vector.load %arg5[%c0_104, %c0_105] : memref<1x128xf32, #tpu.memory_space<vmem>>, vector<1x128xf32>
    %296 = arith.addf %294, %295 : vector<1x128xf32>
    %297 = vector.extract_strided_slice %296 {offsets = [0, 0], sizes = [1, 64], strides = [1, 1]} : vector<1x128xf32> to vector<1x64xf32>
    %298 = arith.negf %297 : vector<1x64xf32>
    %299 = math.exp %298 : vector<1x64xf32>
    %cst_106 = arith.constant 1.000000e+00 : f32
    %300 = vector.broadcast %cst_106 : f32 to vector<1x64xf32>
    %301 = arith.addf %300, %299 : vector<1x64xf32>
    %302 = arith.divf %300, %301 : vector<1x64xf32>
    %303 = vector.extract_strided_slice %302 {offsets = [0, 0], sizes = [1, 32], strides = [1, 1]} : vector<1x64xf32> to vector<1x32xf32>
    %304 = vector.extract_strided_slice %302 {offsets = [0, 32], sizes = [1, 32], strides = [1, 1]} : vector<1x64xf32> to vector<1x32xf32>
    %305 = vector.extract_strided_slice %296 {offsets = [0, 64], sizes = [1, 32], strides = [1, 1]} : vector<1x128xf32> to vector<1x32xf32>
    %306 = vector.extract_strided_slice %296 {offsets = [0, 96], sizes = [1, 32], strides = [1, 1]} : vector<1x128xf32> to vector<1x32xf32>
    %307 = arith.mulf %303, %306 : vector<1x32xf32>
    %308 = arith.addf %305, %307 : vector<1x32xf32>
    %309 = math.tanh %308 : vector<1x32xf32>
    %cst_107 = arith.constant 1.000000e+00 : f32
    %310 = vector.broadcast %cst_107 : f32 to vector<1x32xf32>
    %311 = arith.subf %310, %304 : vector<1x32xf32>
    %312 = arith.mulf %311, %309 : vector<1x32xf32>
    %313 = arith.mulf %304, %234 : vector<1x32xf32>
    %314 = arith.addf %312, %313 : vector<1x32xf32>
    %315 = arith.truncf %314 : vector<1x32xf32> to vector<1x32xbf16>
    %cst_108 = arith.constant dense<0.000000e+00> : vector<1x8xf32>
    %316 = tpu.matmul %315, %202, %cst_108 {dimension_numbers = #tpu.dot_dimension_numbers<[1], [1], [0], [0], [0, 0, 1, 0], [], []>} : vector<1x32xbf16>, vector<8x32xbf16>, vector<1x8xf32> -> vector<1x8xf32>
    %cst_109 = arith.constant dense<0xFF800000> : vector<1xf32>
    %317 = vector.multi_reduction <maximumf>, %316, %cst_109 [1] : vector<1x8xf32> to vector<1xf32>
    %318 = vector.shape_cast %317 : vector<1xf32> to vector<1x1xf32>
    %319 = vector.broadcast %318 : vector<1x1xf32> to vector<1x8xf32>
    %320 = arith.subf %316, %319 : vector<1x8xf32>
    %321 = math.exp %320 : vector<1x8xf32>
    %cst_110 = arith.constant dense<0.000000e+00> : vector<1xf32>
    %322 = vector.multi_reduction <add>, %321, %cst_110 [1] : vector<1x8xf32> to vector<1xf32>
    %323 = vector.shape_cast %322 : vector<1xf32> to vector<1x1xf32>
    %324 = arith.truncf %321 : vector<1x8xf32> to vector<1x8xbf16>
    %cst_111 = arith.constant dense<0.000000e+00> : vector<1x32xf32>
    %325 = tpu.matmul %324, %205, %cst_111 {dimension_numbers = #tpu.dot_dimension_numbers<[1], [0], [0], [1], [0, 0, 1, 1], [], []>} : vector<1x8xbf16>, vector<8x32xbf16>, vector<1x32xf32> -> vector<1x32xf32>
    %c0_112 = arith.constant 0 : index
    %c0_113 = arith.constant 0 : index
    %326 = vector.load %arg6[%c0_112, %c0_113] : memref<32x32xbf16, #tpu.memory_space<vmem>>, vector<32x32xbf16>
    %cst_114 = arith.constant dense<0.000000e+00> : vector<1x32xf32>
    %327 = tpu.matmul %315, %326, %cst_114 {dimension_numbers = #tpu.dot_dimension_numbers<[1], [0], [0], [1], [0, 0, 1, 1], [], []>} : vector<1x32xbf16>, vector<32x32xbf16>, vector<1x32xf32> -> vector<1x32xf32>
    %328 = vector.broadcast %323 : vector<1x1xf32> to vector<1x32xf32>
    %329 = arith.divf %325, %328 : vector<1x32xf32>
    %330 = arith.addf %327, %329 : vector<1x32xf32>
    %c0_115 = arith.constant 0 : index
    %c0_116 = arith.constant 0 : index
    %331 = vector.load %arg8[%c0_115, %c0_116] : memref<1x32xf32, #tpu.memory_space<vmem>>, vector<1x32xf32>
    %332 = arith.addf %330, %331 : vector<1x32xf32>
    %333 = math.tanh %332 : vector<1x32xf32>
    %334 = arith.truncf %333 : vector<1x32xf32> to vector<1x32xbf16>
    %c0_117 = arith.constant 0 : index
    %c0_118 = arith.constant 0 : index
    %335 = vector.load %arg9[%c0_117, %c0_118] : memref<32x128xbf16, #tpu.memory_space<vmem>>, vector<32x128xbf16>
    %cst_119 = arith.constant dense<0.000000e+00> : vector<1x128xf32>
    %336 = tpu.matmul %334, %335, %cst_119 {dimension_numbers = #tpu.dot_dimension_numbers<[1], [0], [0], [1], [0, 0, 1, 1], [], []>} : vector<1x32xbf16>, vector<32x128xbf16>, vector<1x128xf32> -> vector<1x128xf32>
    %c0_120 = arith.constant 0 : index
    %c0_121 = arith.constant 0 : index
    %337 = vector.load %arg10[%c0_120, %c0_121] : memref<1x128xf32, #tpu.memory_space<vmem>>, vector<1x128xf32>
    %338 = arith.addf %336, %337 : vector<1x128xf32>
    %cst_122 = arith.constant dense<0xFF800000> : vector<1xf32>
    %339 = vector.multi_reduction <maximumf>, %338, %cst_122 [1] : vector<1x128xf32> to vector<1xf32>
    %340 = vector.shape_cast %339 : vector<1xf32> to vector<1x1xf32>
    %341 = vector.broadcast %340 : vector<1x1xf32> to vector<1x128xf32>
    %342 = arith.subf %338, %341 : vector<1x128xf32>
    %343 = math.exp %342 : vector<1x128xf32>
    %cst_123 = arith.constant dense<0.000000e+00> : vector<1xf32>
    %344 = vector.multi_reduction <add>, %343, %cst_123 [1] : vector<1x128xf32> to vector<1xf32>
    %345 = vector.shape_cast %344 : vector<1xf32> to vector<1x1xf32>
    %346 = tpu.reciprocal %345 {approx = true} : vector<1x1xf32> -> vector<1x1xf32>
    %347 = vector.broadcast %340 : vector<1x1xf32> to vector<1x128xf32>
    %348 = arith.cmpf oge, %338, %347 : vector<1x128xf32>
    %c128_i32_124 = arith.constant 128 : i32
    %349 = vector.broadcast %c128_i32_124 : i32 to vector<1x128xi32>
    %350 = arith.select %348, %206, %349 : vector<1x128xi1>, vector<1x128xi32>
    %cst_125 = arith.constant dense<2147483647> : vector<1xi32>
    %351 = vector.multi_reduction <minsi>, %350, %cst_125 [1] : vector<1x128xi32> to vector<1xi32>
    %352 = vector.shape_cast %351 : vector<1xi32> to vector<1x1xi32>
    %c1_i32 = arith.constant 1 : i32
    %353 = vector.broadcast %c1_i32 : i32 to vector<1x128xi32>
    %354 = arith.cmpi eq, %206, %353 : vector<1x128xi32>
    %355 = vector.shape_cast %352 : vector<1x1xi32> to vector<1x1xi32>
    %356 = vector.broadcast %355 : vector<1x1xi32> to vector<1x128xi32>
    %357 = arith.select %354, %356, %277 : vector<1x128xi1>, vector<1x128xi32>
    %c1_i32_126 = arith.constant 1 : i32
    %358 = vector.broadcast %c1_i32_126 : i32 to vector<1x128xi32>
    %359 = arith.cmpi eq, %206, %358 : vector<1x128xi32>
    %360 = vector.shape_cast %346 : vector<1x1xf32> to vector<1x1xf32>
    %361 = vector.broadcast %360 : vector<1x1xf32> to vector<1x128xf32>
    %362 = arith.select %359, %361, %282 : vector<1x128xi1>, vector<1x128xf32>
    %363 = vector.broadcast %352 : vector<1x1xi32> to vector<1x128xi32>
    %364 = arith.cmpi eq, %206, %363 : vector<1x128xi32>
    %cst_127 = arith.constant 1.000000e+00 : f32
    %cst_128 = arith.constant 0.000000e+00 : f32
    %365 = vector.broadcast %cst_127 : f32 to vector<1x128xf32>
    %366 = vector.broadcast %cst_128 : f32 to vector<1x128xf32>
    %367 = arith.select %364, %365, %366 : vector<1x128xi1>, vector<1x128xf32>
    %368 = arith.truncf %367 : vector<1x128xf32> to vector<1x128xbf16>
    %c0_129 = arith.constant 0 : index
    %c0_130 = arith.constant 0 : index
    %369 = vector.load %arg3[%c0_129, %c0_130] : memref<128x32xbf16, #tpu.memory_space<vmem>>, vector<128x32xbf16>
    %cst_131 = arith.constant dense<0.000000e+00> : vector<1x32xf32>
    %370 = tpu.matmul %368, %369, %cst_131 {dimension_numbers = #tpu.dot_dimension_numbers<[1], [0], [0], [1], [0, 0, 1, 1], [], []>} : vector<1x128xbf16>, vector<128x32xbf16>, vector<1x32xf32> -> vector<1x32xf32>
    %371 = tpu.concatenate %370, %314 in 1 : vector<1x32xf32>, vector<1x32xf32> -> vector<1x64xf32>
    %372 = arith.truncf %371 : vector<1x64xf32> to vector<1x64xbf16>
    %c0_132 = arith.constant 0 : index
    %c0_133 = arith.constant 0 : index
    %373 = vector.load %arg4[%c0_132, %c0_133] : memref<64x128xbf16, #tpu.memory_space<vmem>>, vector<64x128xbf16>
    %cst_134 = arith.constant dense<0.000000e+00> : vector<1x128xf32>
    %374 = tpu.matmul %372, %373, %cst_134 {dimension_numbers = #tpu.dot_dimension_numbers<[1], [0], [0], [1], [0, 0, 1, 1], [], []>} : vector<1x64xbf16>, vector<64x128xbf16>, vector<1x128xf32> -> vector<1x128xf32>
    %c0_135 = arith.constant 0 : index
    %c0_136 = arith.constant 0 : index
    %375 = vector.load %arg5[%c0_135, %c0_136] : memref<1x128xf32, #tpu.memory_space<vmem>>, vector<1x128xf32>
    %376 = arith.addf %374, %375 : vector<1x128xf32>
    %377 = vector.extract_strided_slice %376 {offsets = [0, 0], sizes = [1, 64], strides = [1, 1]} : vector<1x128xf32> to vector<1x64xf32>
    %378 = arith.negf %377 : vector<1x64xf32>
    %379 = math.exp %378 : vector<1x64xf32>
    %cst_137 = arith.constant 1.000000e+00 : f32
    %380 = vector.broadcast %cst_137 : f32 to vector<1x64xf32>
    %381 = arith.addf %380, %379 : vector<1x64xf32>
    %382 = arith.divf %380, %381 : vector<1x64xf32>
    %383 = vector.extract_strided_slice %382 {offsets = [0, 0], sizes = [1, 32], strides = [1, 1]} : vector<1x64xf32> to vector<1x32xf32>
    %384 = vector.extract_strided_slice %382 {offsets = [0, 32], sizes = [1, 32], strides = [1, 1]} : vector<1x64xf32> to vector<1x32xf32>
    %385 = vector.extract_strided_slice %376 {offsets = [0, 64], sizes = [1, 32], strides = [1, 1]} : vector<1x128xf32> to vector<1x32xf32>
    %386 = vector.extract_strided_slice %376 {offsets = [0, 96], sizes = [1, 32], strides = [1, 1]} : vector<1x128xf32> to vector<1x32xf32>
    %387 = arith.mulf %383, %386 : vector<1x32xf32>
    %388 = arith.addf %385, %387 : vector<1x32xf32>
    %389 = math.tanh %388 : vector<1x32xf32>
    %cst_138 = arith.constant 1.000000e+00 : f32
    %390 = vector.broadcast %cst_138 : f32 to vector<1x32xf32>
    %391 = arith.subf %390, %384 : vector<1x32xf32>
    %392 = arith.mulf %391, %389 : vector<1x32xf32>
    %393 = arith.mulf %384, %314 : vector<1x32xf32>
    %394 = arith.addf %392, %393 : vector<1x32xf32>
    %395 = arith.truncf %394 : vector<1x32xf32> to vector<1x32xbf16>
    %cst_139 = arith.constant dense<0.000000e+00> : vector<1x8xf32>
    %396 = tpu.matmul %395, %202, %cst_139 {dimension_numbers = #tpu.dot_dimension_numbers<[1], [1], [0], [0], [0, 0, 1, 0], [], []>} : vector<1x32xbf16>, vector<8x32xbf16>, vector<1x8xf32> -> vector<1x8xf32>
    %cst_140 = arith.constant dense<0xFF800000> : vector<1xf32>
    %397 = vector.multi_reduction <maximumf>, %396, %cst_140 [1] : vector<1x8xf32> to vector<1xf32>
    %398 = vector.shape_cast %397 : vector<1xf32> to vector<1x1xf32>
    %399 = vector.broadcast %398 : vector<1x1xf32> to vector<1x8xf32>
    %400 = arith.subf %396, %399 : vector<1x8xf32>
    %401 = math.exp %400 : vector<1x8xf32>
    %cst_141 = arith.constant dense<0.000000e+00> : vector<1xf32>
    %402 = vector.multi_reduction <add>, %401, %cst_141 [1] : vector<1x8xf32> to vector<1xf32>
    %403 = vector.shape_cast %402 : vector<1xf32> to vector<1x1xf32>
    %404 = arith.truncf %401 : vector<1x8xf32> to vector<1x8xbf16>
    %cst_142 = arith.constant dense<0.000000e+00> : vector<1x32xf32>
    %405 = tpu.matmul %404, %205, %cst_142 {dimension_numbers = #tpu.dot_dimension_numbers<[1], [0], [0], [1], [0, 0, 1, 1], [], []>} : vector<1x8xbf16>, vector<8x32xbf16>, vector<1x32xf32> -> vector<1x32xf32>
    %c0_143 = arith.constant 0 : index
    %c0_144 = arith.constant 0 : index
    %406 = vector.load %arg6[%c0_143, %c0_144] : memref<32x32xbf16, #tpu.memory_space<vmem>>, vector<32x32xbf16>
    %cst_145 = arith.constant dense<0.000000e+00> : vector<1x32xf32>
    %407 = tpu.matmul %395, %406, %cst_145 {dimension_numbers = #tpu.dot_dimension_numbers<[1], [0], [0], [1], [0, 0, 1, 1], [], []>} : vector<1x32xbf16>, vector<32x32xbf16>, vector<1x32xf32> -> vector<1x32xf32>
    %408 = vector.broadcast %403 : vector<1x1xf32> to vector<1x32xf32>
    %409 = arith.divf %405, %408 : vector<1x32xf32>
    %410 = arith.addf %407, %409 : vector<1x32xf32>
    %c0_146 = arith.constant 0 : index
    %c0_147 = arith.constant 0 : index
    %411 = vector.load %arg8[%c0_146, %c0_147] : memref<1x32xf32, #tpu.memory_space<vmem>>, vector<1x32xf32>
    %412 = arith.addf %410, %411 : vector<1x32xf32>
    %413 = math.tanh %412 : vector<1x32xf32>
    %414 = arith.truncf %413 : vector<1x32xf32> to vector<1x32xbf16>
    %c0_148 = arith.constant 0 : index
    %c0_149 = arith.constant 0 : index
    %415 = vector.load %arg9[%c0_148, %c0_149] : memref<32x128xbf16, #tpu.memory_space<vmem>>, vector<32x128xbf16>
    %cst_150 = arith.constant dense<0.000000e+00> : vector<1x128xf32>
    %416 = tpu.matmul %414, %415, %cst_150 {dimension_numbers = #tpu.dot_dimension_numbers<[1], [0], [0], [1], [0, 0, 1, 1], [], []>} : vector<1x32xbf16>, vector<32x128xbf16>, vector<1x128xf32> -> vector<1x128xf32>
    %c0_151 = arith.constant 0 : index
    %c0_152 = arith.constant 0 : index
    %417 = vector.load %arg10[%c0_151, %c0_152] : memref<1x128xf32, #tpu.memory_space<vmem>>, vector<1x128xf32>
    %418 = arith.addf %416, %417 : vector<1x128xf32>
    %cst_153 = arith.constant dense<0xFF800000> : vector<1xf32>
    %419 = vector.multi_reduction <maximumf>, %418, %cst_153 [1] : vector<1x128xf32> to vector<1xf32>
    %420 = vector.shape_cast %419 : vector<1xf32> to vector<1x1xf32>
    %421 = vector.broadcast %420 : vector<1x1xf32> to vector<1x128xf32>
    %422 = arith.subf %418, %421 : vector<1x128xf32>
    %423 = math.exp %422 : vector<1x128xf32>
    %cst_154 = arith.constant dense<0.000000e+00> : vector<1xf32>
    %424 = vector.multi_reduction <add>, %423, %cst_154 [1] : vector<1x128xf32> to vector<1xf32>
    %425 = vector.shape_cast %424 : vector<1xf32> to vector<1x1xf32>
    %426 = tpu.reciprocal %425 {approx = true} : vector<1x1xf32> -> vector<1x1xf32>
    %427 = vector.broadcast %420 : vector<1x1xf32> to vector<1x128xf32>
    %428 = arith.cmpf oge, %418, %427 : vector<1x128xf32>
    %c128_i32_155 = arith.constant 128 : i32
    %429 = vector.broadcast %c128_i32_155 : i32 to vector<1x128xi32>
    %430 = arith.select %428, %206, %429 : vector<1x128xi1>, vector<1x128xi32>
    %cst_156 = arith.constant dense<2147483647> : vector<1xi32>
    %431 = vector.multi_reduction <minsi>, %430, %cst_156 [1] : vector<1x128xi32> to vector<1xi32>
    %432 = vector.shape_cast %431 : vector<1xi32> to vector<1x1xi32>
    %c2_i32 = arith.constant 2 : i32
    %433 = vector.broadcast %c2_i32 : i32 to vector<1x128xi32>
    %434 = arith.cmpi eq, %206, %433 : vector<1x128xi32>
    %435 = vector.shape_cast %432 : vector<1x1xi32> to vector<1x1xi32>
    %436 = vector.broadcast %435 : vector<1x1xi32> to vector<1x128xi32>
    %437 = arith.select %434, %436, %357 : vector<1x128xi1>, vector<1x128xi32>
    %c2_i32_157 = arith.constant 2 : i32
    %438 = vector.broadcast %c2_i32_157 : i32 to vector<1x128xi32>
    %439 = arith.cmpi eq, %206, %438 : vector<1x128xi32>
    %440 = vector.shape_cast %426 : vector<1x1xf32> to vector<1x1xf32>
    %441 = vector.broadcast %440 : vector<1x1xf32> to vector<1x128xf32>
    %442 = arith.select %439, %441, %362 : vector<1x128xi1>, vector<1x128xf32>
    %443 = vector.broadcast %432 : vector<1x1xi32> to vector<1x128xi32>
    %444 = arith.cmpi eq, %206, %443 : vector<1x128xi32>
    %cst_158 = arith.constant 1.000000e+00 : f32
    %cst_159 = arith.constant 0.000000e+00 : f32
    %445 = vector.broadcast %cst_158 : f32 to vector<1x128xf32>
    %446 = vector.broadcast %cst_159 : f32 to vector<1x128xf32>
    %447 = arith.select %444, %445, %446 : vector<1x128xi1>, vector<1x128xf32>
    %448 = arith.truncf %447 : vector<1x128xf32> to vector<1x128xbf16>
    %c0_160 = arith.constant 0 : index
    %c0_161 = arith.constant 0 : index
    %449 = vector.load %arg3[%c0_160, %c0_161] : memref<128x32xbf16, #tpu.memory_space<vmem>>, vector<128x32xbf16>
    %cst_162 = arith.constant dense<0.000000e+00> : vector<1x32xf32>
    %450 = tpu.matmul %448, %449, %cst_162 {dimension_numbers = #tpu.dot_dimension_numbers<[1], [0], [0], [1], [0, 0, 1, 1], [], []>} : vector<1x128xbf16>, vector<128x32xbf16>, vector<1x32xf32> -> vector<1x32xf32>
    %451 = tpu.concatenate %450, %394 in 1 : vector<1x32xf32>, vector<1x32xf32> -> vector<1x64xf32>
    %452 = arith.truncf %451 : vector<1x64xf32> to vector<1x64xbf16>
    %c0_163 = arith.constant 0 : index
    %c0_164 = arith.constant 0 : index
    %453 = vector.load %arg4[%c0_163, %c0_164] : memref<64x128xbf16, #tpu.memory_space<vmem>>, vector<64x128xbf16>
    %cst_165 = arith.constant dense<0.000000e+00> : vector<1x128xf32>
    %454 = tpu.matmul %452, %453, %cst_165 {dimension_numbers = #tpu.dot_dimension_numbers<[1], [0], [0], [1], [0, 0, 1, 1], [], []>} : vector<1x64xbf16>, vector<64x128xbf16>, vector<1x128xf32> -> vector<1x128xf32>
    %c0_166 = arith.constant 0 : index
    %c0_167 = arith.constant 0 : index
    %455 = vector.load %arg5[%c0_166, %c0_167] : memref<1x128xf32, #tpu.memory_space<vmem>>, vector<1x128xf32>
    %456 = arith.addf %454, %455 : vector<1x128xf32>
    %457 = vector.extract_strided_slice %456 {offsets = [0, 0], sizes = [1, 64], strides = [1, 1]} : vector<1x128xf32> to vector<1x64xf32>
    %458 = arith.negf %457 : vector<1x64xf32>
    %459 = math.exp %458 : vector<1x64xf32>
    %cst_168 = arith.constant 1.000000e+00 : f32
    %460 = vector.broadcast %cst_168 : f32 to vector<1x64xf32>
    %461 = arith.addf %460, %459 : vector<1x64xf32>
    %462 = arith.divf %460, %461 : vector<1x64xf32>
    %463 = vector.extract_strided_slice %462 {offsets = [0, 0], sizes = [1, 32], strides = [1, 1]} : vector<1x64xf32> to vector<1x32xf32>
    %464 = vector.extract_strided_slice %462 {offsets = [0, 32], sizes = [1, 32], strides = [1, 1]} : vector<1x64xf32> to vector<1x32xf32>
    %465 = vector.extract_strided_slice %456 {offsets = [0, 64], sizes = [1, 32], strides = [1, 1]} : vector<1x128xf32> to vector<1x32xf32>
    %466 = vector.extract_strided_slice %456 {offsets = [0, 96], sizes = [1, 32], strides = [1, 1]} : vector<1x128xf32> to vector<1x32xf32>
    %467 = arith.mulf %463, %466 : vector<1x32xf32>
    %468 = arith.addf %465, %467 : vector<1x32xf32>
    %469 = math.tanh %468 : vector<1x32xf32>
    %cst_169 = arith.constant 1.000000e+00 : f32
    %470 = vector.broadcast %cst_169 : f32 to vector<1x32xf32>
    %471 = arith.subf %470, %464 : vector<1x32xf32>
    %472 = arith.mulf %471, %469 : vector<1x32xf32>
    %473 = arith.mulf %464, %394 : vector<1x32xf32>
    %474 = arith.addf %472, %473 : vector<1x32xf32>
    %475 = arith.truncf %474 : vector<1x32xf32> to vector<1x32xbf16>
    %cst_170 = arith.constant dense<0.000000e+00> : vector<1x8xf32>
    %476 = tpu.matmul %475, %202, %cst_170 {dimension_numbers = #tpu.dot_dimension_numbers<[1], [1], [0], [0], [0, 0, 1, 0], [], []>} : vector<1x32xbf16>, vector<8x32xbf16>, vector<1x8xf32> -> vector<1x8xf32>
    %cst_171 = arith.constant dense<0xFF800000> : vector<1xf32>
    %477 = vector.multi_reduction <maximumf>, %476, %cst_171 [1] : vector<1x8xf32> to vector<1xf32>
    %478 = vector.shape_cast %477 : vector<1xf32> to vector<1x1xf32>
    %479 = vector.broadcast %478 : vector<1x1xf32> to vector<1x8xf32>
    %480 = arith.subf %476, %479 : vector<1x8xf32>
    %481 = math.exp %480 : vector<1x8xf32>
    %cst_172 = arith.constant dense<0.000000e+00> : vector<1xf32>
    %482 = vector.multi_reduction <add>, %481, %cst_172 [1] : vector<1x8xf32> to vector<1xf32>
    %483 = vector.shape_cast %482 : vector<1xf32> to vector<1x1xf32>
    %484 = arith.truncf %481 : vector<1x8xf32> to vector<1x8xbf16>
    %cst_173 = arith.constant dense<0.000000e+00> : vector<1x32xf32>
    %485 = tpu.matmul %484, %205, %cst_173 {dimension_numbers = #tpu.dot_dimension_numbers<[1], [0], [0], [1], [0, 0, 1, 1], [], []>} : vector<1x8xbf16>, vector<8x32xbf16>, vector<1x32xf32> -> vector<1x32xf32>
    %c0_174 = arith.constant 0 : index
    %c0_175 = arith.constant 0 : index
    %486 = vector.load %arg6[%c0_174, %c0_175] : memref<32x32xbf16, #tpu.memory_space<vmem>>, vector<32x32xbf16>
    %cst_176 = arith.constant dense<0.000000e+00> : vector<1x32xf32>
    %487 = tpu.matmul %475, %486, %cst_176 {dimension_numbers = #tpu.dot_dimension_numbers<[1], [0], [0], [1], [0, 0, 1, 1], [], []>} : vector<1x32xbf16>, vector<32x32xbf16>, vector<1x32xf32> -> vector<1x32xf32>
    %488 = vector.broadcast %483 : vector<1x1xf32> to vector<1x32xf32>
    %489 = arith.divf %485, %488 : vector<1x32xf32>
    %490 = arith.addf %487, %489 : vector<1x32xf32>
    %c0_177 = arith.constant 0 : index
    %c0_178 = arith.constant 0 : index
    %491 = vector.load %arg8[%c0_177, %c0_178] : memref<1x32xf32, #tpu.memory_space<vmem>>, vector<1x32xf32>
    %492 = arith.addf %490, %491 : vector<1x32xf32>
    %493 = math.tanh %492 : vector<1x32xf32>
    %494 = arith.truncf %493 : vector<1x32xf32> to vector<1x32xbf16>
    %c0_179 = arith.constant 0 : index
    %c0_180 = arith.constant 0 : index
    %495 = vector.load %arg9[%c0_179, %c0_180] : memref<32x128xbf16, #tpu.memory_space<vmem>>, vector<32x128xbf16>
    %cst_181 = arith.constant dense<0.000000e+00> : vector<1x128xf32>
    %496 = tpu.matmul %494, %495, %cst_181 {dimension_numbers = #tpu.dot_dimension_numbers<[1], [0], [0], [1], [0, 0, 1, 1], [], []>} : vector<1x32xbf16>, vector<32x128xbf16>, vector<1x128xf32> -> vector<1x128xf32>
    %c0_182 = arith.constant 0 : index
    %c0_183 = arith.constant 0 : index
    %497 = vector.load %arg10[%c0_182, %c0_183] : memref<1x128xf32, #tpu.memory_space<vmem>>, vector<1x128xf32>
    %498 = arith.addf %496, %497 : vector<1x128xf32>
    %cst_184 = arith.constant dense<0xFF800000> : vector<1xf32>
    %499 = vector.multi_reduction <maximumf>, %498, %cst_184 [1] : vector<1x128xf32> to vector<1xf32>
    %500 = vector.shape_cast %499 : vector<1xf32> to vector<1x1xf32>
    %501 = vector.broadcast %500 : vector<1x1xf32> to vector<1x128xf32>
    %502 = arith.subf %498, %501 : vector<1x128xf32>
    %503 = math.exp %502 : vector<1x128xf32>
    %cst_185 = arith.constant dense<0.000000e+00> : vector<1xf32>
    %504 = vector.multi_reduction <add>, %503, %cst_185 [1] : vector<1x128xf32> to vector<1xf32>
    %505 = vector.shape_cast %504 : vector<1xf32> to vector<1x1xf32>
    %506 = tpu.reciprocal %505 {approx = true} : vector<1x1xf32> -> vector<1x1xf32>
    %507 = vector.broadcast %500 : vector<1x1xf32> to vector<1x128xf32>
    %508 = arith.cmpf oge, %498, %507 : vector<1x128xf32>
    %c128_i32_186 = arith.constant 128 : i32
    %509 = vector.broadcast %c128_i32_186 : i32 to vector<1x128xi32>
    %510 = arith.select %508, %206, %509 : vector<1x128xi1>, vector<1x128xi32>
    %cst_187 = arith.constant dense<2147483647> : vector<1xi32>
    %511 = vector.multi_reduction <minsi>, %510, %cst_187 [1] : vector<1x128xi32> to vector<1xi32>
    %512 = vector.shape_cast %511 : vector<1xi32> to vector<1x1xi32>
    %c3_i32 = arith.constant 3 : i32
    %513 = vector.broadcast %c3_i32 : i32 to vector<1x128xi32>
    %514 = arith.cmpi eq, %206, %513 : vector<1x128xi32>
    %515 = vector.shape_cast %512 : vector<1x1xi32> to vector<1x1xi32>
    %516 = vector.broadcast %515 : vector<1x1xi32> to vector<1x128xi32>
    %517 = arith.select %514, %516, %437 : vector<1x128xi1>, vector<1x128xi32>
    %c3_i32_188 = arith.constant 3 : i32
    %518 = vector.broadcast %c3_i32_188 : i32 to vector<1x128xi32>
    %519 = arith.cmpi eq, %206, %518 : vector<1x128xi32>
    %520 = vector.shape_cast %506 : vector<1x1xf32> to vector<1x1xf32>
    %521 = vector.broadcast %520 : vector<1x1xf32> to vector<1x128xf32>
    %522 = arith.select %519, %521, %442 : vector<1x128xi1>, vector<1x128xf32>
    %523 = vector.broadcast %512 : vector<1x1xi32> to vector<1x128xi32>
    %524 = arith.cmpi eq, %206, %523 : vector<1x128xi32>
    %cst_189 = arith.constant 1.000000e+00 : f32
    %cst_190 = arith.constant 0.000000e+00 : f32
    %525 = vector.broadcast %cst_189 : f32 to vector<1x128xf32>
    %526 = vector.broadcast %cst_190 : f32 to vector<1x128xf32>
    %527 = arith.select %524, %525, %526 : vector<1x128xi1>, vector<1x128xf32>
    %528 = arith.truncf %527 : vector<1x128xf32> to vector<1x128xbf16>
    %c0_191 = arith.constant 0 : index
    %c0_192 = arith.constant 0 : index
    %529 = vector.load %arg3[%c0_191, %c0_192] : memref<128x32xbf16, #tpu.memory_space<vmem>>, vector<128x32xbf16>
    %cst_193 = arith.constant dense<0.000000e+00> : vector<1x32xf32>
    %530 = tpu.matmul %528, %529, %cst_193 {dimension_numbers = #tpu.dot_dimension_numbers<[1], [0], [0], [1], [0, 0, 1, 1], [], []>} : vector<1x128xbf16>, vector<128x32xbf16>, vector<1x32xf32> -> vector<1x32xf32>
    %531 = tpu.concatenate %530, %474 in 1 : vector<1x32xf32>, vector<1x32xf32> -> vector<1x64xf32>
    %532 = arith.truncf %531 : vector<1x64xf32> to vector<1x64xbf16>
    %c0_194 = arith.constant 0 : index
    %c0_195 = arith.constant 0 : index
    %533 = vector.load %arg4[%c0_194, %c0_195] : memref<64x128xbf16, #tpu.memory_space<vmem>>, vector<64x128xbf16>
    %cst_196 = arith.constant dense<0.000000e+00> : vector<1x128xf32>
    %534 = tpu.matmul %532, %533, %cst_196 {dimension_numbers = #tpu.dot_dimension_numbers<[1], [0], [0], [1], [0, 0, 1, 1], [], []>} : vector<1x64xbf16>, vector<64x128xbf16>, vector<1x128xf32> -> vector<1x128xf32>
    %c0_197 = arith.constant 0 : index
    %c0_198 = arith.constant 0 : index
    %535 = vector.load %arg5[%c0_197, %c0_198] : memref<1x128xf32, #tpu.memory_space<vmem>>, vector<1x128xf32>
    %536 = arith.addf %534, %535 : vector<1x128xf32>
    %537 = vector.extract_strided_slice %536 {offsets = [0, 0], sizes = [1, 64], strides = [1, 1]} : vector<1x128xf32> to vector<1x64xf32>
    %538 = arith.negf %537 : vector<1x64xf32>
    %539 = math.exp %538 : vector<1x64xf32>
    %cst_199 = arith.constant 1.000000e+00 : f32
    %540 = vector.broadcast %cst_199 : f32 to vector<1x64xf32>
    %541 = arith.addf %540, %539 : vector<1x64xf32>
    %542 = arith.divf %540, %541 : vector<1x64xf32>
    %543 = vector.extract_strided_slice %542 {offsets = [0, 0], sizes = [1, 32], strides = [1, 1]} : vector<1x64xf32> to vector<1x32xf32>
    %544 = vector.extract_strided_slice %542 {offsets = [0, 32], sizes = [1, 32], strides = [1, 1]} : vector<1x64xf32> to vector<1x32xf32>
    %545 = vector.extract_strided_slice %536 {offsets = [0, 64], sizes = [1, 32], strides = [1, 1]} : vector<1x128xf32> to vector<1x32xf32>
    %546 = vector.extract_strided_slice %536 {offsets = [0, 96], sizes = [1, 32], strides = [1, 1]} : vector<1x128xf32> to vector<1x32xf32>
    %547 = arith.mulf %543, %546 : vector<1x32xf32>
    %548 = arith.addf %545, %547 : vector<1x32xf32>
    %549 = math.tanh %548 : vector<1x32xf32>
    %cst_200 = arith.constant 1.000000e+00 : f32
    %550 = vector.broadcast %cst_200 : f32 to vector<1x32xf32>
    %551 = arith.subf %550, %544 : vector<1x32xf32>
    %552 = arith.mulf %551, %549 : vector<1x32xf32>
    %553 = arith.mulf %544, %474 : vector<1x32xf32>
    %554 = arith.addf %552, %553 : vector<1x32xf32>
    %555 = arith.truncf %554 : vector<1x32xf32> to vector<1x32xbf16>
    %cst_201 = arith.constant dense<0.000000e+00> : vector<1x8xf32>
    %556 = tpu.matmul %555, %202, %cst_201 {dimension_numbers = #tpu.dot_dimension_numbers<[1], [1], [0], [0], [0, 0, 1, 0], [], []>} : vector<1x32xbf16>, vector<8x32xbf16>, vector<1x8xf32> -> vector<1x8xf32>
    %cst_202 = arith.constant dense<0xFF800000> : vector<1xf32>
    %557 = vector.multi_reduction <maximumf>, %556, %cst_202 [1] : vector<1x8xf32> to vector<1xf32>
    %558 = vector.shape_cast %557 : vector<1xf32> to vector<1x1xf32>
    %559 = vector.broadcast %558 : vector<1x1xf32> to vector<1x8xf32>
    %560 = arith.subf %556, %559 : vector<1x8xf32>
    %561 = math.exp %560 : vector<1x8xf32>
    %cst_203 = arith.constant dense<0.000000e+00> : vector<1xf32>
    %562 = vector.multi_reduction <add>, %561, %cst_203 [1] : vector<1x8xf32> to vector<1xf32>
    %563 = vector.shape_cast %562 : vector<1xf32> to vector<1x1xf32>
    %564 = arith.truncf %561 : vector<1x8xf32> to vector<1x8xbf16>
    %cst_204 = arith.constant dense<0.000000e+00> : vector<1x32xf32>
    %565 = tpu.matmul %564, %205, %cst_204 {dimension_numbers = #tpu.dot_dimension_numbers<[1], [0], [0], [1], [0, 0, 1, 1], [], []>} : vector<1x8xbf16>, vector<8x32xbf16>, vector<1x32xf32> -> vector<1x32xf32>
    %c0_205 = arith.constant 0 : index
    %c0_206 = arith.constant 0 : index
    %566 = vector.load %arg6[%c0_205, %c0_206] : memref<32x32xbf16, #tpu.memory_space<vmem>>, vector<32x32xbf16>
    %cst_207 = arith.constant dense<0.000000e+00> : vector<1x32xf32>
    %567 = tpu.matmul %555, %566, %cst_207 {dimension_numbers = #tpu.dot_dimension_numbers<[1], [0], [0], [1], [0, 0, 1, 1], [], []>} : vector<1x32xbf16>, vector<32x32xbf16>, vector<1x32xf32> -> vector<1x32xf32>
    %568 = vector.broadcast %563 : vector<1x1xf32> to vector<1x32xf32>
    %569 = arith.divf %565, %568 : vector<1x32xf32>
    %570 = arith.addf %567, %569 : vector<1x32xf32>
    %c0_208 = arith.constant 0 : index
    %c0_209 = arith.constant 0 : index
    %571 = vector.load %arg8[%c0_208, %c0_209] : memref<1x32xf32, #tpu.memory_space<vmem>>, vector<1x32xf32>
    %572 = arith.addf %570, %571 : vector<1x32xf32>
    %573 = math.tanh %572 : vector<1x32xf32>
    %574 = arith.truncf %573 : vector<1x32xf32> to vector<1x32xbf16>
    %c0_210 = arith.constant 0 : index
    %c0_211 = arith.constant 0 : index
    %575 = vector.load %arg9[%c0_210, %c0_211] : memref<32x128xbf16, #tpu.memory_space<vmem>>, vector<32x128xbf16>
    %cst_212 = arith.constant dense<0.000000e+00> : vector<1x128xf32>
    %576 = tpu.matmul %574, %575, %cst_212 {dimension_numbers = #tpu.dot_dimension_numbers<[1], [0], [0], [1], [0, 0, 1, 1], [], []>} : vector<1x32xbf16>, vector<32x128xbf16>, vector<1x128xf32> -> vector<1x128xf32>
    %c0_213 = arith.constant 0 : index
    %c0_214 = arith.constant 0 : index
    %577 = vector.load %arg10[%c0_213, %c0_214] : memref<1x128xf32, #tpu.memory_space<vmem>>, vector<1x128xf32>
    %578 = arith.addf %576, %577 : vector<1x128xf32>
    %cst_215 = arith.constant dense<0xFF800000> : vector<1xf32>
    %579 = vector.multi_reduction <maximumf>, %578, %cst_215 [1] : vector<1x128xf32> to vector<1xf32>
    %580 = vector.shape_cast %579 : vector<1xf32> to vector<1x1xf32>
    %581 = vector.broadcast %580 : vector<1x1xf32> to vector<1x128xf32>
    %582 = arith.subf %578, %581 : vector<1x128xf32>
    %583 = math.exp %582 : vector<1x128xf32>
    %cst_216 = arith.constant dense<0.000000e+00> : vector<1xf32>
    %584 = vector.multi_reduction <add>, %583, %cst_216 [1] : vector<1x128xf32> to vector<1xf32>
    %585 = vector.shape_cast %584 : vector<1xf32> to vector<1x1xf32>
    %586 = tpu.reciprocal %585 {approx = true} : vector<1x1xf32> -> vector<1x1xf32>
    %587 = vector.broadcast %580 : vector<1x1xf32> to vector<1x128xf32>
    %588 = arith.cmpf oge, %578, %587 : vector<1x128xf32>
    %c128_i32_217 = arith.constant 128 : i32
    %589 = vector.broadcast %c128_i32_217 : i32 to vector<1x128xi32>
    %590 = arith.select %588, %206, %589 : vector<1x128xi1>, vector<1x128xi32>
    %cst_218 = arith.constant dense<2147483647> : vector<1xi32>
    %591 = vector.multi_reduction <minsi>, %590, %cst_218 [1] : vector<1x128xi32> to vector<1xi32>
    %592 = vector.shape_cast %591 : vector<1xi32> to vector<1x1xi32>
    %c4_i32 = arith.constant 4 : i32
    %593 = vector.broadcast %c4_i32 : i32 to vector<1x128xi32>
    %594 = arith.cmpi eq, %206, %593 : vector<1x128xi32>
    %595 = vector.shape_cast %592 : vector<1x1xi32> to vector<1x1xi32>
    %596 = vector.broadcast %595 : vector<1x1xi32> to vector<1x128xi32>
    %597 = arith.select %594, %596, %517 : vector<1x128xi1>, vector<1x128xi32>
    %c4_i32_219 = arith.constant 4 : i32
    %598 = vector.broadcast %c4_i32_219 : i32 to vector<1x128xi32>
    %599 = arith.cmpi eq, %206, %598 : vector<1x128xi32>
    %600 = vector.shape_cast %586 : vector<1x1xf32> to vector<1x1xf32>
    %601 = vector.broadcast %600 : vector<1x1xf32> to vector<1x128xf32>
    %602 = arith.select %599, %601, %522 : vector<1x128xi1>, vector<1x128xf32>
    %603 = vector.broadcast %592 : vector<1x1xi32> to vector<1x128xi32>
    %604 = arith.cmpi eq, %206, %603 : vector<1x128xi32>
    %cst_220 = arith.constant 1.000000e+00 : f32
    %cst_221 = arith.constant 0.000000e+00 : f32
    %605 = vector.broadcast %cst_220 : f32 to vector<1x128xf32>
    %606 = vector.broadcast %cst_221 : f32 to vector<1x128xf32>
    %607 = arith.select %604, %605, %606 : vector<1x128xi1>, vector<1x128xf32>
    %608 = arith.truncf %607 : vector<1x128xf32> to vector<1x128xbf16>
    %c0_222 = arith.constant 0 : index
    %c0_223 = arith.constant 0 : index
    %609 = vector.load %arg3[%c0_222, %c0_223] : memref<128x32xbf16, #tpu.memory_space<vmem>>, vector<128x32xbf16>
    %cst_224 = arith.constant dense<0.000000e+00> : vector<1x32xf32>
    %610 = tpu.matmul %608, %609, %cst_224 {dimension_numbers = #tpu.dot_dimension_numbers<[1], [0], [0], [1], [0, 0, 1, 1], [], []>} : vector<1x128xbf16>, vector<128x32xbf16>, vector<1x32xf32> -> vector<1x32xf32>
    %611 = tpu.concatenate %610, %554 in 1 : vector<1x32xf32>, vector<1x32xf32> -> vector<1x64xf32>
    %612 = arith.truncf %611 : vector<1x64xf32> to vector<1x64xbf16>
    %c0_225 = arith.constant 0 : index
    %c0_226 = arith.constant 0 : index
    %613 = vector.load %arg4[%c0_225, %c0_226] : memref<64x128xbf16, #tpu.memory_space<vmem>>, vector<64x128xbf16>
    %cst_227 = arith.constant dense<0.000000e+00> : vector<1x128xf32>
    %614 = tpu.matmul %612, %613, %cst_227 {dimension_numbers = #tpu.dot_dimension_numbers<[1], [0], [0], [1], [0, 0, 1, 1], [], []>} : vector<1x64xbf16>, vector<64x128xbf16>, vector<1x128xf32> -> vector<1x128xf32>
    %c0_228 = arith.constant 0 : index
    %c0_229 = arith.constant 0 : index
    %615 = vector.load %arg5[%c0_228, %c0_229] : memref<1x128xf32, #tpu.memory_space<vmem>>, vector<1x128xf32>
    %616 = arith.addf %614, %615 : vector<1x128xf32>
    %617 = vector.extract_strided_slice %616 {offsets = [0, 0], sizes = [1, 64], strides = [1, 1]} : vector<1x128xf32> to vector<1x64xf32>
    %618 = arith.negf %617 : vector<1x64xf32>
    %619 = math.exp %618 : vector<1x64xf32>
    %cst_230 = arith.constant 1.000000e+00 : f32
    %620 = vector.broadcast %cst_230 : f32 to vector<1x64xf32>
    %621 = arith.addf %620, %619 : vector<1x64xf32>
    %622 = arith.divf %620, %621 : vector<1x64xf32>
    %623 = vector.extract_strided_slice %622 {offsets = [0, 0], sizes = [1, 32], strides = [1, 1]} : vector<1x64xf32> to vector<1x32xf32>
    %624 = vector.extract_strided_slice %622 {offsets = [0, 32], sizes = [1, 32], strides = [1, 1]} : vector<1x64xf32> to vector<1x32xf32>
    %625 = vector.extract_strided_slice %616 {offsets = [0, 64], sizes = [1, 32], strides = [1, 1]} : vector<1x128xf32> to vector<1x32xf32>
    %626 = vector.extract_strided_slice %616 {offsets = [0, 96], sizes = [1, 32], strides = [1, 1]} : vector<1x128xf32> to vector<1x32xf32>
    %627 = arith.mulf %623, %626 : vector<1x32xf32>
    %628 = arith.addf %625, %627 : vector<1x32xf32>
    %629 = math.tanh %628 : vector<1x32xf32>
    %cst_231 = arith.constant 1.000000e+00 : f32
    %630 = vector.broadcast %cst_231 : f32 to vector<1x32xf32>
    %631 = arith.subf %630, %624 : vector<1x32xf32>
    %632 = arith.mulf %631, %629 : vector<1x32xf32>
    %633 = arith.mulf %624, %554 : vector<1x32xf32>
    %634 = arith.addf %632, %633 : vector<1x32xf32>
    %635 = arith.truncf %634 : vector<1x32xf32> to vector<1x32xbf16>
    %cst_232 = arith.constant dense<0.000000e+00> : vector<1x8xf32>
    %636 = tpu.matmul %635, %202, %cst_232 {dimension_numbers = #tpu.dot_dimension_numbers<[1], [1], [0], [0], [0, 0, 1, 0], [], []>} : vector<1x32xbf16>, vector<8x32xbf16>, vector<1x8xf32> -> vector<1x8xf32>
    %cst_233 = arith.constant dense<0xFF800000> : vector<1xf32>
    %637 = vector.multi_reduction <maximumf>, %636, %cst_233 [1] : vector<1x8xf32> to vector<1xf32>
    %638 = vector.shape_cast %637 : vector<1xf32> to vector<1x1xf32>
    %639 = vector.broadcast %638 : vector<1x1xf32> to vector<1x8xf32>
    %640 = arith.subf %636, %639 : vector<1x8xf32>
    %641 = math.exp %640 : vector<1x8xf32>
    %cst_234 = arith.constant dense<0.000000e+00> : vector<1xf32>
    %642 = vector.multi_reduction <add>, %641, %cst_234 [1] : vector<1x8xf32> to vector<1xf32>
    %643 = vector.shape_cast %642 : vector<1xf32> to vector<1x1xf32>
    %644 = arith.truncf %641 : vector<1x8xf32> to vector<1x8xbf16>
    %cst_235 = arith.constant dense<0.000000e+00> : vector<1x32xf32>
    %645 = tpu.matmul %644, %205, %cst_235 {dimension_numbers = #tpu.dot_dimension_numbers<[1], [0], [0], [1], [0, 0, 1, 1], [], []>} : vector<1x8xbf16>, vector<8x32xbf16>, vector<1x32xf32> -> vector<1x32xf32>
    %c0_236 = arith.constant 0 : index
    %c0_237 = arith.constant 0 : index
    %646 = vector.load %arg6[%c0_236, %c0_237] : memref<32x32xbf16, #tpu.memory_space<vmem>>, vector<32x32xbf16>
    %cst_238 = arith.constant dense<0.000000e+00> : vector<1x32xf32>
    %647 = tpu.matmul %635, %646, %cst_238 {dimension_numbers = #tpu.dot_dimension_numbers<[1], [0], [0], [1], [0, 0, 1, 1], [], []>} : vector<1x32xbf16>, vector<32x32xbf16>, vector<1x32xf32> -> vector<1x32xf32>
    %648 = vector.broadcast %643 : vector<1x1xf32> to vector<1x32xf32>
    %649 = arith.divf %645, %648 : vector<1x32xf32>
    %650 = arith.addf %647, %649 : vector<1x32xf32>
    %c0_239 = arith.constant 0 : index
    %c0_240 = arith.constant 0 : index
    %651 = vector.load %arg8[%c0_239, %c0_240] : memref<1x32xf32, #tpu.memory_space<vmem>>, vector<1x32xf32>
    %652 = arith.addf %650, %651 : vector<1x32xf32>
    %653 = math.tanh %652 : vector<1x32xf32>
    %654 = arith.truncf %653 : vector<1x32xf32> to vector<1x32xbf16>
    %c0_241 = arith.constant 0 : index
    %c0_242 = arith.constant 0 : index
    %655 = vector.load %arg9[%c0_241, %c0_242] : memref<32x128xbf16, #tpu.memory_space<vmem>>, vector<32x128xbf16>
    %cst_243 = arith.constant dense<0.000000e+00> : vector<1x128xf32>
    %656 = tpu.matmul %654, %655, %cst_243 {dimension_numbers = #tpu.dot_dimension_numbers<[1], [0], [0], [1], [0, 0, 1, 1], [], []>} : vector<1x32xbf16>, vector<32x128xbf16>, vector<1x128xf32> -> vector<1x128xf32>
    %c0_244 = arith.constant 0 : index
    %c0_245 = arith.constant 0 : index
    %657 = vector.load %arg10[%c0_244, %c0_245] : memref<1x128xf32, #tpu.memory_space<vmem>>, vector<1x128xf32>
    %658 = arith.addf %656, %657 : vector<1x128xf32>
    %cst_246 = arith.constant dense<0xFF800000> : vector<1xf32>
    %659 = vector.multi_reduction <maximumf>, %658, %cst_246 [1] : vector<1x128xf32> to vector<1xf32>
    %660 = vector.shape_cast %659 : vector<1xf32> to vector<1x1xf32>
    %661 = vector.broadcast %660 : vector<1x1xf32> to vector<1x128xf32>
    %662 = arith.subf %658, %661 : vector<1x128xf32>
    %663 = math.exp %662 : vector<1x128xf32>
    %cst_247 = arith.constant dense<0.000000e+00> : vector<1xf32>
    %664 = vector.multi_reduction <add>, %663, %cst_247 [1] : vector<1x128xf32> to vector<1xf32>
    %665 = vector.shape_cast %664 : vector<1xf32> to vector<1x1xf32>
    %666 = tpu.reciprocal %665 {approx = true} : vector<1x1xf32> -> vector<1x1xf32>
    %667 = vector.broadcast %660 : vector<1x1xf32> to vector<1x128xf32>
    %668 = arith.cmpf oge, %658, %667 : vector<1x128xf32>
    %c128_i32_248 = arith.constant 128 : i32
    %669 = vector.broadcast %c128_i32_248 : i32 to vector<1x128xi32>
    %670 = arith.select %668, %206, %669 : vector<1x128xi1>, vector<1x128xi32>
    %cst_249 = arith.constant dense<2147483647> : vector<1xi32>
    %671 = vector.multi_reduction <minsi>, %670, %cst_249 [1] : vector<1x128xi32> to vector<1xi32>
    %672 = vector.shape_cast %671 : vector<1xi32> to vector<1x1xi32>
    %c5_i32 = arith.constant 5 : i32
    %673 = vector.broadcast %c5_i32 : i32 to vector<1x128xi32>
    %674 = arith.cmpi eq, %206, %673 : vector<1x128xi32>
    %675 = vector.shape_cast %672 : vector<1x1xi32> to vector<1x1xi32>
    %676 = vector.broadcast %675 : vector<1x1xi32> to vector<1x128xi32>
    %677 = arith.select %674, %676, %597 : vector<1x128xi1>, vector<1x128xi32>
    %c5_i32_250 = arith.constant 5 : i32
    %678 = vector.broadcast %c5_i32_250 : i32 to vector<1x128xi32>
    %679 = arith.cmpi eq, %206, %678 : vector<1x128xi32>
    %680 = vector.shape_cast %666 : vector<1x1xf32> to vector<1x1xf32>
    %681 = vector.broadcast %680 : vector<1x1xf32> to vector<1x128xf32>
    %682 = arith.select %679, %681, %602 : vector<1x128xi1>, vector<1x128xf32>
    %683 = vector.broadcast %672 : vector<1x1xi32> to vector<1x128xi32>
    %684 = arith.cmpi eq, %206, %683 : vector<1x128xi32>
    %cst_251 = arith.constant 1.000000e+00 : f32
    %cst_252 = arith.constant 0.000000e+00 : f32
    %685 = vector.broadcast %cst_251 : f32 to vector<1x128xf32>
    %686 = vector.broadcast %cst_252 : f32 to vector<1x128xf32>
    %687 = arith.select %684, %685, %686 : vector<1x128xi1>, vector<1x128xf32>
    %688 = arith.truncf %687 : vector<1x128xf32> to vector<1x128xbf16>
    %c0_253 = arith.constant 0 : index
    %c0_254 = arith.constant 0 : index
    %689 = vector.load %arg3[%c0_253, %c0_254] : memref<128x32xbf16, #tpu.memory_space<vmem>>, vector<128x32xbf16>
    %cst_255 = arith.constant dense<0.000000e+00> : vector<1x32xf32>
    %690 = tpu.matmul %688, %689, %cst_255 {dimension_numbers = #tpu.dot_dimension_numbers<[1], [0], [0], [1], [0, 0, 1, 1], [], []>} : vector<1x128xbf16>, vector<128x32xbf16>, vector<1x32xf32> -> vector<1x32xf32>
    %691 = tpu.concatenate %690, %634 in 1 : vector<1x32xf32>, vector<1x32xf32> -> vector<1x64xf32>
    %692 = arith.truncf %691 : vector<1x64xf32> to vector<1x64xbf16>
    %c0_256 = arith.constant 0 : index
    %c0_257 = arith.constant 0 : index
    %693 = vector.load %arg4[%c0_256, %c0_257] : memref<64x128xbf16, #tpu.memory_space<vmem>>, vector<64x128xbf16>
    %cst_258 = arith.constant dense<0.000000e+00> : vector<1x128xf32>
    %694 = tpu.matmul %692, %693, %cst_258 {dimension_numbers = #tpu.dot_dimension_numbers<[1], [0], [0], [1], [0, 0, 1, 1], [], []>} : vector<1x64xbf16>, vector<64x128xbf16>, vector<1x128xf32> -> vector<1x128xf32>
    %c0_259 = arith.constant 0 : index
    %c0_260 = arith.constant 0 : index
    %695 = vector.load %arg5[%c0_259, %c0_260] : memref<1x128xf32, #tpu.memory_space<vmem>>, vector<1x128xf32>
    %696 = arith.addf %694, %695 : vector<1x128xf32>
    %697 = vector.extract_strided_slice %696 {offsets = [0, 0], sizes = [1, 64], strides = [1, 1]} : vector<1x128xf32> to vector<1x64xf32>
    %698 = arith.negf %697 : vector<1x64xf32>
    %699 = math.exp %698 : vector<1x64xf32>
    %cst_261 = arith.constant 1.000000e+00 : f32
    %700 = vector.broadcast %cst_261 : f32 to vector<1x64xf32>
    %701 = arith.addf %700, %699 : vector<1x64xf32>
    %702 = arith.divf %700, %701 : vector<1x64xf32>
    %703 = vector.extract_strided_slice %702 {offsets = [0, 0], sizes = [1, 32], strides = [1, 1]} : vector<1x64xf32> to vector<1x32xf32>
    %704 = vector.extract_strided_slice %702 {offsets = [0, 32], sizes = [1, 32], strides = [1, 1]} : vector<1x64xf32> to vector<1x32xf32>
    %705 = vector.extract_strided_slice %696 {offsets = [0, 64], sizes = [1, 32], strides = [1, 1]} : vector<1x128xf32> to vector<1x32xf32>
    %706 = vector.extract_strided_slice %696 {offsets = [0, 96], sizes = [1, 32], strides = [1, 1]} : vector<1x128xf32> to vector<1x32xf32>
    %707 = arith.mulf %703, %706 : vector<1x32xf32>
    %708 = arith.addf %705, %707 : vector<1x32xf32>
    %709 = math.tanh %708 : vector<1x32xf32>
    %cst_262 = arith.constant 1.000000e+00 : f32
    %710 = vector.broadcast %cst_262 : f32 to vector<1x32xf32>
    %711 = arith.subf %710, %704 : vector<1x32xf32>
    %712 = arith.mulf %711, %709 : vector<1x32xf32>
    %713 = arith.mulf %704, %634 : vector<1x32xf32>
    %714 = arith.addf %712, %713 : vector<1x32xf32>
    %715 = arith.truncf %714 : vector<1x32xf32> to vector<1x32xbf16>
    %cst_263 = arith.constant dense<0.000000e+00> : vector<1x8xf32>
    %716 = tpu.matmul %715, %202, %cst_263 {dimension_numbers = #tpu.dot_dimension_numbers<[1], [1], [0], [0], [0, 0, 1, 0], [], []>} : vector<1x32xbf16>, vector<8x32xbf16>, vector<1x8xf32> -> vector<1x8xf32>
    %cst_264 = arith.constant dense<0xFF800000> : vector<1xf32>
    %717 = vector.multi_reduction <maximumf>, %716, %cst_264 [1] : vector<1x8xf32> to vector<1xf32>
    %718 = vector.shape_cast %717 : vector<1xf32> to vector<1x1xf32>
    %719 = vector.broadcast %718 : vector<1x1xf32> to vector<1x8xf32>
    %720 = arith.subf %716, %719 : vector<1x8xf32>
    %721 = math.exp %720 : vector<1x8xf32>
    %cst_265 = arith.constant dense<0.000000e+00> : vector<1xf32>
    %722 = vector.multi_reduction <add>, %721, %cst_265 [1] : vector<1x8xf32> to vector<1xf32>
    %723 = vector.shape_cast %722 : vector<1xf32> to vector<1x1xf32>
    %724 = arith.truncf %721 : vector<1x8xf32> to vector<1x8xbf16>
    %cst_266 = arith.constant dense<0.000000e+00> : vector<1x32xf32>
    %725 = tpu.matmul %724, %205, %cst_266 {dimension_numbers = #tpu.dot_dimension_numbers<[1], [0], [0], [1], [0, 0, 1, 1], [], []>} : vector<1x8xbf16>, vector<8x32xbf16>, vector<1x32xf32> -> vector<1x32xf32>
    %c0_267 = arith.constant 0 : index
    %c0_268 = arith.constant 0 : index
    %726 = vector.load %arg6[%c0_267, %c0_268] : memref<32x32xbf16, #tpu.memory_space<vmem>>, vector<32x32xbf16>
    %cst_269 = arith.constant dense<0.000000e+00> : vector<1x32xf32>
    %727 = tpu.matmul %715, %726, %cst_269 {dimension_numbers = #tpu.dot_dimension_numbers<[1], [0], [0], [1], [0, 0, 1, 1], [], []>} : vector<1x32xbf16>, vector<32x32xbf16>, vector<1x32xf32> -> vector<1x32xf32>
    %728 = vector.broadcast %723 : vector<1x1xf32> to vector<1x32xf32>
    %729 = arith.divf %725, %728 : vector<1x32xf32>
    %730 = arith.addf %727, %729 : vector<1x32xf32>
    %c0_270 = arith.constant 0 : index
    %c0_271 = arith.constant 0 : index
    %731 = vector.load %arg8[%c0_270, %c0_271] : memref<1x32xf32, #tpu.memory_space<vmem>>, vector<1x32xf32>
    %732 = arith.addf %730, %731 : vector<1x32xf32>
    %733 = math.tanh %732 : vector<1x32xf32>
    %734 = arith.truncf %733 : vector<1x32xf32> to vector<1x32xbf16>
    %c0_272 = arith.constant 0 : index
    %c0_273 = arith.constant 0 : index
    %735 = vector.load %arg9[%c0_272, %c0_273] : memref<32x128xbf16, #tpu.memory_space<vmem>>, vector<32x128xbf16>
    %cst_274 = arith.constant dense<0.000000e+00> : vector<1x128xf32>
    %736 = tpu.matmul %734, %735, %cst_274 {dimension_numbers = #tpu.dot_dimension_numbers<[1], [0], [0], [1], [0, 0, 1, 1], [], []>} : vector<1x32xbf16>, vector<32x128xbf16>, vector<1x128xf32> -> vector<1x128xf32>
    %c0_275 = arith.constant 0 : index
    %c0_276 = arith.constant 0 : index
    %737 = vector.load %arg10[%c0_275, %c0_276] : memref<1x128xf32, #tpu.memory_space<vmem>>, vector<1x128xf32>
    %738 = arith.addf %736, %737 : vector<1x128xf32>
    %cst_277 = arith.constant dense<0xFF800000> : vector<1xf32>
    %739 = vector.multi_reduction <maximumf>, %738, %cst_277 [1] : vector<1x128xf32> to vector<1xf32>
    %740 = vector.shape_cast %739 : vector<1xf32> to vector<1x1xf32>
    %741 = vector.broadcast %740 : vector<1x1xf32> to vector<1x128xf32>
    %742 = arith.subf %738, %741 : vector<1x128xf32>
    %743 = math.exp %742 : vector<1x128xf32>
    %cst_278 = arith.constant dense<0.000000e+00> : vector<1xf32>
    %744 = vector.multi_reduction <add>, %743, %cst_278 [1] : vector<1x128xf32> to vector<1xf32>
    %745 = vector.shape_cast %744 : vector<1xf32> to vector<1x1xf32>
    %746 = tpu.reciprocal %745 {approx = true} : vector<1x1xf32> -> vector<1x1xf32>
    %747 = vector.broadcast %740 : vector<1x1xf32> to vector<1x128xf32>
    %748 = arith.cmpf oge, %738, %747 : vector<1x128xf32>
    %c128_i32_279 = arith.constant 128 : i32
    %749 = vector.broadcast %c128_i32_279 : i32 to vector<1x128xi32>
    %750 = arith.select %748, %206, %749 : vector<1x128xi1>, vector<1x128xi32>
    %cst_280 = arith.constant dense<2147483647> : vector<1xi32>
    %751 = vector.multi_reduction <minsi>, %750, %cst_280 [1] : vector<1x128xi32> to vector<1xi32>
    %752 = vector.shape_cast %751 : vector<1xi32> to vector<1x1xi32>
    %c6_i32 = arith.constant 6 : i32
    %753 = vector.broadcast %c6_i32 : i32 to vector<1x128xi32>
    %754 = arith.cmpi eq, %206, %753 : vector<1x128xi32>
    %755 = vector.shape_cast %752 : vector<1x1xi32> to vector<1x1xi32>
    %756 = vector.broadcast %755 : vector<1x1xi32> to vector<1x128xi32>
    %757 = arith.select %754, %756, %677 : vector<1x128xi1>, vector<1x128xi32>
    %c6_i32_281 = arith.constant 6 : i32
    %758 = vector.broadcast %c6_i32_281 : i32 to vector<1x128xi32>
    %759 = arith.cmpi eq, %206, %758 : vector<1x128xi32>
    %760 = vector.shape_cast %746 : vector<1x1xf32> to vector<1x1xf32>
    %761 = vector.broadcast %760 : vector<1x1xf32> to vector<1x128xf32>
    %762 = arith.select %759, %761, %682 : vector<1x128xi1>, vector<1x128xf32>
    %763 = vector.broadcast %752 : vector<1x1xi32> to vector<1x128xi32>
    %764 = arith.cmpi eq, %206, %763 : vector<1x128xi32>
    %cst_282 = arith.constant 1.000000e+00 : f32
    %cst_283 = arith.constant 0.000000e+00 : f32
    %765 = vector.broadcast %cst_282 : f32 to vector<1x128xf32>
    %766 = vector.broadcast %cst_283 : f32 to vector<1x128xf32>
    %767 = arith.select %764, %765, %766 : vector<1x128xi1>, vector<1x128xf32>
    %768 = arith.truncf %767 : vector<1x128xf32> to vector<1x128xbf16>
    %c0_284 = arith.constant 0 : index
    %c0_285 = arith.constant 0 : index
    %769 = vector.load %arg3[%c0_284, %c0_285] : memref<128x32xbf16, #tpu.memory_space<vmem>>, vector<128x32xbf16>
    %cst_286 = arith.constant dense<0.000000e+00> : vector<1x32xf32>
    %770 = tpu.matmul %768, %769, %cst_286 {dimension_numbers = #tpu.dot_dimension_numbers<[1], [0], [0], [1], [0, 0, 1, 1], [], []>} : vector<1x128xbf16>, vector<128x32xbf16>, vector<1x32xf32> -> vector<1x32xf32>
    %771 = tpu.concatenate %770, %714 in 1 : vector<1x32xf32>, vector<1x32xf32> -> vector<1x64xf32>
    %772 = arith.truncf %771 : vector<1x64xf32> to vector<1x64xbf16>
    %c0_287 = arith.constant 0 : index
    %c0_288 = arith.constant 0 : index
    %773 = vector.load %arg4[%c0_287, %c0_288] : memref<64x128xbf16, #tpu.memory_space<vmem>>, vector<64x128xbf16>
    %cst_289 = arith.constant dense<0.000000e+00> : vector<1x128xf32>
    %774 = tpu.matmul %772, %773, %cst_289 {dimension_numbers = #tpu.dot_dimension_numbers<[1], [0], [0], [1], [0, 0, 1, 1], [], []>} : vector<1x64xbf16>, vector<64x128xbf16>, vector<1x128xf32> -> vector<1x128xf32>
    %c0_290 = arith.constant 0 : index
    %c0_291 = arith.constant 0 : index
    %775 = vector.load %arg5[%c0_290, %c0_291] : memref<1x128xf32, #tpu.memory_space<vmem>>, vector<1x128xf32>
    %776 = arith.addf %774, %775 : vector<1x128xf32>
    %777 = vector.extract_strided_slice %776 {offsets = [0, 0], sizes = [1, 64], strides = [1, 1]} : vector<1x128xf32> to vector<1x64xf32>
    %778 = arith.negf %777 : vector<1x64xf32>
    %779 = math.exp %778 : vector<1x64xf32>
    %cst_292 = arith.constant 1.000000e+00 : f32
    %780 = vector.broadcast %cst_292 : f32 to vector<1x64xf32>
    %781 = arith.addf %780, %779 : vector<1x64xf32>
    %782 = arith.divf %780, %781 : vector<1x64xf32>
    %783 = vector.extract_strided_slice %782 {offsets = [0, 0], sizes = [1, 32], strides = [1, 1]} : vector<1x64xf32> to vector<1x32xf32>
    %784 = vector.extract_strided_slice %782 {offsets = [0, 32], sizes = [1, 32], strides = [1, 1]} : vector<1x64xf32> to vector<1x32xf32>
    %785 = vector.extract_strided_slice %776 {offsets = [0, 64], sizes = [1, 32], strides = [1, 1]} : vector<1x128xf32> to vector<1x32xf32>
    %786 = vector.extract_strided_slice %776 {offsets = [0, 96], sizes = [1, 32], strides = [1, 1]} : vector<1x128xf32> to vector<1x32xf32>
    %787 = arith.mulf %783, %786 : vector<1x32xf32>
    %788 = arith.addf %785, %787 : vector<1x32xf32>
    %789 = math.tanh %788 : vector<1x32xf32>
    %cst_293 = arith.constant 1.000000e+00 : f32
    %790 = vector.broadcast %cst_293 : f32 to vector<1x32xf32>
    %791 = arith.subf %790, %784 : vector<1x32xf32>
    %792 = arith.mulf %791, %789 : vector<1x32xf32>
    %793 = arith.mulf %784, %714 : vector<1x32xf32>
    %794 = arith.addf %792, %793 : vector<1x32xf32>
    %795 = arith.truncf %794 : vector<1x32xf32> to vector<1x32xbf16>
    %cst_294 = arith.constant dense<0.000000e+00> : vector<1x8xf32>
    %796 = tpu.matmul %795, %202, %cst_294 {dimension_numbers = #tpu.dot_dimension_numbers<[1], [1], [0], [0], [0, 0, 1, 0], [], []>} : vector<1x32xbf16>, vector<8x32xbf16>, vector<1x8xf32> -> vector<1x8xf32>
    %cst_295 = arith.constant dense<0xFF800000> : vector<1xf32>
    %797 = vector.multi_reduction <maximumf>, %796, %cst_295 [1] : vector<1x8xf32> to vector<1xf32>
    %798 = vector.shape_cast %797 : vector<1xf32> to vector<1x1xf32>
    %799 = vector.broadcast %798 : vector<1x1xf32> to vector<1x8xf32>
    %800 = arith.subf %796, %799 : vector<1x8xf32>
    %801 = math.exp %800 : vector<1x8xf32>
    %cst_296 = arith.constant dense<0.000000e+00> : vector<1xf32>
    %802 = vector.multi_reduction <add>, %801, %cst_296 [1] : vector<1x8xf32> to vector<1xf32>
    %803 = vector.shape_cast %802 : vector<1xf32> to vector<1x1xf32>
    %804 = arith.truncf %801 : vector<1x8xf32> to vector<1x8xbf16>
    %cst_297 = arith.constant dense<0.000000e+00> : vector<1x32xf32>
    %805 = tpu.matmul %804, %205, %cst_297 {dimension_numbers = #tpu.dot_dimension_numbers<[1], [0], [0], [1], [0, 0, 1, 1], [], []>} : vector<1x8xbf16>, vector<8x32xbf16>, vector<1x32xf32> -> vector<1x32xf32>
    %c0_298 = arith.constant 0 : index
    %c0_299 = arith.constant 0 : index
    %806 = vector.load %arg6[%c0_298, %c0_299] : memref<32x32xbf16, #tpu.memory_space<vmem>>, vector<32x32xbf16>
    %cst_300 = arith.constant dense<0.000000e+00> : vector<1x32xf32>
    %807 = tpu.matmul %795, %806, %cst_300 {dimension_numbers = #tpu.dot_dimension_numbers<[1], [0], [0], [1], [0, 0, 1, 1], [], []>} : vector<1x32xbf16>, vector<32x32xbf16>, vector<1x32xf32> -> vector<1x32xf32>
    %808 = vector.broadcast %803 : vector<1x1xf32> to vector<1x32xf32>
    %809 = arith.divf %805, %808 : vector<1x32xf32>
    %810 = arith.addf %807, %809 : vector<1x32xf32>
    %c0_301 = arith.constant 0 : index
    %c0_302 = arith.constant 0 : index
    %811 = vector.load %arg8[%c0_301, %c0_302] : memref<1x32xf32, #tpu.memory_space<vmem>>, vector<1x32xf32>
    %812 = arith.addf %810, %811 : vector<1x32xf32>
    %813 = math.tanh %812 : vector<1x32xf32>
    %814 = arith.truncf %813 : vector<1x32xf32> to vector<1x32xbf16>
    %c0_303 = arith.constant 0 : index
    %c0_304 = arith.constant 0 : index
    %815 = vector.load %arg9[%c0_303, %c0_304] : memref<32x128xbf16, #tpu.memory_space<vmem>>, vector<32x128xbf16>
    %cst_305 = arith.constant dense<0.000000e+00> : vector<1x128xf32>
    %816 = tpu.matmul %814, %815, %cst_305 {dimension_numbers = #tpu.dot_dimension_numbers<[1], [0], [0], [1], [0, 0, 1, 1], [], []>} : vector<1x32xbf16>, vector<32x128xbf16>, vector<1x128xf32> -> vector<1x128xf32>
    %c0_306 = arith.constant 0 : index
    %c0_307 = arith.constant 0 : index
    %817 = vector.load %arg10[%c0_306, %c0_307] : memref<1x128xf32, #tpu.memory_space<vmem>>, vector<1x128xf32>
    %818 = arith.addf %816, %817 : vector<1x128xf32>
    %cst_308 = arith.constant dense<0xFF800000> : vector<1xf32>
    %819 = vector.multi_reduction <maximumf>, %818, %cst_308 [1] : vector<1x128xf32> to vector<1xf32>
    %820 = vector.shape_cast %819 : vector<1xf32> to vector<1x1xf32>
    %821 = vector.broadcast %820 : vector<1x1xf32> to vector<1x128xf32>
    %822 = arith.subf %818, %821 : vector<1x128xf32>
    %823 = math.exp %822 : vector<1x128xf32>
    %cst_309 = arith.constant dense<0.000000e+00> : vector<1xf32>
    %824 = vector.multi_reduction <add>, %823, %cst_309 [1] : vector<1x128xf32> to vector<1xf32>
    %825 = vector.shape_cast %824 : vector<1xf32> to vector<1x1xf32>
    %826 = tpu.reciprocal %825 {approx = true} : vector<1x1xf32> -> vector<1x1xf32>
    %827 = vector.broadcast %820 : vector<1x1xf32> to vector<1x128xf32>
    %828 = arith.cmpf oge, %818, %827 : vector<1x128xf32>
    %c128_i32_310 = arith.constant 128 : i32
    %829 = vector.broadcast %c128_i32_310 : i32 to vector<1x128xi32>
    %830 = arith.select %828, %206, %829 : vector<1x128xi1>, vector<1x128xi32>
    %cst_311 = arith.constant dense<2147483647> : vector<1xi32>
    %831 = vector.multi_reduction <minsi>, %830, %cst_311 [1] : vector<1x128xi32> to vector<1xi32>
    %832 = vector.shape_cast %831 : vector<1xi32> to vector<1x1xi32>
    %c7_i32 = arith.constant 7 : i32
    %833 = vector.broadcast %c7_i32 : i32 to vector<1x128xi32>
    %834 = arith.cmpi eq, %206, %833 : vector<1x128xi32>
    %835 = vector.shape_cast %832 : vector<1x1xi32> to vector<1x1xi32>
    %836 = vector.broadcast %835 : vector<1x1xi32> to vector<1x128xi32>
    %837 = arith.select %834, %836, %757 : vector<1x128xi1>, vector<1x128xi32>
    %c7_i32_312 = arith.constant 7 : i32
    %838 = vector.broadcast %c7_i32_312 : i32 to vector<1x128xi32>
    %839 = arith.cmpi eq, %206, %838 : vector<1x128xi32>
    %840 = vector.shape_cast %826 : vector<1x1xf32> to vector<1x1xf32>
    %841 = vector.broadcast %840 : vector<1x1xf32> to vector<1x128xf32>
    %842 = arith.select %839, %841, %762 : vector<1x128xi1>, vector<1x128xf32>
    %c0_313 = arith.constant 0 : index
    %c0_314 = arith.constant 0 : index
    %843 = vector.load %arg11[%c0_313, %c0_314] : memref<1x128xi32, #tpu.memory_space<vmem>>, vector<1x128xi32>
    tpu.vector_store %arg11[%c0_313, %c0_314], %837 {strides = array<i32>} : memref<1x128xi32, #tpu.memory_space<vmem>>, vector<1x128xi32>,
    %c0_315 = arith.constant 0 : index
    %c0_316 = arith.constant 0 : index
    %844 = vector.load %arg12[%c0_315, %c0_316] : memref<1x128xf32, #tpu.memory_space<vmem>>, vector<1x128xf32>
    tpu.vector_store %arg12[%c0_315, %c0_316], %842 {strides = array<i32>} : memref<1x128xf32, #tpu.memory_space<vmem>>, vector<1x128xf32>,
    return
  }
}

</mosaic_0001>

<llo_original>
// kernel: greedy_search_decode.1
$region0: #{greedy_search_decode.1}
  #allocation0 [shape = 'u32[]', space=smem, size = 0x4, offset = 0x4, fixed_abs, tag = 'smem constant byte address 0x4 - core index']
  #allocation1 [shape = 'u32[144,128]{1,0:T(1,128)}', space=vmem, size = 0x12000, scoped, tag = 'internal scratch']
  %s0 = inlined_call_operand.vmem [shape: f32[8,32], index: 0, kind: input, shape index: {}]
  %s1 = inlined_call_operand.vmem [shape: bf16[64,128], index: 1, kind: input, shape index: {}]
  %s2 = inlined_call_operand.vmem [shape: f32[1,128], index: 2, kind: input, shape index: {}]
  %s3 = inlined_call_operand.vmem [shape: bf16[128,32], index: 3, kind: input, shape index: {}]
  %s4 = inlined_call_operand.vmem [shape: bf16[64,128], index: 4, kind: input, shape index: {}]
  %s5 = inlined_call_operand.vmem [shape: f32[1,128], index: 5, kind: input, shape index: {}]
  %s6 = inlined_call_operand.vmem [shape: bf16[32,32], index: 6, kind: input, shape index: {}]
  %s7 = inlined_call_operand.vmem [shape: bf16[32,32], index: 7, kind: input, shape index: {}]
  %s8 = inlined_call_operand.vmem [shape: f32[1,32], index: 8, kind: input, shape index: {}]
  %s9 = inlined_call_operand.vmem [shape: bf16[32,128], index: 9, kind: input, shape index: {}]
  %s10 = inlined_call_operand.vmem [shape: f32[1,128], index: 10, kind: input, shape index: {}]
  %s11 = inlined_call_operand.vmem [shape: s32[1,128], index: 11, kind: output, shape index: {0}]
  %s12 = inlined_call_operand.vmem [shape: f32[1,128], index: 12, kind: output, shape index: {1}]
  %13 = xla_tuple %s11, %s12
  %s14 = sld [smem:[#allocation0]]
  $region62: #{greedy_search_decode.1} parent=0
    _
  %s16 = ssub.s32 1, %s14
  %s17 = scalar_select 0, %s16, %s14
  // Predicated region
  $region2: #{greedy_search_decode.1} parent=0 // pred_check
    _
  $region3: #{greedy_search_decode.1} parent=0 // pred_check_branch
    %19 = sbr.rel (0) target = $region5
  $region4: #{greedy_search_decode.1} parent=0 // pred_region
    _
  $region5: #{greedy_search_decode.1} parent=0 // pred_fallthru
    _
  // Predicated region
  $region6: #{greedy_search_decode.1} parent=0 // pred_check
    _
  $region7: #{greedy_search_decode.1} parent=0 // pred_check_branch
    %21 = sbr.rel (0) target = $region9
  $region8: #{greedy_search_decode.1} parent=0 // pred_region
    _
  $region9: #{greedy_search_decode.1} parent=0 // pred_fallthru
    _
  // Predicated region
  $region10: #{greedy_search_decode.1} parent=0 // pred_check
    _
  $region11: #{greedy_search_decode.1} parent=0 // pred_check_branch
    %23 = sbr.rel (0) target = $region13
  $region12: #{greedy_search_decode.1} parent=0 // pred_region
    _
  $region13: #{greedy_search_decode.1} parent=0 // pred_fallthru
    _
  // Predicated region
  $region14: #{greedy_search_decode.1} parent=0 // pred_check
    _
  $region15: #{greedy_search_decode.1} parent=0 // pred_check_branch
    %25 = sbr.rel (0) target = $region17
  $region16: #{greedy_search_decode.1} parent=0 // pred_region
    _
  $region17: #{greedy_search_decode.1} parent=0 // pred_fallthru
    _
  // Predicated region
  $region18: #{greedy_search_decode.1} parent=0 // pred_check
    _
  $region19: #{greedy_search_decode.1} parent=0 // pred_check_branch
    %27 = sbr.rel (0) target = $region21
  $region20: #{greedy_search_decode.1} parent=0 // pred_region
    _
  $region21: #{greedy_search_decode.1} parent=0 // pred_fallthru
    _
  // Predicated region
  $region22: #{greedy_search_decode.1} parent=0 // pred_check
    _
  $region23: #{greedy_search_decode.1} parent=0 // pred_check_branch
    %29 = sbr.rel (0) target = $region25
  $region24: #{greedy_search_decode.1} parent=0 // pred_region
    _
  $region25: #{greedy_search_decode.1} parent=0 // pred_fallthru
    _
  // Predicated region
  $region26: #{greedy_search_decode.1} parent=0 // pred_check
    _
  $region27: #{greedy_search_decode.1} parent=0 // pred_check_branch
    %31 = sbr.rel (0) target = $region29
  $region28: #{greedy_search_decode.1} parent=0 // pred_region
    _
  $region29: #{greedy_search_decode.1} parent=0 // pred_fallthru
    _
  // Predicated region
  $region30: #{greedy_search_decode.1} parent=0 // pred_check
    _
  $region31: #{greedy_search_decode.1} parent=0 // pred_check_branch
    %33 = sbr.rel (0) target = $region33
  $region32: #{greedy_search_decode.1} parent=0 // pred_region
    _
  $region33: #{greedy_search_decode.1} parent=0 // pred_fallthru
    _
  // Predicated region
  $region34: #{greedy_search_decode.1} parent=0 // pred_check
    _
  $region35: #{greedy_search_decode.1} parent=0 // pred_check_branch
    %35 = sbr.rel (0) target = $region37
  $region36: #{greedy_search_decode.1} parent=0 // pred_region
    _
  $region37: #{greedy_search_decode.1} parent=0 // pred_fallthru
    _
  // Predicated region
  $region38: #{greedy_search_decode.1} parent=0 // pred_check
    _
  $region39: #{greedy_search_decode.1} parent=0 // pred_check_branch
    %37 = sbr.rel (0) target = $region41
  $region40: #{greedy_search_decode.1} parent=0 // pred_region
    _
  $region41: #{greedy_search_decode.1} parent=0 // pred_fallthru
    _
  // Predicated region
  $region42: #{greedy_search_decode.1} parent=0 // pred_check
    _
  $region43: #{greedy_search_decode.1} parent=0 // pred_check_branch
    %39 = sbr.rel (0) target = $region45
  $region44: #{greedy_search_decode.1} parent=0 // pred_region
    _
  $region45: #{greedy_search_decode.1} parent=0 // pred_fallthru
    _
  %v41 = vld [vmem:[%s0] sm:$0x1]
  %vm42 = vcmask 261120
  %v43 = vsel %vm42, %v41, 0.0
  %v44 = vpack.c.bf16 %v43, %v43
  %v45 = vld [vmem:[%s1] sm:$0xf]
  %v46 = vld [vmem:[%s1 + $0x4] sm:$0xf]
  %v47 = vld [vmem:[%s1 + $0x8] sm:$0xf]
  %v48 = vld [vmem:[%s1 + $0xc] sm:$0xf]
  %v49 = vld [vmem:[%s1 + $0x10] sm:$0xf]
  %v50 = vld [vmem:[%s1 + $0x14] sm:$0xf]
  %v51 = vld [vmem:[%s1 + $0x18] sm:$0xf]
  %v52 = vld [vmem:[%s1 + $0x1c] sm:$0xf]
  %v53 = vld [vmem:[%s2] sm:$0x1]
  %v62 = vunpack.c.l.b16 %v45
  %v63 = vunpack.c.l.b16 %v46
  %v64 = vunpack.c.l.b16 %v47
  %v65 = vunpack.c.l.b16 %v48
  %v66 = vunpack.c.l.b16 %v49
  %v67 = vunpack.c.l.b16 %v50
  %v68 = vunpack.c.l.b16 %v51
  %v69 = vunpack.c.l.b16 %v52
  %v70 = vpack.c.b16 %v63, %v62
  %v71 = vpack.c.b16 %v65, %v64
  %v72 = vpack.c.b16 %v67, %v66
  %v73 = vpack.c.b16 %v69, %v68
  %vm78 = vcmask 523264
  %v80 = vsel %vm78, %v44, 0
  %82 = vmatprep.subr.bf16.mxu0 0
  %83 = vmatpush1.bf16.msra.mxu0 %v70
  %84 = vmatprep.subr.bf16.mxu0 0
  %85 = vmatpush1.bf16.msra.mxu0 %v71
  %86 = vmatprep.subr.bf16.mxu0 0
  %87 = vmatpush1.bf16.msra.mxu0 %v72
  %88 = vmatprep.subr.bf16.mxu0 0
  %89 = vmatpush1.bf16.msra.mxu0 %v73
  %90 = vmatprep.subr.bf16.mxu0 0
  %91 = vmatpush1.bf16.msra.mxu0 0
  %92 = vmatprep.subr.bf16.mxu0 0
  %93 = vmatpush1.bf16.msra.mxu0 0
  %94 = vmatprep.subr.bf16.mxu0 0
  %95 = vmatpush1.bf16.msra.mxu0 0
  %96 = vmatprep.subr.bf16.mxu0 0
  %97 = vmatpush1.bf16.msra.mxu0 0
  %98 = vmatprep.subr.bf16.mxu0 0
  %99 = vmatpush1.bf16.msra.mxu0 0
  %100 = vmatprep.subr.bf16.mxu0 0
  %101 = vmatpush1.bf16.msra.mxu0 0
  %102 = vmatprep.subr.bf16.mxu0 0
  %103 = vmatpush1.bf16.msra.mxu0 0
  %104 = vmatprep.subr.bf16.mxu0 0
  %105 = vmatpush1.bf16.msra.mxu0 0
  %106 = vmatprep.subr.bf16.mxu0 0
  %107 = vmatpush1.bf16.msra.mxu0 0
  %108 = vmatprep.subr.bf16.mxu0 0
  %109 = vmatpush1.bf16.msra.mxu0 0
  %110 = vmatprep.subr.bf16.mxu0 0
  %111 = vmatpush1.bf16.msra.mxu0 0
  %112 = vmatprep.subr.bf16.mxu0 0
  %113 = vmatpush1.bf16.msra.mxu0 0
  %114 = vmatprep.mubr.bf16.mxu0 0
  %115 = vmatmul.mubr.bf16.gmra.mrb[0].mxu0 %v80
  %v116 = vpop.f32.mrb[0].mxu0
  %v117 = vadd.f32 %v53, %v116
  %v118 = vpop.f32.mrb[0].mxu0
  %v119 = vpop.f32.mrb[0].mxu0
  %v120 = vpop.f32.mrb[0].mxu0
  %121 = vdwg.mxu0
  %v122 = vxor.u32 %v117, 2147483648
  %v123 = vmul.f32 %v122, 1.442695
  %v124 = vpow.pop %v123
  %v125 = vadd.f32 %v124, 1.0
  %v126 = vrcp.pop %v125
  %v127 = vmul.f32 1.0, %v126
  %129 = vrot.lane.b32.xlu0 %v117, 32
  %v130 = vpop.permute.xlu0 %129
  %v132 = vmul.f32 %v127, %v130
  %134 = vrot.lane.b32.xlu0 %v132, 64
  %v135 = vpop.permute.xlu0 %134
  %v137 = vadd.f32 %v117, %v135
  %v138 = vtanh.pop %v137
  %v139 = vsub.f32 1.0, %v127
  %141 = vrot.lane.b32.xlu0 %v138, 96
  %v142 = vpop.permute.xlu0 %141
  %v144 = vmul.f32 %v139, %v142
  %v145 = vmul.f32 %v127, 0.0
  %v146 = vadd.f32 %v144, %v145
  %v147 = vld [vmem:[%s0 + $0x1] sm:$0x1]
  %v148 = vsel %vm42, %v147, %v146
  %v149 = vpack.c.bf16 %v148, %v148
  %v151 = vsel %vm78, %v149, 0
  %153 = vmatprep.subr.bf16.mxu0 0
  %154 = vmatpush1.bf16.msra.mxu0 %v70
  %155 = vmatprep.subr.bf16.mxu0 0
  %156 = vmatpush1.bf16.msra.mxu0 %v71
  %157 = vmatprep.subr.bf16.mxu0 0
  %158 = vmatpush1.bf16.msra.mxu0 %v72
  %159 = vmatprep.subr.bf16.mxu0 0
  %160 = vmatpush1.bf16.msra.mxu0 %v73
  %161 = vmatprep.subr.bf16.mxu0 0
  %162 = vmatpush1.bf16.msra.mxu0 0
  %163 = vmatprep.subr.bf16.mxu0 0
  %164 = vmatpush1.bf16.msra.mxu0 0
  %165 = vmatprep.subr.bf16.mxu0 0
  %166 = vmatpush1.bf16.msra.mxu0 0
  %167 = vmatprep.subr.bf16.mxu0 0
  %168 = vmatpush1.bf16.msra.mxu0 0
  %169 = vmatprep.subr.bf16.mxu0 0
  %170 = vmatpush1.bf16.msra.mxu0 0
  %171 = vmatprep.subr.bf16.mxu0 0
  %172 = vmatpush1.bf16.msra.mxu0 0
  %173 = vmatprep.subr.bf16.mxu0 0
  %174 = vmatpush1.bf16.msra.mxu0 0
  %175 = vmatprep.subr.bf16.mxu0 0
  %176 = vmatpush1.bf16.msra.mxu0 0
  %177 = vmatprep.subr.bf16.mxu0 0
  %178 = vmatpush1.bf16.msra.mxu0 0
  %179 = vmatprep.subr.bf16.mxu0 0
  %180 = vmatpush1.bf16.msra.mxu0 0
  %181 = vmatprep.subr.bf16.mxu0 0
  %182 = vmatpush1.bf16.msra.mxu0 0
  %183 = vmatprep.subr.bf16.mxu0 0
  %184 = vmatpush1.bf16.msra.mxu0 0
  %185 = vmatprep.mubr.bf16.mxu0 0
  %186 = vmatmul.mubr.bf16.gmra.mrb[0].mxu0 %v151
  %v187 = vpop.f32.mrb[0].mxu0
  %v188 = vadd.f32 %v53, %v187
  %v189 = vpop.f32.mrb[0].mxu0
  %v190 = vpop.f32.mrb[0].mxu0
  %v191 = vpop.f32.mrb[0].mxu0
  %192 = vdwg.mxu0
  %v193 = vxor.u32 %v188, 2147483648
  %v194 = vmul.f32 %v193, 1.442695
  %v195 = vpow.pop %v194
  %v196 = vadd.f32 %v195, 1.0
  %v197 = vrcp.pop %v196
  %v198 = vmul.f32 1.0, %v197
  %200 = vrot.lane.b32.xlu0 %v188, 32
  %v201 = vpop.permute.xlu0 %200
  %v203 = vmul.f32 %v198, %v201
  %205 = vrot.lane.b32.xlu0 %v203, 64
  %v206 = vpop.permute.xlu0 %205
  %v208 = vadd.f32 %v188, %v206
  %v209 = vtanh.pop %v208
  %v210 = vsub.f32 1.0, %v198
  %212 = vrot.lane.b32.xlu0 %v209, 96
  %v213 = vpop.permute.xlu0 %212
  %v215 = vmul.f32 %v210, %v213
  %v216 = vmul.f32 %v198, %v146
  %v217 = vadd.f32 %v215, %v216
  %v218 = vld [vmem:[%s0 + $0x2] sm:$0x1]
  %v219 = vsel %vm42, %v218, %v217
  %v220 = vpack.c.bf16 %v219, %v219
  %v222 = vsel %vm78, %v220, 0
  %224 = vmatprep.subr.bf16.mxu0 0
  %225 = vmatpush1.bf16.msra.mxu0 %v70
  %226 = vmatprep.subr.bf16.mxu0 0
  %227 = vmatpush1.bf16.msra.mxu0 %v71
  %228 = vmatprep.subr.bf16.mxu0 0
  %229 = vmatpush1.bf16.msra.mxu0 %v72
  %230 = vmatprep.subr.bf16.mxu0 0
  %231 = vmatpush1.bf16.msra.mxu0 %v73
  %232 = vmatprep.subr.bf16.mxu0 0
  %233 = vmatpush1.bf16.msra.mxu0 0
  %234 = vmatprep.subr.bf16.mxu0 0
  %235 = vmatpush1.bf16.msra.mxu0 0
  %236 = vmatprep.subr.bf16.mxu0 0
  %237 = vmatpush1.bf16.msra.mxu0 0
  %238 = vmatprep.subr.bf16.mxu0 0
  %239 = vmatpush1.bf16.msra.mxu0 0
  %240 = vmatprep.subr.bf16.mxu0 0
  %241 = vmatpush1.bf16.msra.mxu0 0
  %242 = vmatprep.subr.bf16.mxu0 0
  %243 = vmatpush1.bf16.msra.mxu0 0
  %244 = vmatprep.subr.bf16.mxu0 0
  %245 = vmatpush1.bf16.msra.mxu0 0
  %246 = vmatprep.subr.bf16.mxu0 0
  %247 = vmatpush1.bf16.msra.mxu0 0
  %248 = vmatprep.subr.bf16.mxu0 0
  %249 = vmatpush1.bf16.msra.mxu0 0
  %250 = vmatprep.subr.bf16.mxu0 0
  %251 = vmatpush1.bf16.msra.mxu0 0
  %252 = vmatprep.subr.bf16.mxu0 0
  %253 = vmatpush1.bf16.msra.mxu0 0
  %254 = vmatprep.subr.bf16.mxu0 0
  %255 = vmatpush1.bf16.msra.mxu0 0
  %256 = vmatprep.mubr.bf16.mxu0 0
  %257 = vmatmul.mubr.bf16.gmra.mrb[0].mxu0 %v222
  %v258 = vpop.f32.mrb[0].mxu0
  %v259 = vadd.f32 %v53, %v258
  %v260 = vpop.f32.mrb[0].mxu0
  %v261 = vpop.f32.mrb[0].mxu0
  %v262 = vpop.f32.mrb[0].mxu0
  %263 = vdwg.mxu0
  %v264 = vxor.u32 %v259, 2147483648
  %v265 = vmul.f32 %v264, 1.442695
  %v266 = vpow.pop %v265
  %v267 = vadd.f32 %v266, 1.0
  %v268 = vrcp.pop %v267
  %v269 = vmul.f32 1.0, %v268
  %271 = vrot.lane.b32.xlu0 %v259, 32
  %v272 = vpop.permute.xlu0 %271
  %v274 = vmul.f32 %v269, %v272
  %276 = vrot.lane.b32.xlu0 %v274, 64
  %v277 = vpop.permute.xlu0 %276
  %v279 = vadd.f32 %v259, %v277
  %v280 = vtanh.pop %v279
  %v281 = vsub.f32 1.0, %v269
  %283 = vrot.lane.b32.xlu0 %v280, 96
  %v284 = vpop.permute.xlu0 %283
  %v286 = vmul.f32 %v281, %v284
  %v287 = vmul.f32 %v269, %v217
  %v288 = vadd.f32 %v286, %v287
  %v289 = vld [vmem:[%s0 + $0x3] sm:$0x1]
  %v290 = vsel %vm42, %v289, %v288
  %v291 = vpack.c.bf16 %v290, %v290
  %v293 = vsel %vm78, %v291, 0
  %295 = vmatprep.subr.bf16.mxu0 0
  %296 = vmatpush1.bf16.msra.mxu0 %v70
  %297 = vmatprep.subr.bf16.mxu0 0
  %298 = vmatpush1.bf16.msra.mxu0 %v71
  %299 = vmatprep.subr.bf16.mxu0 0
  %300 = vmatpush1.bf16.msra.mxu0 %v72
  %301 = vmatprep.subr.bf16.mxu0 0
  %302 = vmatpush1.bf16.msra.mxu0 %v73
  %303 = vmatprep.subr.bf16.mxu0 0
  %304 = vmatpush1.bf16.msra.mxu0 0
  %305 = vmatprep.subr.bf16.mxu0 0
  %306 = vmatpush1.bf16.msra.mxu0 0
  %307 = vmatprep.subr.bf16.mxu0 0
  %308 = vmatpush1.bf16.msra.mxu0 0
  %309 = vmatprep.subr.bf16.mxu0 0
  %310 = vmatpush1.bf16.msra.mxu0 0
  %311 = vmatprep.subr.bf16.mxu0 0
  %312 = vmatpush1.bf16.msra.mxu0 0
  %313 = vmatprep.subr.bf16.mxu0 0
  %314 = vmatpush1.bf16.msra.mxu0 0
  %315 = vmatprep.subr.bf16.mxu0 0
  %316 = vmatpush1.bf16.msra.mxu0 0
  %317 = vmatprep.subr.bf16.mxu0 0
  %318 = vmatpush1.bf16.msra.mxu0 0
  %319 = vmatprep.subr.bf16.mxu0 0
  %320 = vmatpush1.bf16.msra.mxu0 0
  %321 = vmatprep.subr.bf16.mxu0 0
  %322 = vmatpush1.bf16.msra.mxu0 0
  %323 = vmatprep.subr.bf16.mxu0 0
  %324 = vmatpush1.bf16.msra.mxu0 0
  %325 = vmatprep.subr.bf16.mxu0 0
  %326 = vmatpush1.bf16.msra.mxu0 0
  %327 = vmatprep.mubr.bf16.mxu0 0
  %328 = vmatmul.mubr.bf16.gmra.mrb[0].mxu0 %v293
  %v329 = vpop.f32.mrb[0].mxu0
  %v330 = vadd.f32 %v53, %v329
  %v331 = vpop.f32.mrb[0].mxu0
  %v332 = vpop.f32.mrb[0].mxu0
  %v333 = vpop.f32.mrb[0].mxu0
  %334 = vdwg.mxu0
  %v335 = vxor.u32 %v330, 2147483648
  %v336 = vmul.f32 %v335, 1.442695
  %v337 = vpow.pop %v336
  %v338 = vadd.f32 %v337, 1.0
  %v339 = vrcp.pop %v338
  %v340 = vmul.f32 1.0, %v339
  %342 = vrot.lane.b32.xlu0 %v330, 32
  %v343 = vpop.permute.xlu0 %342
  %v345 = vmul.f32 %v340, %v343
  %347 = vrot.lane.b32.xlu0 %v345, 64
  %v348 = vpop.permute.xlu0 %347
  %v350 = vadd.f32 %v330, %v348
  %v351 = vtanh.pop %v350
  %v352 = vsub.f32 1.0, %v340
  %354 = vrot.lane.b32.xlu0 %v351, 96
  %v355 = vpop.permute.xlu0 %354
  %v357 = vmul.f32 %v352, %v355
  %v358 = vmul.f32 %v340, %v288
  %v359 = vadd.f32 %v357, %v358
  %v360 = vld [vmem:[%s0 + $0x4] sm:$0x1]
  %v361 = vsel %vm42, %v360, %v359
  %v362 = vpack.c.bf16 %v361, %v361
  %v364 = vsel %vm78, %v362, 0
  %366 = vmatprep.subr.bf16.mxu0 0
  %367 = vmatpush1.bf16.msra.mxu0 %v70
  %368 = vmatprep.subr.bf16.mxu0 0
  %369 = vmatpush1.bf16.msra.mxu0 %v71
  %370 = vmatprep.subr.bf16.mxu0 0
  %371 = vmatpush1.bf16.msra.mxu0 %v72
  %372 = vmatprep.subr.bf16.mxu0 0
  %373 = vmatpush1.bf16.msra.mxu0 %v73
  %374 = vmatprep.subr.bf16.mxu0 0
  %375 = vmatpush1.bf16.msra.mxu0 0
  %376 = vmatprep.subr.bf16.mxu0 0
  %377 = vmatpush1.bf16.msra.mxu0 0
  %378 = vmatprep.subr.bf16.mxu0 0
  %379 = vmatpush1.bf16.msra.mxu0 0
  %380 = vmatprep.subr.bf16.mxu0 0
  %381 = vmatpush1.bf16.msra.mxu0 0
  %382 = vmatprep.subr.bf16.mxu0 0
  %383 = vmatpush1.bf16.msra.mxu0 0
  %384 = vmatprep.subr.bf16.mxu0 0
  %385 = vmatpush1.bf16.msra.mxu0 0
  %386 = vmatprep.subr.bf16.mxu0 0
  %387 = vmatpush1.bf16.msra.mxu0 0
  %388 = vmatprep.subr.bf16.mxu0 0
  %389 = vmatpush1.bf16.msra.mxu0 0
  %390 = vmatprep.subr.bf16.mxu0 0
  %391 = vmatpush1.bf16.msra.mxu0 0
  %392 = vmatprep.subr.bf16.mxu0 0
  %393 = vmatpush1.bf16.msra.mxu0 0
  %394 = vmatprep.subr.bf16.mxu0 0
  %395 = vmatpush1.bf16.msra.mxu0 0
  %396 = vmatprep.subr.bf16.mxu0 0
  %397 = vmatpush1.bf16.msra.mxu0 0
  %398 = vmatprep.mubr.bf16.mxu0 0
  %399 = vmatmul.mubr.bf16.gmra.mrb[0].mxu0 %v364
  %v400 = vpop.f32.mrb[0].mxu0
  %v401 = vadd.f32 %v53, %v400
  %v402 = vpop.f32.mrb[0].mxu0
  %v403 = vpop.f32.mrb[0].mxu0
  %v404 = vpop.f32.mrb[0].mxu0
  %405 = vdwg.mxu0
  %v406 = vxor.u32 %v401, 2147483648
  %v407 = vmul.f32 %v406, 1.442695
  %v408 = vpow.pop %v407
  %v409 = vadd.f32 %v408, 1.0
  %v410 = vrcp.pop %v409
  %v411 = vmul.f32 1.0, %v410
  %413 = vrot.lane.b32.xlu0 %v401, 32
  %v414 = vpop.permute.xlu0 %413
  %v416 = vmul.f32 %v411, %v414
  %418 = vrot.lane.b32.xlu0 %v416, 64
  %v419 = vpop.permute.xlu0 %418
  %v421 = vadd.f32 %v401, %v419
  %v422 = vtanh.pop %v421
  %v423 = vsub.f32 1.0, %v411
  %425 = vrot.lane.b32.xlu0 %v422, 96
  %v426 = vpop.permute.xlu0 %425
  %v428 = vmul.f32 %v423, %v426
  %v429 = vmul.f32 %v411, %v359
  %v430 = vadd.f32 %v428, %v429
  %v431 = vld [vmem:[%s0 + $0x5] sm:$0x1]
  %v432 = vsel %vm42, %v431, %v430
  %v433 = vpack.c.bf16 %v432, %v432
  %v435 = vsel %vm78, %v433, 0
  %437 = vmatprep.subr.bf16.mxu0 0
  %438 = vmatpush1.bf16.msra.mxu0 %v70
  %439 = vmatprep.subr.bf16.mxu0 0
  %440 = vmatpush1.bf16.msra.mxu0 %v71
  %441 = vmatprep.subr.bf16.mxu0 0
  %442 = vmatpush1.bf16.msra.mxu0 %v72
  %443 = vmatprep.subr.bf16.mxu0 0
  %444 = vmatpush1.bf16.msra.mxu0 %v73
  %445 = vmatprep.subr.bf16.mxu0 0
  %446 = vmatpush1.bf16.msra.mxu0 0
  %447 = vmatprep.subr.bf16.mxu0 0
  %448 = vmatpush1.bf16.msra.mxu0 0
  %449 = vmatprep.subr.bf16.mxu0 0
  %450 = vmatpush1.bf16.msra.mxu0 0
  %451 = vmatprep.subr.bf16.mxu0 0
  %452 = vmatpush1.bf16.msra.mxu0 0
  %453 = vmatprep.subr.bf16.mxu0 0
  %454 = vmatpush1.bf16.msra.mxu0 0
  %455 = vmatprep.subr.bf16.mxu0 0
  %456 = vmatpush1.bf16.msra.mxu0 0
  %457 = vmatprep.subr.bf16.mxu0 0
  %458 = vmatpush1.bf16.msra.mxu0 0
  %459 = vmatprep.subr.bf16.mxu0 0
  %460 = vmatpush1.bf16.msra.mxu0 0
  %461 = vmatprep.subr.bf16.mxu0 0
  %462 = vmatpush1.bf16.msra.mxu0 0
  %463 = vmatprep.subr.bf16.mxu0 0
  %464 = vmatpush1.bf16.msra.mxu0 0
  %465 = vmatprep.subr.bf16.mxu0 0
  %466 = vmatpush1.bf16.msra.mxu0 0
  %467 = vmatprep.subr.bf16.mxu0 0
  %468 = vmatpush1.bf16.msra.mxu0 0
  %469 = vmatprep.mubr.bf16.mxu0 0
  %470 = vmatmul.mubr.bf16.gmra.mrb[0].mxu0 %v435
  %v471 = vpop.f32.mrb[0].mxu0
  %v472 = vadd.f32 %v53, %v471
  %v473 = vpop.f32.mrb[0].mxu0
  %v474 = vpop.f32.mrb[0].mxu0
  %v475 = vpop.f32.mrb[0].mxu0
  %476 = vdwg.mxu0
  %v477 = vxor.u32 %v472, 2147483648
  %v478 = vmul.f32 %v477, 1.442695
  %v479 = vpow.pop %v478
  %v480 = vadd.f32 %v479, 1.0
  %v481 = vrcp.pop %v480
  %v482 = vmul.f32 1.0, %v481
  %484 = vrot.lane.b32.xlu0 %v472, 32
  %v485 = vpop.permute.xlu0 %484
  %v487 = vmul.f32 %v482, %v485
  %489 = vrot.lane.b32.xlu0 %v487, 64
  %v490 = vpop.permute.xlu0 %489
  %v492 = vadd.f32 %v472, %v490
  %v493 = vtanh.pop %v492
  %v494 = vsub.f32 1.0, %v482
  %496 = vrot.lane.b32.xlu0 %v493, 96
  %v497 = vpop.permute.xlu0 %496
  %v499 = vmul.f32 %v494, %v497
  %v500 = vmul.f32 %v482, %v430
  %v501 = vadd.f32 %v499, %v500
  %v502 = vld [vmem:[%s0 + $0x6] sm:$0x1]
  %v503 = vsel %vm42, %v502, %v501
  %v504 = vpack.c.bf16 %v503, %v503
  %v506 = vsel %vm78, %v504, 0
  %508 = vmatprep.subr.bf16.mxu0 0
  %509 = vmatpush1.bf16.msra.mxu0 %v70
  %510 = vmatprep.subr.bf16.mxu0 0
  %511 = vmatpush1.bf16.msra.mxu0 %v71
  %512 = vmatprep.subr.bf16.mxu0 0
  %513 = vmatpush1.bf16.msra.mxu0 %v72
  %514 = vmatprep.subr.bf16.mxu0 0
  %515 = vmatpush1.bf16.msra.mxu0 %v73
  %516 = vmatprep.subr.bf16.mxu0 0
  %517 = vmatpush1.bf16.msra.mxu0 0
  %518 = vmatprep.subr.bf16.mxu0 0
  %519 = vmatpush1.bf16.msra.mxu0 0
  %520 = vmatprep.subr.bf16.mxu0 0
  %521 = vmatpush1.bf16.msra.mxu0 0
  %522 = vmatprep.subr.bf16.mxu0 0
  %523 = vmatpush1.bf16.msra.mxu0 0
  %524 = vmatprep.subr.bf16.mxu0 0
  %525 = vmatpush1.bf16.msra.mxu0 0
  %526 = vmatprep.subr.bf16.mxu0 0
  %527 = vmatpush1.bf16.msra.mxu0 0
  %528 = vmatprep.subr.bf16.mxu0 0
  %529 = vmatpush1.bf16.msra.mxu0 0
  %530 = vmatprep.subr.bf16.mxu0 0
  %531 = vmatpush1.bf16.msra.mxu0 0
  %532 = vmatprep.subr.bf16.mxu0 0
  %533 = vmatpush1.bf16.msra.mxu0 0
  %534 = vmatprep.subr.bf16.mxu0 0
  %535 = vmatpush1.bf16.msra.mxu0 0
  %536 = vmatprep.subr.bf16.mxu0 0
  %537 = vmatpush1.bf16.msra.mxu0 0
  %538 = vmatprep.subr.bf16.mxu0 0
  %539 = vmatpush1.bf16.msra.mxu0 0
  %540 = vmatprep.mubr.bf16.mxu0 0
  %541 = vmatmul.mubr.bf16.gmra.mrb[0].mxu0 %v506
  %v542 = vpop.f32.mrb[0].mxu0
  %v543 = vadd.f32 %v53, %v542
  %v544 = vpop.f32.mrb[0].mxu0
  %v545 = vpop.f32.mrb[0].mxu0
  %v546 = vpop.f32.mrb[0].mxu0
  %547 = vdwg.mxu0
  %v548 = vxor.u32 %v543, 2147483648
  %v549 = vmul.f32 %v548, 1.442695
  %v550 = vpow.pop %v549
  %v551 = vadd.f32 %v550, 1.0
  %v552 = vrcp.pop %v551
  %v553 = vmul.f32 1.0, %v552
  %555 = vrot.lane.b32.xlu0 %v543, 32
  %v556 = vpop.permute.xlu0 %555
  %v558 = vmul.f32 %v553, %v556
  %560 = vrot.lane.b32.xlu0 %v558, 64
  %v561 = vpop.permute.xlu0 %560
  %v563 = vadd.f32 %v543, %v561
  %v564 = vtanh.pop %v563
  %v565 = vsub.f32 1.0, %v553
  %567 = vrot.lane.b32.xlu0 %v564, 96
  %v568 = vpop.permute.xlu0 %567
  %v570 = vmul.f32 %v565, %v568
  %v571 = vmul.f32 %v553, %v501
  %v572 = vadd.f32 %v570, %v571
  %v573 = vld [vmem:[%s0 + $0x7] sm:$0x1]
  %v574 = vsel %vm42, %v573, %v572
  %v575 = vpack.c.bf16 %v574, %v574
  %v577 = vsel %vm78, %v575, 0
  %579 = vmatprep.subr.bf16.mxu0 0
  %580 = vmatpush1.bf16.msra.mxu0 %v70
  %581 = vmatprep.subr.bf16.mxu0 0
  %582 = vmatpush1.bf16.msra.mxu0 %v71
  %583 = vmatprep.subr.bf16.mxu0 0
  %584 = vmatpush1.bf16.msra.mxu0 %v72
  %585 = vmatprep.subr.bf16.mxu0 0
  %586 = vmatpush1.bf16.msra.mxu0 %v73
  %587 = vmatprep.subr.bf16.mxu0 0
  %588 = vmatpush1.bf16.msra.mxu0 0
  %589 = vmatprep.subr.bf16.mxu0 0
  %590 = vmatpush1.bf16.msra.mxu0 0
  %591 = vmatprep.subr.bf16.mxu0 0
  %592 = vmatpush1.bf16.msra.mxu0 0
  %593 = vmatprep.subr.bf16.mxu0 0
  %594 = vmatpush1.bf16.msra.mxu0 0
  %595 = vmatprep.subr.bf16.mxu0 0
  %596 = vmatpush1.bf16.msra.mxu0 0
  %597 = vmatprep.subr.bf16.mxu0 0
  %598 = vmatpush1.bf16.msra.mxu0 0
  %599 = vmatprep.subr.bf16.mxu0 0
  %600 = vmatpush1.bf16.msra.mxu0 0
  %601 = vmatprep.subr.bf16.mxu0 0
  %602 = vmatpush1.bf16.msra.mxu0 0
  %603 = vmatprep.subr.bf16.mxu0 0
  %604 = vmatpush1.bf16.msra.mxu0 0
  %605 = vmatprep.subr.bf16.mxu0 0
  %606 = vmatpush1.bf16.msra.mxu0 0
  %607 = vmatprep.subr.bf16.mxu0 0
  %608 = vmatpush1.bf16.msra.mxu0 0
  %609 = vmatprep.subr.bf16.mxu0 0
  %610 = vmatpush1.bf16.msra.mxu0 0
  %611 = vmatprep.mubr.bf16.mxu0 0
  %612 = vmatmul.mubr.bf16.gmra.mrb[0].mxu0 %v577
  %v613 = vpop.f32.mrb[0].mxu0
  %v614 = vadd.f32 %v53, %v613
  %v615 = vpop.f32.mrb[0].mxu0
  %v616 = vpop.f32.mrb[0].mxu0
  %v617 = vpop.f32.mrb[0].mxu0
  %618 = vdwg.mxu0
  %v619 = vxor.u32 %v614, 2147483648
  %v620 = vmul.f32 %v619, 1.442695
  %v621 = vpow.pop %v620
  %v622 = vadd.f32 %v621, 1.0
  %v623 = vrcp.pop %v622
  %v624 = vmul.f32 1.0, %v623
  %626 = vrot.lane.b32.xlu0 %v614, 32
  %v627 = vpop.permute.xlu0 %626
  %v629 = vmul.f32 %v624, %v627
  %631 = vrot.lane.b32.xlu0 %v629, 64
  %v632 = vpop.permute.xlu0 %631
  %v634 = vadd.f32 %v614, %v632
  %v635 = vtanh.pop %v634
  %v636 = vsub.f32 1.0, %v624
  %638 = vrot.lane.b32.xlu0 %v635, 96
  %v639 = vpop.permute.xlu0 %638
  %v641 = vmul.f32 %v636, %v639
  %v642 = vmul.f32 %v624, %v572
  %v643 = vadd.f32 %v641, %v642
  %v645 = vrot.slane %v217, 7
  %v648 = vrot.slane %v288, 6
  %v651 = vrot.slane %v359, 5
  %v654 = vrot.slane %v430, 4
  %v657 = vrot.slane %v501, 3
  %v660 = vrot.slane %v572, 2
  %v663 = vrot.slane %v643, 1
  %vm665 = vcmask 1040384
  %v666 = vsel %vm665, %v146, %v645
  %vm667 = vcmask 1041408
  %v668 = vsel %vm667, %v666, %v648
  %vm669 = vcmask 1042432
  %v670 = vsel %vm669, %v668, %v651
  %vm671 = vcmask 1043456
  %v672 = vsel %vm671, %v670, %v654
  %vm673 = vcmask 1044480
  %v674 = vsel %vm673, %v672, %v657
  %vm675 = vcmask 1045504
  %v676 = vsel %vm675, %v674, %v660
  %vm677 = vcmask 1046528
  %v678 = vsel %vm677, %v676, %v663
  %v679 = vpack.c.bf16 %v678, %v678
  %v680 = vld [vmem:[%s7] sm:$0xf]
  %v681 = vld [vmem:[%s7 + $0x4] sm:$0xf]
  %v682 = vld [vmem:[%s7 + $0x8] sm:$0xf]
  %v683 = vld [vmem:[%s7 + $0xc] sm:$0xf]
  %685 = vrot.lane.b32.xlu0 %v679, 96
  %v686 = vpop.permute.xlu0 %685
  %v691 = vunpack.c.l.b16 %v680
  %v692 = vunpack.c.l.b16 %v681
  %v693 = vunpack.c.l.b16 %v682
  %v694 = vunpack.c.l.b16 %v683
  %v695 = vpack.c.b16 %v692, %v691
  %v696 = vpack.c.b16 %v694, %v693
  %v700 = vsel %vm42, %v686, 0
  %702 = vmatprep.subr.bf16.mxu0 0
  %703 = vmatpush1.bf16.msra.mxu0 %v695
  %704 = vmatprep.subr.bf16.mxu0 0
  %705 = vmatpush1.bf16.msra.mxu0 %v696
  %706 = vmatprep.subr.bf16.mxu0 0
  %707 = vmatpush1.bf16.msra.mxu0 0
  %708 = vmatprep.subr.bf16.mxu0 0
  %709 = vmatpush1.bf16.msra.mxu0 0
  %710 = vmatprep.subr.bf16.mxu0 0
  %711 = vmatpush1.bf16.msra.mxu0 0
  %712 = vmatprep.subr.bf16.mxu0 0
  %713 = vmatpush1.bf16.msra.mxu0 0
  %714 = vmatprep.subr.bf16.mxu0 0
  %715 = vmatpush1.bf16.msra.mxu0 0
  %716 = vmatprep.subr.bf16.mxu0 0
  %717 = vmatpush1.bf16.msra.mxu0 0
  %718 = vmatprep.subr.bf16.mxu0 0
  %719 = vmatpush1.bf16.msra.mxu0 0
  %720 = vmatprep.subr.bf16.mxu0 0
  %721 = vmatpush1.bf16.msra.mxu0 0
  %722 = vmatprep.subr.bf16.mxu0 0
  %723 = vmatpush1.bf16.msra.mxu0 0
  %724 = vmatprep.subr.bf16.mxu0 0
  %725 = vmatpush1.bf16.msra.mxu0 0
  %726 = vmatprep.subr.bf16.mxu0 0
  %727 = vmatpush1.bf16.msra.mxu0 0
  %728 = vmatprep.subr.bf16.mxu0 0
  %729 = vmatpush1.bf16.msra.mxu0 0
  %730 = vmatprep.subr.bf16.mxu0 0
  %731 = vmatpush1.bf16.msra.mxu0 0
  %732 = vmatprep.subr.bf16.mxu0 0
  %733 = vmatpush1.bf16.msra.mxu0 0
  %734 = vmatprep.mubr.bf16.mxu0 0
  %735 = vmatmul.mubr.bf16.gmra.mrb[0].mxu0 %v700
  %v736 = vpop.f32.mrb[0].mxu0
  %v737 = vadd.f32 0.0, %v736
  %v738 = vpop.f32.mrb[0].mxu0
  %v739 = vpop.f32.mrb[0].mxu0
  %v740 = vpop.f32.mrb[0].mxu0
  %741 = vdwg.mxu0
  %v742 = vpack.c.bf16 %v737, %v737
  %v743 = vlaneseq
  %v744 = vand.u32 %v743, 127
  %v745 = vld [vmem:[%s3] sm:$0x1]
  %v746 = vunpack.c.l.bf16 %v745
  %v747 = vrot.slane %v643, 7
  %v749 = vsel %vm42, %v746, %v747
  %v750 = vpack.c.bf16 %v749, %v749
  %v751 = vld [vmem:[%s4] sm:$0xf]
  %v752 = vld [vmem:[%s4 + $0x4] sm:$0xf]
  %v753 = vld [vmem:[%s4 + $0x8] sm:$0xf]
  %v754 = vld [vmem:[%s4 + $0xc] sm:$0xf]
  %v755 = vld [vmem:[%s4 + $0x10] sm:$0xf]
  %v756 = vld [vmem:[%s4 + $0x14] sm:$0xf]
  %v757 = vld [vmem:[%s4 + $0x18] sm:$0xf]
  %v758 = vld [vmem:[%s4 + $0x1c] sm:$0xf]
  %v759 = vld [vmem:[%s5] sm:$0x1]
  %v761 = vshrl.u32 %v750, 16
  %v771 = vunpack.c.l.b16 %v751
  %v772 = vunpack.c.l.b16 %v752
  %v773 = vunpack.c.l.b16 %v753
  %v774 = vunpack.c.l.b16 %v754
  %v775 = vunpack.c.l.b16 %v755
  %v776 = vunpack.c.l.b16 %v756
  %v777 = vunpack.c.l.b16 %v757
  %v778 = vunpack.c.l.b16 %v758
  %v779 = vpack.c.b16 %v772, %v771
  %v780 = vpack.c.b16 %v774, %v773
  %v781 = vpack.c.b16 %v776, %v775
  %v782 = vpack.c.b16 %v778, %v777
  %v788 = vsel %vm78, %v761, 0
  %790 = vmatprep.subr.bf16.mxu0 0
  %791 = vmatpush1.bf16.msra.mxu0 %v779
  %792 = vmatprep.subr.bf16.mxu0 0
  %793 = vmatpush1.bf16.msra.mxu0 %v780
  %794 = vmatprep.subr.bf16.mxu0 0
  %795 = vmatpush1.bf16.msra.mxu0 %v781
  %796 = vmatprep.subr.bf16.mxu0 0
  %797 = vmatpush1.bf16.msra.mxu0 %v782
  %798 = vmatprep.subr.bf16.mxu0 0
  %799 = vmatpush1.bf16.msra.mxu0 0
  %800 = vmatprep.subr.bf16.mxu0 0
  %801 = vmatpush1.bf16.msra.mxu0 0
  %802 = vmatprep.subr.bf16.mxu0 0
  %803 = vmatpush1.bf16.msra.mxu0 0
  %804 = vmatprep.subr.bf16.mxu0 0
  %805 = vmatpush1.bf16.msra.mxu0 0
  %806 = vmatprep.subr.bf16.mxu0 0
  %807 = vmatpush1.bf16.msra.mxu0 0
  %808 = vmatprep.subr.bf16.mxu0 0
  %809 = vmatpush1.bf16.msra.mxu0 0
  %810 = vmatprep.subr.bf16.mxu0 0
  %811 = vmatpush1.bf16.msra.mxu0 0
  %812 = vmatprep.subr.bf16.mxu0 0
  %813 = vmatpush1.bf16.msra.mxu0 0
  %814 = vmatprep.subr.bf16.mxu0 0
  %815 = vmatpush1.bf16.msra.mxu0 0
  %816 = vmatprep.subr.bf16.mxu0 0
  %817 = vmatpush1.bf16.msra.mxu0 0
  %818 = vmatprep.subr.bf16.mxu0 0
  %819 = vmatpush1.bf16.msra.mxu0 0
  %820 = vmatprep.subr.bf16.mxu0 0
  %821 = vmatpush1.bf16.msra.mxu0 0
  %822 = vmatprep.mubr.bf16.mxu0 0
  %823 = vmatmul.mubr.bf16.gmra.mrb[0].mxu0 %v788
  %v824 = vpop.f32.mrb[0].mxu0
  %v825 = vadd.f32 %v759, %v824
  %v826 = vpop.f32.mrb[0].mxu0
  %v827 = vpop.f32.mrb[0].mxu0
  %v828 = vpop.f32.mrb[0].mxu0
  %829 = vdwg.mxu0
  %v830 = vxor.u32 %v825, 2147483648
  %v831 = vmul.f32 %v830, 1.442695
  %v832 = vpow.pop %v831
  %v833 = vadd.f32 %v832, 1.0
  %v834 = vrcp.pop %v833
  %v835 = vmul.f32 1.0, %v834
  %837 = vrot.lane.b32.xlu0 %v825, 32
  %v838 = vpop.permute.xlu0 %837
  %v840 = vmul.f32 %v835, %v838
  %842 = vrot.lane.b32.xlu0 %v840, 64
  %v843 = vpop.permute.xlu0 %842
  %v845 = vadd.f32 %v825, %v843
  %v846 = vtanh.pop %v845
  %v847 = vsub.f32 1.0, %v835
  %849 = vrot.lane.b32.xlu0 %v846, 96
  %v850 = vpop.permute.xlu0 %849
  %v852 = vmul.f32 %v847, %v850
  %v853 = vmul.f32 %v835, %v643
  %v854 = vadd.f32 %v852, %v853
  %v855 = vpack.c.bf16 %v854, %v854
  %857 = vrot.lane.b32.xlu0 %v855, 96
  %v858 = vpop.permute.xlu0 %857
  %v860 = vsel %vm42, %v858, 0
  %862 = vmatprep.subr.bf16.mxu0 0
  %863 = vmatpush1.bf16.xpose.msra.mxu0 %v700
  %864 = vmatprep.subr.bf16.mxu0 0
  %865 = vmatpush1.bf16.xpose.msra.mxu0 0
  %866 = vmatprep.subr.bf16.mxu0 0
  %867 = vmatpush1.bf16.xpose.msra.mxu0 0
  %868 = vmatprep.subr.bf16.mxu0 0
  %869 = vmatpush1.bf16.xpose.msra.mxu0 0
  %870 = vmatprep.subr.bf16.mxu0 0
  %871 = vmatpush1.bf16.xpose.msra.mxu0 0
  %872 = vmatprep.subr.bf16.mxu0 0
  %873 = vmatpush1.bf16.xpose.msra.mxu0 0
  %874 = vmatprep.subr.bf16.mxu0 0
  %875 = vmatpush1.bf16.xpose.msra.mxu0 0
  %876 = vmatprep.subr.bf16.mxu0 0
  %877 = vmatpush1.bf16.xpose.msra.mxu0 0
  %878 = vmatprep.subr.bf16.mxu0 0
  %879 = vmatpush1.bf16.xpose.msra.mxu0 0
  %880 = vmatprep.subr.bf16.mxu0 0
  %881 = vmatpush1.bf16.xpose.msra.mxu0 0
  %882 = vmatprep.subr.bf16.mxu0 0
  %883 = vmatpush1.bf16.xpose.msra.mxu0 0
  %884 = vmatprep.subr.bf16.mxu0 0
  %885 = vmatpush1.bf16.xpose.msra.mxu0 0
  %886 = vmatprep.subr.bf16.mxu0 0
  %887 = vmatpush1.bf16.xpose.msra.mxu0 0
  %888 = vmatprep.subr.bf16.mxu0 0
  %889 = vmatpush1.bf16.xpose.msra.mxu0 0
  %890 = vmatprep.subr.bf16.mxu0 0
  %891 = vmatpush1.bf16.xpose.msra.mxu0 0
  %892 = vmatprep.subr.bf16.mxu0 0
  %893 = vmatpush1.bf16.xpose.msra.mxu0 0
  %894 = vmatprep.mubr.bf16.mxu0 0
  %895 = vmatmul.mubr.bf16.gmra.mrb[0].mxu0 %v860
  %v896 = vpop.f32.mrb[0].mxu0
  %v897 = vadd.f32 0.0, %v896
  %v898 = vpop.f32.mrb[0].mxu0
  %v899 = vpop.f32.mrb[0].mxu0
  %v900 = vpop.f32.mrb[0].mxu0
  %901 = vdwg.mxu0
  %vm902 = vcmask 57344
  %v903 = vsel %vm902, %v897, -inf
  %904 = vmax.xlane.f32.xlu0 %v903
  %v905 = vpop.xlane.xlu0 %904
  %v906 = vsub.f32 %v897, %v905
  %v907 = vmul.f32 %v906, 1.442695
  %v908 = vpow.pop %v907
  %v909 = vsel %vm902, %v908, 0.0
  %910 = vadd.xlane.f32.xlu0 %v909
  %v911 = vpop.xlane.xlu0 %910
  %v912 = vpack.c.bf16 %v908, %v908
  %vm913 = vcmask 64512
  %v915 = vsel %vm913, %v912, 0
  %v918 = vsel %vm671, %v742, 0
  %920 = vmatprep.subr.bf16.mxu0 0
  %921 = vmatpush1.bf16.msra.mxu0 %v918
  %922 = vmatprep.subr.bf16.mxu0 0
  %923 = vmatpush1.bf16.msra.mxu0 0
  %924 = vmatprep.subr.bf16.mxu0 0
  %925 = vmatpush1.bf16.msra.mxu0 0
  %926 = vmatprep.subr.bf16.mxu0 0
  %927 = vmatpush1.bf16.msra.mxu0 0
  %928 = vmatprep.subr.bf16.mxu0 0
  %929 = vmatpush1.bf16.msra.mxu0 0
  %930 = vmatprep.subr.bf16.mxu0 0
  %931 = vmatpush1.bf16.msra.mxu0 0
  %932 = vmatprep.subr.bf16.mxu0 0
  %933 = vmatpush1.bf16.msra.mxu0 0
  %934 = vmatprep.subr.bf16.mxu0 0
  %935 = vmatpush1.bf16.msra.mxu0 0
  %936 = vmatprep.subr.bf16.mxu0 0
  %937 = vmatpush1.bf16.msra.mxu0 0
  %938 = vmatprep.subr.bf16.mxu0 0
  %939 = vmatpush1.bf16.msra.mxu0 0
  %940 = vmatprep.subr.bf16.mxu0 0
  %941 = vmatpush1.bf16.msra.mxu0 0
  %942 = vmatprep.subr.bf16.mxu0 0
  %943 = vmatpush1.bf16.msra.mxu0 0
  %944 = vmatprep.subr.bf16.mxu0 0
  %945 = vmatpush1.bf16.msra.mxu0 0
  %946 = vmatprep.subr.bf16.mxu0 0
  %947 = vmatpush1.bf16.msra.mxu0 0
  %948 = vmatprep.subr.bf16.mxu0 0
  %949 = vmatpush1.bf16.msra.mxu0 0
  %950 = vmatprep.subr.bf16.mxu0 0
  %951 = vmatpush1.bf16.msra.mxu0 0
  %952 = vmatprep.mubr.bf16.mxu0 0
  %953 = vmatmul.mubr.bf16.gmra.mrb[0].mxu0 %v915
  %v954 = vpop.f32.mrb[0].mxu0
  %v955 = vadd.f32 0.0, %v954
  %v956 = vpop.f32.mrb[0].mxu0
  %v957 = vpop.f32.mrb[0].mxu0
  %v958 = vpop.f32.mrb[0].mxu0
  %959 = vdwg.mxu0
  %v960 = vld [vmem:[%s6] sm:$0xf]
  %v961 = vld [vmem:[%s6 + $0x4] sm:$0xf]
  %v962 = vld [vmem:[%s6 + $0x8] sm:$0xf]
  %v963 = vld [vmem:[%s6 + $0xc] sm:$0xf]
  %v964 = vrcp.pop %v911
  %v965 = vmul.f32 %v955, %v964
  %v970 = vunpack.c.l.b16 %v960
  %v971 = vunpack.c.l.b16 %v961
  %v972 = vunpack.c.l.b16 %v962
  %v973 = vunpack.c.l.b16 %v963
  %v974 = vpack.c.b16 %v971, %v970
  %v975 = vpack.c.b16 %v973, %v972
  %978 = vmatprep.subr.bf16.mxu0 0
  %979 = vmatpush1.bf16.msra.mxu0 %v974
  %980 = vmatprep.subr.bf16.mxu0 0
  %981 = vmatpush1.bf16.msra.mxu0 %v975
  %982 = vmatprep.subr.bf16.mxu0 0
  %983 = vmatpush1.bf16.msra.mxu0 0
  %984 = vmatprep.subr.bf16.mxu0 0
  %985 = vmatpush1.bf16.msra.mxu0 0
  %986 = vmatprep.subr.bf16.mxu0 0
  %987 = vmatpush1.bf16.msra.mxu0 0
  %988 = vmatprep.subr.bf16.mxu0 0
  %989 = vmatpush1.bf16.msra.mxu0 0
  %990 = vmatprep.subr.bf16.mxu0 0
  %991 = vmatpush1.bf16.msra.mxu0 0
  %992 = vmatprep.subr.bf16.mxu0 0
  %993 = vmatpush1.bf16.msra.mxu0 0
  %994 = vmatprep.subr.bf16.mxu0 0
  %995 = vmatpush1.bf16.msra.mxu0 0
  %996 = vmatprep.subr.bf16.mxu0 0
  %997 = vmatpush1.bf16.msra.mxu0 0
  %998 = vmatprep.subr.bf16.mxu0 0
  %999 = vmatpush1.bf16.msra.mxu0 0
  %1000 = vmatprep.subr.bf16.mxu0 0
  %1001 = vmatpush1.bf16.msra.mxu0 0
  %1002 = vmatprep.subr.bf16.mxu0 0
  %1003 = vmatpush1.bf16.msra.mxu0 0
  %1004 = vmatprep.subr.bf16.mxu0 0
  %1005 = vmatpush1.bf16.msra.mxu0 0
  %1006 = vmatprep.subr.bf16.mxu0 0
  %1007 = vmatpush1.bf16.msra.mxu0 0
  %1008 = vmatprep.subr.bf16.mxu0 0
  %1009 = vmatpush1.bf16.msra.mxu0 0
  %1010 = vmatprep.mubr.bf16.mxu0 0
  %1011 = vmatmul.mubr.bf16.gmra.mrb[0].mxu0 %v860
  %v1012 = vpop.f32.mrb[0].mxu0
  %v1013 = vadd.f32 %v965, %v1012
  %v1014 = vpop.f32.mrb[0].mxu0
  %v1015 = vpop.f32.mrb[0].mxu0
  %v1016 = vpop.f32.mrb[0].mxu0
  %1017 = vdwg.mxu0
  %v1018 = vld [vmem:[%s8] sm:$0x1]
  %v1019 = vadd.f32 %v1013, %v1018
  %v1020 = vtanh.pop %v1019
  %v1021 = vpack.c.bf16 %v1020, %v1020
  %v1022 = vld [vmem:[%s9] sm:$0xf]
  %v1023 = vld [vmem:[%s9 + $0x4] sm:$0xf]
  %v1024 = vld [vmem:[%s9 + $0x8] sm:$0xf]
  %v1025 = vld [vmem:[%s9 + $0xc] sm:$0xf]
  %v1026 = vld [vmem:[%s10] sm:$0x1]
  %v1031 = vunpack.c.l.b16 %v1022
  %v1032 = vunpack.c.l.b16 %v1023
  %v1033 = vunpack.c.l.b16 %v1024
  %v1034 = vunpack.c.l.b16 %v1025
  %v1035 = vpack.c.b16 %v1032, %v1031
  %v1036 = vpack.c.b16 %v1034, %v1033
  %v1040 = vsel %vm42, %v1021, 0
  %1042 = vmatprep.subr.bf16.mxu0 0
  %1043 = vmatpush1.bf16.msra.mxu0 %v1035
  %1044 = vmatprep.subr.bf16.mxu0 0
  %1045 = vmatpush1.bf16.msra.mxu0 %v1036
  %1046 = vmatprep.subr.bf16.mxu0 0
  %1047 = vmatpush1.bf16.msra.mxu0 0
  %1048 = vmatprep.subr.bf16.mxu0 0
  %1049 = vmatpush1.bf16.msra.mxu0 0
  %1050 = vmatprep.subr.bf16.mxu0 0
  %1051 = vmatpush1.bf16.msra.mxu0 0
  %1052 = vmatprep.subr.bf16.mxu0 0
  %1053 = vmatpush1.bf16.msra.mxu0 0
  %1054 = vmatprep.subr.bf16.mxu0 0
  %1055 = vmatpush1.bf16.msra.mxu0 0
  %1056 = vmatprep.subr.bf16.mxu0 0
  %1057 = vmatpush1.bf16.msra.mxu0 0
  %1058 = vmatprep.subr.bf16.mxu0 0
  %1059 = vmatpush1.bf16.msra.mxu0 0
  %1060 = vmatprep.subr.bf16.mxu0 0
  %1061 = vmatpush1.bf16.msra.mxu0 0
  %1062 = vmatprep.subr.bf16.mxu0 0
  %1063 = vmatpush1.bf16.msra.mxu0 0
  %1064 = vmatprep.subr.bf16.mxu0 0
  %1065 = vmatpush1.bf16.msra.mxu0 0
  %1066 = vmatprep.subr.bf16.mxu0 0
  %1067 = vmatpush1.bf16.msra.mxu0 0
  %1068 = vmatprep.subr.bf16.mxu0 0
  %1069 = vmatpush1.bf16.msra.mxu0 0
  %1070 = vmatprep.subr.bf16.mxu0 0
  %1071 = vmatpush1.bf16.msra.mxu0 0
  %1072 = vmatprep.subr.bf16.mxu0 0
  %1073 = vmatpush1.bf16.msra.mxu0 0
  %1074 = vmatprep.mubr.bf16.mxu0 0
  %1075 = vmatmul.mubr.bf16.gmra.mrb[0].mxu0 %v1040
  %v1076 = vpop.f32.mrb[0].mxu0
  %v1077 = vadd.f32 %v1026, %v1076
  %v1078 = vpop.f32.mrb[0].mxu0
  %v1079 = vpop.f32.mrb[0].mxu0
  %v1080 = vpop.f32.mrb[0].mxu0
  %1081 = vdwg.mxu0
  %v1082 = vsel %vm665, %v1077, -inf
  %1083 = vmax.xlane.f32.xlu0 %v1082
  %v1084 = vpop.xlane.xlu0 %1083
  %v1085 = vsub.f32 %v1077, %v1084
  %v1086 = vmul.f32 %v1085, 1.442695
  %v1087 = vpow.pop %v1086
  %v1088 = vsel %vm665, %v1087, 0.0
  %1089 = vadd.xlane.f32.xlu0 %v1088
  %v1090 = vpop.xlane.xlu0 %1089
  %v1091 = vrcp.pop %v1090
  %vm1092 = vcmp.ge.f32.partialorder %v1077, %v1084
  %v1093 = vsel %vm1092, %v744, 128
  %v1094 = vsel %vm665, %v1093, 2147483647
  %v1095 = vand.u32 %v1094, 65535
  %v1096 = vshra.s32 %v1094, 16
  %v1097 = vcvt.s32.f32 %v1095
  %v1098 = vcvt.s32.f32 %v1096
  %1099 = vmin.xlane.f32.xlu0 %v1098
  %v1100 = vpop.xlane.xlu0 %1099
  %vm1101 = vcmp.eq.f32.partialorder %v1098, %v1100
  %v1102 = vsel %vm1101, %v1097, inf
  %1103 = vmin.xlane.f32.xlu0 %v1102
  %v1104 = vpop.xlane.xlu0 %1103
  %v1105 = vcvt.f32.s32 %v1104
  %v1106 = vcvt.f32.s32 %v1100
  %v1107 = vshll.u32 %v1106, 16
  %v1108 = vadd.s32 %v1107, %v1105
  %vm1109 = vcmp.eq.s32.totalorder %v744, 0
  %v1110 = vsel %vm1109, %v1108, 0
  %v1111 = vsel %vm1109, %v1091, 0.0
  %vm1112 = vcmp.eq.s32.totalorder %v744, %v1108
  %v1113 = vsel %vm1112, 1.0, 0.0
  %v1114 = vpack.c.bf16 %v1113, %v1113
  %v1115 = vld [vmem:[%s3] sm:$0xf]
  %v1116 = vld [vmem:[%s3 + $0x4] sm:$0xf]
  %v1117 = vld [vmem:[%s3 + $0x8] sm:$0xf]
  %v1118 = vld [vmem:[%s3 + $0xc] sm:$0xf]
  %v1119 = vld [vmem:[%s3 + $0x10] sm:$0xf]
  %v1120 = vld [vmem:[%s3 + $0x14] sm:$0xf]
  %v1121 = vld [vmem:[%s3 + $0x18] sm:$0xf]
  %v1122 = vld [vmem:[%s3 + $0x1c] sm:$0xf]
  %v1123 = vld [vmem:[%s3 + $0x20] sm:$0xf]
  %v1124 = vld [vmem:[%s3 + $0x24] sm:$0xf]
  %v1125 = vld [vmem:[%s3 + $0x28] sm:$0xf]
  %v1126 = vld [vmem:[%s3 + $0x2c] sm:$0xf]
  %v1127 = vld [vmem:[%s3 + $0x30] sm:$0xf]
  %v1128 = vld [vmem:[%s3 + $0x34] sm:$0xf]
  %v1129 = vld [vmem:[%s3 + $0x38] sm:$0xf]
  %v1130 = vld [vmem:[%s3 + $0x3c] sm:$0xf]
  %v1147 = vunpack.c.l.b16 %v1115
  %v1148 = vunpack.c.l.b16 %v1116
  %v1149 = vunpack.c.l.b16 %v1117
  %v1150 = vunpack.c.l.b16 %v1118
  %v1151 = vunpack.c.l.b16 %v1119
  %v1152 = vunpack.c.l.b16 %v1120
  %v1153 = vunpack.c.l.b16 %v1121
  %v1154 = vunpack.c.l.b16 %v1122
  %v1155 = vunpack.c.l.b16 %v1123
  %v1156 = vunpack.c.l.b16 %v1124
  %v1157 = vunpack.c.l.b16 %v1125
  %v1158 = vunpack.c.l.b16 %v1126
  %v1159 = vunpack.c.l.b16 %v1127
  %v1160 = vunpack.c.l.b16 %v1128
  %v1161 = vunpack.c.l.b16 %v1129
  %v1162 = vunpack.c.l.b16 %v1130
  %v1163 = vpack.c.b16 %v1148, %v1147
  %v1164 = vpack.c.b16 %v1150, %v1149
  %v1165 = vpack.c.b16 %v1152, %v1151
  %v1166 = vpack.c.b16 %v1154, %v1153
  %v1167 = vpack.c.b16 %v1156, %v1155
  %v1168 = vpack.c.b16 %v1158, %v1157
  %v1169 = vpack.c.b16 %v1160, %v1159
  %v1170 = vpack.c.b16 %v1162, %v1161
  %1179 = vmatprep.subr.bf16.mxu0 0
  %1180 = vmatpush1.bf16.msra.mxu0 %v1163
  %1181 = vmatprep.subr.bf16.mxu0 0
  %1182 = vmatpush1.bf16.msra.mxu0 %v1164
  %1183 = vmatprep.subr.bf16.mxu0 0
  %1184 = vmatpush1.bf16.msra.mxu0 %v1165
  %1185 = vmatprep.subr.bf16.mxu0 0
  %1186 = vmatpush1.bf16.msra.mxu0 %v1166
  %1187 = vmatprep.subr.bf16.mxu0 0
  %1188 = vmatpush1.bf16.msra.mxu0 %v1167
  %1189 = vmatprep.subr.bf16.mxu0 0
  %1190 = vmatpush1.bf16.msra.mxu0 %v1168
  %1191 = vmatprep.subr.bf16.mxu0 0
  %1192 = vmatpush1.bf16.msra.mxu0 %v1169
  %1193 = vmatprep.subr.bf16.mxu0 0
  %1194 = vmatpush1.bf16.msra.mxu0 %v1170
  %1195 = vmatprep.subr.bf16.mxu0 0
  %1196 = vmatpush1.bf16.msra.mxu0 0
  %1197 = vmatprep.subr.bf16.mxu0 0
  %1198 = vmatpush1.bf16.msra.mxu0 0
  %1199 = vmatprep.subr.bf16.mxu0 0
  %1200 = vmatpush1.bf16.msra.mxu0 0
  %1201 = vmatprep.subr.bf16.mxu0 0
  %1202 = vmatpush1.bf16.msra.mxu0 0
  %1203 = vmatprep.subr.bf16.mxu0 0
  %1204 = vmatpush1.bf16.msra.mxu0 0
  %1205 = vmatprep.subr.bf16.mxu0 0
  %1206 = vmatpush1.bf16.msra.mxu0 0
  %1207 = vmatprep.subr.bf16.mxu0 0
  %1208 = vmatpush1.bf16.msra.mxu0 0
  %1209 = vmatprep.subr.bf16.mxu0 0
  %1210 = vmatpush1.bf16.msra.mxu0 0
  %1211 = vmatprep.mubr.bf16.mxu0 0
  %1212 = vmatmul.mubr.bf16.gmra.mrb[0].mxu0 %v1114
  %v1213 = vpop.f32.mrb[0].mxu0
  %v1214 = vadd.f32 0.0, %v1213
  %v1215 = vpop.f32.mrb[0].mxu0
  %v1216 = vpop.f32.mrb[0].mxu0
  %v1217 = vpop.f32.mrb[0].mxu0
  %1218 = vdwg.mxu0
  %v1219 = vsel %vm42, %v1214, %v854
  %v1220 = vpack.c.bf16 %v1219, %v1219
  %v1222 = vsel %vm78, %v1220, 0
  %1224 = vmatprep.subr.bf16.mxu0 0
  %1225 = vmatpush1.bf16.msra.mxu0 %v779
  %1226 = vmatprep.subr.bf16.mxu0 0
  %1227 = vmatpush1.bf16.msra.mxu0 %v780
  %1228 = vmatprep.subr.bf16.mxu0 0
  %1229 = vmatpush1.bf16.msra.mxu0 %v781
  %1230 = vmatprep.subr.bf16.mxu0 0
  %1231 = vmatpush1.bf16.msra.mxu0 %v782
  %1232 = vmatprep.subr.bf16.mxu0 0
  %1233 = vmatpush1.bf16.msra.mxu0 0
  %1234 = vmatprep.subr.bf16.mxu0 0
  %1235 = vmatpush1.bf16.msra.mxu0 0
  %1236 = vmatprep.subr.bf16.mxu0 0
  %1237 = vmatpush1.bf16.msra.mxu0 0
  %1238 = vmatprep.subr.bf16.mxu0 0
  %1239 = vmatpush1.bf16.msra.mxu0 0
  %1240 = vmatprep.subr.bf16.mxu0 0
  %1241 = vmatpush1.bf16.msra.mxu0 0
  %1242 = vmatprep.subr.bf16.mxu0 0
  %1243 = vmatpush1.bf16.msra.mxu0 0
  %1244 = vmatprep.subr.bf16.mxu0 0
  %1245 = vmatpush1.bf16.msra.mxu0 0
  %1246 = vmatprep.subr.bf16.mxu0 0
  %1247 = vmatpush1.bf16.msra.mxu0 0
  %1248 = vmatprep.subr.bf16.mxu0 0
  %1249 = vmatpush1.bf16.msra.mxu0 0
  %1250 = vmatprep.subr.bf16.mxu0 0
  %1251 = vmatpush1.bf16.msra.mxu0 0
  %1252 = vmatprep.subr.bf16.mxu0 0
  %1253 = vmatpush1.bf16.msra.mxu0 0
  %1254 = vmatprep.subr.bf16.mxu0 0
  %1255 = vmatpush1.bf16.msra.mxu0 0
  %1256 = vmatprep.mubr.bf16.mxu0 0
  %1257 = vmatmul.mubr.bf16.gmra.mrb[0].mxu0 %v1222
  %v1258 = vpop.f32.mrb[0].mxu0
  %v1259 = vadd.f32 %v759, %v1258
  %v1260 = vpop.f32.mrb[0].mxu0
  %v1261 = vpop.f32.mrb[0].mxu0
  %v1262 = vpop.f32.mrb[0].mxu0
  %1263 = vdwg.mxu0
  %v1264 = vxor.u32 %v1259, 2147483648
  %v1265 = vmul.f32 %v1264, 1.442695
  %v1266 = vpow.pop %v1265
  %v1267 = vadd.f32 %v1266, 1.0
  %v1268 = vrcp.pop %v1267
  %v1269 = vmul.f32 1.0, %v1268
  %1271 = vrot.lane.b32.xlu0 %v1259, 32
  %v1272 = vpop.permute.xlu0 %1271
  %v1274 = vmul.f32 %v1269, %v1272
  %1276 = vrot.lane.b32.xlu0 %v1274, 64
  %v1277 = vpop.permute.xlu0 %1276
  %v1279 = vadd.f32 %v1259, %v1277
  %v1280 = vtanh.pop %v1279
  %v1281 = vsub.f32 1.0, %v1269
  %1283 = vrot.lane.b32.xlu0 %v1280, 96
  %v1284 = vpop.permute.xlu0 %1283
  %v1286 = vmul.f32 %v1281, %v1284
  %v1287 = vmul.f32 %v1269, %v854
  %v1288 = vadd.f32 %v1286, %v1287
  %v1289 = vpack.c.bf16 %v1288, %v1288
  %1291 = vrot.lane.b32.xlu0 %v1289, 96
  %v1292 = vpop.permute.xlu0 %1291
  %v1294 = vsel %vm42, %v1292, 0
  %1296 = vmatprep.subr.bf16.mxu0 0
  %1297 = vmatpush1.bf16.xpose.msra.mxu0 %v700
  %1298 = vmatprep.subr.bf16.mxu0 0
  %1299 = vmatpush1.bf16.xpose.msra.mxu0 0
  %1300 = vmatprep.subr.bf16.mxu0 0
  %1301 = vmatpush1.bf16.xpose.msra.mxu0 0
  %1302 = vmatprep.subr.bf16.mxu0 0
  %1303 = vmatpush1.bf16.xpose.msra.mxu0 0
  %1304 = vmatprep.subr.bf16.mxu0 0
  %1305 = vmatpush1.bf16.xpose.msra.mxu0 0
  %1306 = vmatprep.subr.bf16.mxu0 0
  %1307 = vmatpush1.bf16.xpose.msra.mxu0 0
  %1308 = vmatprep.subr.bf16.mxu0 0
  %1309 = vmatpush1.bf16.xpose.msra.mxu0 0
  %1310 = vmatprep.subr.bf16.mxu0 0
  %1311 = vmatpush1.bf16.xpose.msra.mxu0 0
  %1312 = vmatprep.subr.bf16.mxu0 0
  %1313 = vmatpush1.bf16.xpose.msra.mxu0 0
  %1314 = vmatprep.subr.bf16.mxu0 0
  %1315 = vmatpush1.bf16.xpose.msra.mxu0 0
  %1316 = vmatprep.subr.bf16.mxu0 0
  %1317 = vmatpush1.bf16.xpose.msra.mxu0 0
  %1318 = vmatprep.subr.bf16.mxu0 0
  %1319 = vmatpush1.bf16.xpose.msra.mxu0 0
  %1320 = vmatprep.subr.bf16.mxu0 0
  %1321 = vmatpush1.bf16.xpose.msra.mxu0 0
  %1322 = vmatprep.subr.bf16.mxu0 0
  %1323 = vmatpush1.bf16.xpose.msra.mxu0 0
  %1324 = vmatprep.subr.bf16.mxu0 0
  %1325 = vmatpush1.bf16.xpose.msra.mxu0 0
  %1326 = vmatprep.subr.bf16.mxu0 0
  %1327 = vmatpush1.bf16.xpose.msra.mxu0 0
  %1328 = vmatprep.mubr.bf16.mxu0 0
  %1329 = vmatmul.mubr.bf16.gmra.mrb[0].mxu0 %v1294
  %v1330 = vpop.f32.mrb[0].mxu0
  %v1331 = vadd.f32 0.0, %v1330
  %v1332 = vpop.f32.mrb[0].mxu0
  %v1333 = vpop.f32.mrb[0].mxu0
  %v1334 = vpop.f32.mrb[0].mxu0
  %1335 = vdwg.mxu0
  %v1336 = vsel %vm902, %v1331, -inf
  %1337 = vmax.xlane.f32.xlu0 %v1336
  %v1338 = vpop.xlane.xlu0 %1337
  %v1339 = vsub.f32 %v1331, %v1338
  %v1340 = vmul.f32 %v1339, 1.442695
  %v1341 = vpow.pop %v1340
  %v1342 = vsel %vm902, %v1341, 0.0
  %1343 = vadd.xlane.f32.xlu0 %v1342
  %v1344 = vpop.xlane.xlu0 %1343
  %v1345 = vpack.c.bf16 %v1341, %v1341
  %v1347 = vsel %vm913, %v1345, 0
  %1349 = vmatprep.subr.bf16.mxu0 0
  %1350 = vmatpush1.bf16.msra.mxu0 %v918
  %1351 = vmatprep.subr.bf16.mxu0 0
  %1352 = vmatpush1.bf16.msra.mxu0 0
  %1353 = vmatprep.subr.bf16.mxu0 0
  %1354 = vmatpush1.bf16.msra.mxu0 0
  %1355 = vmatprep.subr.bf16.mxu0 0
  %1356 = vmatpush1.bf16.msra.mxu0 0
  %1357 = vmatprep.subr.bf16.mxu0 0
  %1358 = vmatpush1.bf16.msra.mxu0 0
  %1359 = vmatprep.subr.bf16.mxu0 0
  %1360 = vmatpush1.bf16.msra.mxu0 0
  %1361 = vmatprep.subr.bf16.mxu0 0
  %1362 = vmatpush1.bf16.msra.mxu0 0
  %1363 = vmatprep.subr.bf16.mxu0 0
  %1364 = vmatpush1.bf16.msra.mxu0 0
  %1365 = vmatprep.subr.bf16.mxu0 0
  %1366 = vmatpush1.bf16.msra.mxu0 0
  %1367 = vmatprep.subr.bf16.mxu0 0
  %1368 = vmatpush1.bf16.msra.mxu0 0
  %1369 = vmatprep.subr.bf16.mxu0 0
  %1370 = vmatpush1.bf16.msra.mxu0 0
  %1371 = vmatprep.subr.bf16.mxu0 0
  %1372 = vmatpush1.bf16.msra.mxu0 0
  %1373 = vmatprep.subr.bf16.mxu0 0
  %1374 = vmatpush1.bf16.msra.mxu0 0
  %1375 = vmatprep.subr.bf16.mxu0 0
  %1376 = vmatpush1.bf16.msra.mxu0 0
  %1377 = vmatprep.subr.bf16.mxu0 0
  %1378 = vmatpush1.bf16.msra.mxu0 0
  %1379 = vmatprep.subr.bf16.mxu0 0
  %1380 = vmatpush1.bf16.msra.mxu0 0
  %1381 = vmatprep.mubr.bf16.mxu0 0
  %1382 = vmatmul.mubr.bf16.gmra.mrb[0].mxu0 %v1347
  %v1383 = vpop.f32.mrb[0].mxu0
  %v1384 = vadd.f32 0.0, %v1383
  %v1385 = vpop.f32.mrb[0].mxu0
  %v1386 = vpop.f32.mrb[0].mxu0
  %v1387 = vpop.f32.mrb[0].mxu0
  %1388 = vdwg.mxu0
  %v1389 = vrcp.pop %v1344
  %v1390 = vmul.f32 %v1384, %v1389
  %1391 = vmatprep.subr.bf16.mxu0 0
  %1392 = vmatpush1.bf16.msra.mxu0 %v974
  %1393 = vmatprep.subr.bf16.mxu0 0
  %1394 = vmatpush1.bf16.msra.mxu0 %v975
  %1395 = vmatprep.subr.bf16.mxu0 0
  %1396 = vmatpush1.bf16.msra.mxu0 0
  %1397 = vmatprep.subr.bf16.mxu0 0
  %1398 = vmatpush1.bf16.msra.mxu0 0
  %1399 = vmatprep.subr.bf16.mxu0 0
  %1400 = vmatpush1.bf16.msra.mxu0 0
  %1401 = vmatprep.subr.bf16.mxu0 0
  %1402 = vmatpush1.bf16.msra.mxu0 0
  %1403 = vmatprep.subr.bf16.mxu0 0
  %1404 = vmatpush1.bf16.msra.mxu0 0
  %1405 = vmatprep.subr.bf16.mxu0 0
  %1406 = vmatpush1.bf16.msra.mxu0 0
  %1407 = vmatprep.subr.bf16.mxu0 0
  %1408 = vmatpush1.bf16.msra.mxu0 0
  %1409 = vmatprep.subr.bf16.mxu0 0
  %1410 = vmatpush1.bf16.msra.mxu0 0
  %1411 = vmatprep.subr.bf16.mxu0 0
  %1412 = vmatpush1.bf16.msra.mxu0 0
  %1413 = vmatprep.subr.bf16.mxu0 0
  %1414 = vmatpush1.bf16.msra.mxu0 0
  %1415 = vmatprep.subr.bf16.mxu0 0
  %1416 = vmatpush1.bf16.msra.mxu0 0
  %1417 = vmatprep.subr.bf16.mxu0 0
  %1418 = vmatpush1.bf16.msra.mxu0 0
  %1419 = vmatprep.subr.bf16.mxu0 0
  %1420 = vmatpush1.bf16.msra.mxu0 0
  %1421 = vmatprep.subr.bf16.mxu0 0
  %1422 = vmatpush1.bf16.msra.mxu0 0
  %1423 = vmatprep.mubr.bf16.mxu0 0
  %1424 = vmatmul.mubr.bf16.gmra.mrb[0].mxu0 %v1294
  %v1425 = vpop.f32.mrb[0].mxu0
  %v1426 = vadd.f32 %v1390, %v1425
  %v1427 = vpop.f32.mrb[0].mxu0
  %v1428 = vpop.f32.mrb[0].mxu0
  %v1429 = vpop.f32.mrb[0].mxu0
  %1430 = vdwg.mxu0
  %v1431 = vadd.f32 %v1426, %v1018
  %v1432 = vtanh.pop %v1431
  %v1433 = vpack.c.bf16 %v1432, %v1432
  %v1435 = vsel %vm42, %v1433, 0
  %1437 = vmatprep.subr.bf16.mxu0 0
  %1438 = vmatpush1.bf16.msra.mxu0 %v1035
  %1439 = vmatprep.subr.bf16.mxu0 0
  %1440 = vmatpush1.bf16.msra.mxu0 %v1036
  %1441 = vmatprep.subr.bf16.mxu0 0
  %1442 = vmatpush1.bf16.msra.mxu0 0
  %1443 = vmatprep.subr.bf16.mxu0 0
  %1444 = vmatpush1.bf16.msra.mxu0 0
  %1445 = vmatprep.subr.bf16.mxu0 0
  %1446 = vmatpush1.bf16.msra.mxu0 0
  %1447 = vmatprep.subr.bf16.mxu0 0
  %1448 = vmatpush1.bf16.msra.mxu0 0
  %1449 = vmatprep.subr.bf16.mxu0 0
  %1450 = vmatpush1.bf16.msra.mxu0 0
  %1451 = vmatprep.subr.bf16.mxu0 0
  %1452 = vmatpush1.bf16.msra.mxu0 0
  %1453 = vmatprep.subr.bf16.mxu0 0
  %1454 = vmatpush1.bf16.msra.mxu0 0
  %1455 = vmatprep.subr.bf16.mxu0 0
  %1456 = vmatpush1.bf16.msra.mxu0 0
  %1457 = vmatprep.subr.bf16.mxu0 0
  %1458 = vmatpush1.bf16.msra.mxu0 0
  %1459 = vmatprep.subr.bf16.mxu0 0
  %1460 = vmatpush1.bf16.msra.mxu0 0
  %1461 = vmatprep.subr.bf16.mxu0 0
  %1462 = vmatpush1.bf16.msra.mxu0 0
  %1463 = vmatprep.subr.bf16.mxu0 0
  %1464 = vmatpush1.bf16.msra.mxu0 0
  %1465 = vmatprep.subr.bf16.mxu0 0
  %1466 = vmatpush1.bf16.msra.mxu0 0
  %1467 = vmatprep.subr.bf16.mxu0 0
  %1468 = vmatpush1.bf16.msra.mxu0 0
  %1469 = vmatprep.mubr.bf16.mxu0 0
  %1470 = vmatmul.mubr.bf16.gmra.mrb[0].mxu0 %v1435
  %v1471 = vpop.f32.mrb[0].mxu0
  %v1472 = vadd.f32 %v1026, %v1471
  %v1473 = vpop.f32.mrb[0].mxu0
  %v1474 = vpop.f32.mrb[0].mxu0
  %v1475 = vpop.f32.mrb[0].mxu0
  %1476 = vdwg.mxu0
  %v1477 = vsel %vm665, %v1472, -inf
  %1478 = vmax.xlane.f32.xlu0 %v1477
  %v1479 = vpop.xlane.xlu0 %1478
  %v1480 = vsub.f32 %v1472, %v1479
  %v1481 = vmul.f32 %v1480, 1.442695
  %v1482 = vpow.pop %v1481
  %v1483 = vsel %vm665, %v1482, 0.0
  %1484 = vadd.xlane.f32.xlu0 %v1483
  %v1485 = vpop.xlane.xlu0 %1484
  %v1486 = vrcp.pop %v1485
  %vm1487 = vcmp.ge.f32.partialorder %v1472, %v1479
  %v1488 = vsel %vm1487, %v744, 128
  %v1489 = vsel %vm665, %v1488, 2147483647
  %v1490 = vand.u32 %v1489, 65535
  %v1491 = vshra.s32 %v1489, 16
  %v1492 = vcvt.s32.f32 %v1490
  %v1493 = vcvt.s32.f32 %v1491
  %1494 = vmin.xlane.f32.xlu0 %v1493
  %v1495 = vpop.xlane.xlu0 %1494
  %vm1496 = vcmp.eq.f32.partialorder %v1493, %v1495
  %v1497 = vsel %vm1496, %v1492, inf
  %1498 = vmin.xlane.f32.xlu0 %v1497
  %v1499 = vpop.xlane.xlu0 %1498
  %v1500 = vcvt.f32.s32 %v1499
  %v1501 = vcvt.f32.s32 %v1495
  %v1502 = vshll.u32 %v1501, 16
  %v1503 = vadd.s32 %v1502, %v1500
  %vm1504 = vcmp.eq.s32.totalorder %v744, 1
  %v1505 = vsel %vm1504, %v1503, %v1110
  %v1506 = vsel %vm1504, %v1486, %v1111
  %vm1507 = vcmp.eq.s32.totalorder %v744, %v1503
  %v1508 = vsel %vm1507, 1.0, 0.0
  %v1509 = vpack.c.bf16 %v1508, %v1508
  %1510 = vmatprep.subr.bf16.mxu0 0
  %1511 = vmatpush1.bf16.msra.mxu0 %v1163
  %1512 = vmatprep.subr.bf16.mxu0 0
  %1513 = vmatpush1.bf16.msra.mxu0 %v1164
  %1514 = vmatprep.subr.bf16.mxu0 0
  %1515 = vmatpush1.bf16.msra.mxu0 %v1165
  %1516 = vmatprep.subr.bf16.mxu0 0
  %1517 = vmatpush1.bf16.msra.mxu0 %v1166
  %1518 = vmatprep.subr.bf16.mxu0 0
  %1519 = vmatpush1.bf16.msra.mxu0 %v1167
  %1520 = vmatprep.subr.bf16.mxu0 0
  %1521 = vmatpush1.bf16.msra.mxu0 %v1168
  %1522 = vmatprep.subr.bf16.mxu0 0
  %1523 = vmatpush1.bf16.msra.mxu0 %v1169
  %1524 = vmatprep.subr.bf16.mxu0 0
  %1525 = vmatpush1.bf16.msra.mxu0 %v1170
  %1526 = vmatprep.subr.bf16.mxu0 0
  %1527 = vmatpush1.bf16.msra.mxu0 0
  %1528 = vmatprep.subr.bf16.mxu0 0
  %1529 = vmatpush1.bf16.msra.mxu0 0
  %1530 = vmatprep.subr.bf16.mxu0 0
  %1531 = vmatpush1.bf16.msra.mxu0 0
  %1532 = vmatprep.subr.bf16.mxu0 0
  %1533 = vmatpush1.bf16.msra.mxu0 0
  %1534 = vmatprep.subr.bf16.mxu0 0
  %1535 = vmatpush1.bf16.msra.mxu0 0
  %1536 = vmatprep.subr.bf16.mxu0 0
  %1537 = vmatpush1.bf16.msra.mxu0 0
  %1538 = vmatprep.subr.bf16.mxu0 0
  %1539 = vmatpush1.bf16.msra.mxu0 0
  %1540 = vmatprep.subr.bf16.mxu0 0
  %1541 = vmatpush1.bf16.msra.mxu0 0
  %1542 = vmatprep.mubr.bf16.mxu0 0
  %1543 = vmatmul.mubr.bf16.gmra.mrb[0].mxu0 %v1509
  %v1544 = vpop.f32.mrb[0].mxu0
  %v1545 = vadd.f32 0.0, %v1544
  %v1546 = vpop.f32.mrb[0].mxu0
  %v1547 = vpop.f32.mrb[0].mxu0
  %v1548 = vpop.f32.mrb[0].mxu0
  %1549 = vdwg.mxu0
  %v1550 = vsel %vm42, %v1545, %v1288
  %v1551 = vpack.c.bf16 %v1550, %v1550
  %v1553 = vsel %vm78, %v1551, 0
  %1555 = vmatprep.subr.bf16.mxu0 0
  %1556 = vmatpush1.bf16.msra.mxu0 %v779
  %1557 = vmatprep.subr.bf16.mxu0 0
  %1558 = vmatpush1.bf16.msra.mxu0 %v780
  %1559 = vmatprep.subr.bf16.mxu0 0
  %1560 = vmatpush1.bf16.msra.mxu0 %v781
  %1561 = vmatprep.subr.bf16.mxu0 0
  %1562 = vmatpush1.bf16.msra.mxu0 %v782
  %1563 = vmatprep.subr.bf16.mxu0 0
  %1564 = vmatpush1.bf16.msra.mxu0 0
  %1565 = vmatprep.subr.bf16.mxu0 0
  %1566 = vmatpush1.bf16.msra.mxu0 0
  %1567 = vmatprep.subr.bf16.mxu0 0
  %1568 = vmatpush1.bf16.msra.mxu0 0
  %1569 = vmatprep.subr.bf16.mxu0 0
  %1570 = vmatpush1.bf16.msra.mxu0 0
  %1571 = vmatprep.subr.bf16.mxu0 0
  %1572 = vmatpush1.bf16.msra.mxu0 0
  %1573 = vmatprep.subr.bf16.mxu0 0
  %1574 = vmatpush1.bf16.msra.mxu0 0
  %1575 = vmatprep.subr.bf16.mxu0 0
  %1576 = vmatpush1.bf16.msra.mxu0 0
  %1577 = vmatprep.subr.bf16.mxu0 0
  %1578 = vmatpush1.bf16.msra.mxu0 0
  %1579 = vmatprep.subr.bf16.mxu0 0
  %1580 = vmatpush1.bf16.msra.mxu0 0
  %1581 = vmatprep.subr.bf16.mxu0 0
  %1582 = vmatpush1.bf16.msra.mxu0 0
  %1583 = vmatprep.subr.bf16.mxu0 0
  %1584 = vmatpush1.bf16.msra.mxu0 0
  %1585 = vmatprep.subr.bf16.mxu0 0
  %1586 = vmatpush1.bf16.msra.mxu0 0
  %1587 = vmatprep.mubr.bf16.mxu0 0
  %1588 = vmatmul.mubr.bf16.gmra.mrb[0].mxu0 %v1553
  %v1589 = vpop.f32.mrb[0].mxu0
  %v1590 = vadd.f32 %v759, %v1589
  %v1591 = vpop.f32.mrb[0].mxu0
  %v1592 = vpop.f32.mrb[0].mxu0
  %v1593 = vpop.f32.mrb[0].mxu0
  %1594 = vdwg.mxu0
  %v1595 = vxor.u32 %v1590, 2147483648
  %v1596 = vmul.f32 %v1595, 1.442695
  %v1597 = vpow.pop %v1596
  %v1598 = vadd.f32 %v1597, 1.0
  %v1599 = vrcp.pop %v1598
  %v1600 = vmul.f32 1.0, %v1599
  %1602 = vrot.lane.b32.xlu0 %v1590, 32
  %v1603 = vpop.permute.xlu0 %1602
  %v1605 = vmul.f32 %v1600, %v1603
  %1607 = vrot.lane.b32.xlu0 %v1605, 64
  %v1608 = vpop.permute.xlu0 %1607
  %v1610 = vadd.f32 %v1590, %v1608
  %v1611 = vtanh.pop %v1610
  %v1612 = vsub.f32 1.0, %v1600
  %1614 = vrot.lane.b32.xlu0 %v1611, 96
  %v1615 = vpop.permute.xlu0 %1614
  %v1617 = vmul.f32 %v1612, %v1615
  %v1618 = vmul.f32 %v1600, %v1288
  %v1619 = vadd.f32 %v1617, %v1618
  %v1620 = vpack.c.bf16 %v1619, %v1619
  %1622 = vrot.lane.b32.xlu0 %v1620, 96
  %v1623 = vpop.permute.xlu0 %1622
  %v1625 = vsel %vm42, %v1623, 0
  %1627 = vmatprep.subr.bf16.mxu0 0
  %1628 = vmatpush1.bf16.xpose.msra.mxu0 %v700
  %1629 = vmatprep.subr.bf16.mxu0 0
  %1630 = vmatpush1.bf16.xpose.msra.mxu0 0
  %1631 = vmatprep.subr.bf16.mxu0 0
  %1632 = vmatpush1.bf16.xpose.msra.mxu0 0
  %1633 = vmatprep.subr.bf16.mxu0 0
  %1634 = vmatpush1.bf16.xpose.msra.mxu0 0
  %1635 = vmatprep.subr.bf16.mxu0 0
  %1636 = vmatpush1.bf16.xpose.msra.mxu0 0
  %1637 = vmatprep.subr.bf16.mxu0 0
  %1638 = vmatpush1.bf16.xpose.msra.mxu0 0
  %1639 = vmatprep.subr.bf16.mxu0 0
  %1640 = vmatpush1.bf16.xpose.msra.mxu0 0
  %1641 = vmatprep.subr.bf16.mxu0 0
  %1642 = vmatpush1.bf16.xpose.msra.mxu0 0
  %1643 = vmatprep.subr.bf16.mxu0 0
  %1644 = vmatpush1.bf16.xpose.msra.mxu0 0
  %1645 = vmatprep.subr.bf16.mxu0 0
  %1646 = vmatpush1.bf16.xpose.msra.mxu0 0
  %1647 = vmatprep.subr.bf16.mxu0 0
  %1648 = vmatpush1.bf16.xpose.msra.mxu0 0
  %1649 = vmatprep.subr.bf16.mxu0 0
  %1650 = vmatpush1.bf16.xpose.msra.mxu0 0
  %1651 = vmatprep.subr.bf16.mxu0 0
  %1652 = vmatpush1.bf16.xpose.msra.mxu0 0
  %1653 = vmatprep.subr.bf16.mxu0 0
  %1654 = vmatpush1.bf16.xpose.msra.mxu0 0
  %1655 = vmatprep.subr.bf16.mxu0 0
  %1656 = vmatpush1.bf16.xpose.msra.mxu0 0
  %1657 = vmatprep.subr.bf16.mxu0 0
  %1658 = vmatpush1.bf16.xpose.msra.mxu0 0
  %1659 = vmatprep.mubr.bf16.mxu0 0
  %1660 = vmatmul.mubr.bf16.gmra.mrb[0].mxu0 %v1625
  %v1661 = vpop.f32.mrb[0].mxu0
  %v1662 = vadd.f32 0.0, %v1661
  %v1663 = vpop.f32.mrb[0].mxu0
  %v1664 = vpop.f32.mrb[0].mxu0
  %v1665 = vpop.f32.mrb[0].mxu0
  %1666 = vdwg.mxu0
  %v1667 = vsel %vm902, %v1662, -inf
  %1668 = vmax.xlane.f32.xlu0 %v1667
  %v1669 = vpop.xlane.xlu0 %1668
  %v1670 = vsub.f32 %v1662, %v1669
  %v1671 = vmul.f32 %v1670, 1.442695
  %v1672 = vpow.pop %v1671
  %v1673 = vsel %vm902, %v1672, 0.0
  %1674 = vadd.xlane.f32.xlu0 %v1673
  %v1675 = vpop.xlane.xlu0 %1674
  %v1676 = vpack.c.bf16 %v1672, %v1672
  %v1678 = vsel %vm913, %v1676, 0
  %1680 = vmatprep.subr.bf16.mxu0 0
  %1681 = vmatpush1.bf16.msra.mxu0 %v918
  %1682 = vmatprep.subr.bf16.mxu0 0
  %1683 = vmatpush1.bf16.msra.mxu0 0
  %1684 = vmatprep.subr.bf16.mxu0 0
  %1685 = vmatpush1.bf16.msra.mxu0 0
  %1686 = vmatprep.subr.bf16.mxu0 0
  %1687 = vmatpush1.bf16.msra.mxu0 0
  %1688 = vmatprep.subr.bf16.mxu0 0
  %1689 = vmatpush1.bf16.msra.mxu0 0
  %1690 = vmatprep.subr.bf16.mxu0 0
  %1691 = vmatpush1.bf16.msra.mxu0 0
  %1692 = vmatprep.subr.bf16.mxu0 0
  %1693 = vmatpush1.bf16.msra.mxu0 0
  %1694 = vmatprep.subr.bf16.mxu0 0
  %1695 = vmatpush1.bf16.msra.mxu0 0
  %1696 = vmatprep.subr.bf16.mxu0 0
  %1697 = vmatpush1.bf16.msra.mxu0 0
  %1698 = vmatprep.subr.bf16.mxu0 0
  %1699 = vmatpush1.bf16.msra.mxu0 0
  %1700 = vmatprep.subr.bf16.mxu0 0
  %1701 = vmatpush1.bf16.msra.mxu0 0
  %1702 = vmatprep.subr.bf16.mxu0 0
  %1703 = vmatpush1.bf16.msra.mxu0 0
  %1704 = vmatprep.subr.bf16.mxu0 0
  %1705 = vmatpush1.bf16.msra.mxu0 0
  %1706 = vmatprep.subr.bf16.mxu0 0
  %1707 = vmatpush1.bf16.msra.mxu0 0
  %1708 = vmatprep.subr.bf16.mxu0 0
  %1709 = vmatpush1.bf16.msra.mxu0 0
  %1710 = vmatprep.subr.bf16.mxu0 0
  %1711 = vmatpush1.bf16.msra.mxu0 0
  %1712 = vmatprep.mubr.bf16.mxu0 0
  %1713 = vmatmul.mubr.bf16.gmra.mrb[0].mxu0 %v1678
  %v1714 = vpop.f32.mrb[0].mxu0
  %v1715 = vadd.f32 0.0, %v1714
  %v1716 = vpop.f32.mrb[0].mxu0
  %v1717 = vpop.f32.mrb[0].mxu0
  %v1718 = vpop.f32.mrb[0].mxu0
  %1719 = vdwg.mxu0
  %v1720 = vrcp.pop %v1675
  %v1721 = vmul.f32 %v1715, %v1720
  %1722 = vmatprep.subr.bf16.mxu0 0
  %1723 = vmatpush1.bf16.msra.mxu0 %v974
  %1724 = vmatprep.subr.bf16.mxu0 0
  %1725 = vmatpush1.bf16.msra.mxu0 %v975
  %1726 = vmatprep.subr.bf16.mxu0 0
  %1727 = vmatpush1.bf16.msra.mxu0 0
  %1728 = vmatprep.subr.bf16.mxu0 0
  %1729 = vmatpush1.bf16.msra.mxu0 0
  %1730 = vmatprep.subr.bf16.mxu0 0
  %1731 = vmatpush1.bf16.msra.mxu0 0
  %1732 = vmatprep.subr.bf16.mxu0 0
  %1733 = vmatpush1.bf16.msra.mxu0 0
  %1734 = vmatprep.subr.bf16.mxu0 0
  %1735 = vmatpush1.bf16.msra.mxu0 0
  %1736 = vmatprep.subr.bf16.mxu0 0
  %1737 = vmatpush1.bf16.msra.mxu0 0
  %1738 = vmatprep.subr.bf16.mxu0 0
  %1739 = vmatpush1.bf16.msra.mxu0 0
  %1740 = vmatprep.subr.bf16.mxu0 0
  %1741 = vmatpush1.bf16.msra.mxu0 0
  %1742 = vmatprep.subr.bf16.mxu0 0
  %1743 = vmatpush1.bf16.msra.mxu0 0
  %1744 = vmatprep.subr.bf16.mxu0 0
  %1745 = vmatpush1.bf16.msra.mxu0 0
  %1746 = vmatprep.subr.bf16.mxu0 0
  %1747 = vmatpush1.bf16.msra.mxu0 0
  %1748 = vmatprep.subr.bf16.mxu0 0
  %1749 = vmatpush1.bf16.msra.mxu0 0
  %1750 = vmatprep.subr.bf16.mxu0 0
  %1751 = vmatpush1.bf16.msra.mxu0 0
  %1752 = vmatprep.subr.bf16.mxu0 0
  %1753 = vmatpush1.bf16.msra.mxu0 0
  %1754 = vmatprep.mubr.bf16.mxu0 0
  %1755 = vmatmul.mubr.bf16.gmra.mrb[0].mxu0 %v1625
  %v1756 = vpop.f32.mrb[0].mxu0
  %v1757 = vadd.f32 %v1721, %v1756
  %v1758 = vpop.f32.mrb[0].mxu0
  %v1759 = vpop.f32.mrb[0].mxu0
  %v1760 = vpop.f32.mrb[0].mxu0
  %1761 = vdwg.mxu0
  %v1762 = vadd.f32 %v1757, %v1018
  %v1763 = vtanh.pop %v1762
  %v1764 = vpack.c.bf16 %v1763, %v1763
  %v1766 = vsel %vm42, %v1764, 0
  %1768 = vmatprep.subr.bf16.mxu0 0
  %1769 = vmatpush1.bf16.msra.mxu0 %v1035
  %1770 = vmatprep.subr.bf16.mxu0 0
  %1771 = vmatpush1.bf16.msra.mxu0 %v1036
  %1772 = vmatprep.subr.bf16.mxu0 0
  %1773 = vmatpush1.bf16.msra.mxu0 0
  %1774 = vmatprep.subr.bf16.mxu0 0
  %1775 = vmatpush1.bf16.msra.mxu0 0
  %1776 = vmatprep.subr.bf16.mxu0 0
  %1777 = vmatpush1.bf16.msra.mxu0 0
  %1778 = vmatprep.subr.bf16.mxu0 0
  %1779 = vmatpush1.bf16.msra.mxu0 0
  %1780 = vmatprep.subr.bf16.mxu0 0
  %1781 = vmatpush1.bf16.msra.mxu0 0
  %1782 = vmatprep.subr.bf16.mxu0 0
  %1783 = vmatpush1.bf16.msra.mxu0 0
  %1784 = vmatprep.subr.bf16.mxu0 0
  %1785 = vmatpush1.bf16.msra.mxu0 0
  %1786 = vmatprep.subr.bf16.mxu0 0
  %1787 = vmatpush1.bf16.msra.mxu0 0
  %1788 = vmatprep.subr.bf16.mxu0 0
  %1789 = vmatpush1.bf16.msra.mxu0 0
  %1790 = vmatprep.subr.bf16.mxu0 0
  %1791 = vmatpush1.bf16.msra.mxu0 0
  %1792 = vmatprep.subr.bf16.mxu0 0
  %1793 = vmatpush1.bf16.msra.mxu0 0
  %1794 = vmatprep.subr.bf16.mxu0 0
  %1795 = vmatpush1.bf16.msra.mxu0 0
  %1796 = vmatprep.subr.bf16.mxu0 0
  %1797 = vmatpush1.bf16.msra.mxu0 0
  %1798 = vmatprep.subr.bf16.mxu0 0
  %1799 = vmatpush1.bf16.msra.mxu0 0
  %1800 = vmatprep.mubr.bf16.mxu0 0
  %1801 = vmatmul.mubr.bf16.gmra.mrb[0].mxu0 %v1766
  %v1802 = vpop.f32.mrb[0].mxu0
  %v1803 = vadd.f32 %v1026, %v1802
  %v1804 = vpop.f32.mrb[0].mxu0
  %v1805 = vpop.f32.mrb[0].mxu0
  %v1806 = vpop.f32.mrb[0].mxu0
  %1807 = vdwg.mxu0
  %v1808 = vsel %vm665, %v1803, -inf
  %1809 = vmax.xlane.f32.xlu0 %v1808
  %v1810 = vpop.xlane.xlu0 %1809
  %v1811 = vsub.f32 %v1803, %v1810
  %v1812 = vmul.f32 %v1811, 1.442695
  %v1813 = vpow.pop %v1812
  %v1814 = vsel %vm665, %v1813, 0.0
  %1815 = vadd.xlane.f32.xlu0 %v1814
  %v1816 = vpop.xlane.xlu0 %1815
  %v1817 = vrcp.pop %v1816
  %vm1818 = vcmp.ge.f32.partialorder %v1803, %v1810
  %v1819 = vsel %vm1818, %v744, 128
  %v1820 = vsel %vm665, %v1819, 2147483647
  %v1821 = vand.u32 %v1820, 65535
  %v1822 = vshra.s32 %v1820, 16
  %v1823 = vcvt.s32.f32 %v1821
  %v1824 = vcvt.s32.f32 %v1822
  %1825 = vmin.xlane.f32.xlu0 %v1824
  %v1826 = vpop.xlane.xlu0 %1825
  %vm1827 = vcmp.eq.f32.partialorder %v1824, %v1826
  %v1828 = vsel %vm1827, %v1823, inf
  %1829 = vmin.xlane.f32.xlu0 %v1828
  %v1830 = vpop.xlane.xlu0 %1829
  %v1831 = vcvt.f32.s32 %v1830
  %v1832 = vcvt.f32.s32 %v1826
  %v1833 = vshll.u32 %v1832, 16
  %v1834 = vadd.s32 %v1833, %v1831
  %vm1835 = vcmp.eq.s32.totalorder %v744, 2
  %v1836 = vsel %vm1835, %v1834, %v1505
  %v1837 = vsel %vm1835, %v1817, %v1506
  %vm1838 = vcmp.eq.s32.totalorder %v744, %v1834
  %v1839 = vsel %vm1838, 1.0, 0.0
  %v1840 = vpack.c.bf16 %v1839, %v1839
  %1841 = vmatprep.subr.bf16.mxu0 0
  %1842 = vmatpush1.bf16.msra.mxu0 %v1163
  %1843 = vmatprep.subr.bf16.mxu0 0
  %1844 = vmatpush1.bf16.msra.mxu0 %v1164
  %1845 = vmatprep.subr.bf16.mxu0 0
  %1846 = vmatpush1.bf16.msra.mxu0 %v1165
  %1847 = vmatprep.subr.bf16.mxu0 0
  %1848 = vmatpush1.bf16.msra.mxu0 %v1166
  %1849 = vmatprep.subr.bf16.mxu0 0
  %1850 = vmatpush1.bf16.msra.mxu0 %v1167
  %1851 = vmatprep.subr.bf16.mxu0 0
  %1852 = vmatpush1.bf16.msra.mxu0 %v1168
  %1853 = vmatprep.subr.bf16.mxu0 0
  %1854 = vmatpush1.bf16.msra.mxu0 %v1169
  %1855 = vmatprep.subr.bf16.mxu0 0
  %1856 = vmatpush1.bf16.msra.mxu0 %v1170
  %1857 = vmatprep.subr.bf16.mxu0 0
  %1858 = vmatpush1.bf16.msra.mxu0 0
  %1859 = vmatprep.subr.bf16.mxu0 0
  %1860 = vmatpush1.bf16.msra.mxu0 0
  %1861 = vmatprep.subr.bf16.mxu0 0
  %1862 = vmatpush1.bf16.msra.mxu0 0
  %1863 = vmatprep.subr.bf16.mxu0 0
  %1864 = vmatpush1.bf16.msra.mxu0 0
  %1865 = vmatprep.subr.bf16.mxu0 0
  %1866 = vmatpush1.bf16.msra.mxu0 0
  %1867 = vmatprep.subr.bf16.mxu0 0
  %1868 = vmatpush1.bf16.msra.mxu0 0
  %1869 = vmatprep.subr.bf16.mxu0 0
  %1870 = vmatpush1.bf16.msra.mxu0 0
  %1871 = vmatprep.subr.bf16.mxu0 0
  %1872 = vmatpush1.bf16.msra.mxu0 0
  %1873 = vmatprep.mubr.bf16.mxu0 0
  %1874 = vmatmul.mubr.bf16.gmra.mrb[0].mxu0 %v1840
  %v1875 = vpop.f32.mrb[0].mxu0
  %v1876 = vadd.f32 0.0, %v1875
  %v1877 = vpop.f32.mrb[0].mxu0
  %v1878 = vpop.f32.mrb[0].mxu0
  %v1879 = vpop.f32.mrb[0].mxu0
  %1880 = vdwg.mxu0
  %v1881 = vsel %vm42, %v1876, %v1619
  %v1882 = vpack.c.bf16 %v1881, %v1881
  %v1884 = vsel %vm78, %v1882, 0
  %1886 = vmatprep.subr.bf16.mxu0 0
  %1887 = vmatpush1.bf16.msra.mxu0 %v779
  %1888 = vmatprep.subr.bf16.mxu0 0
  %1889 = vmatpush1.bf16.msra.mxu0 %v780
  %1890 = vmatprep.subr.bf16.mxu0 0
  %1891 = vmatpush1.bf16.msra.mxu0 %v781
  %1892 = vmatprep.subr.bf16.mxu0 0
  %1893 = vmatpush1.bf16.msra.mxu0 %v782
  %1894 = vmatprep.subr.bf16.mxu0 0
  %1895 = vmatpush1.bf16.msra.mxu0 0
  %1896 = vmatprep.subr.bf16.mxu0 0
  %1897 = vmatpush1.bf16.msra.mxu0 0
  %1898 = vmatprep.subr.bf16.mxu0 0
  %1899 = vmatpush1.bf16.msra.mxu0 0
  %1900 = vmatprep.subr.bf16.mxu0 0
  %1901 = vmatpush1.bf16.msra.mxu0 0
  %1902 = vmatprep.subr.bf16.mxu0 0
  %1903 = vmatpush1.bf16.msra.mxu0 0
  %1904 = vmatprep.subr.bf16.mxu0 0
  %1905 = vmatpush1.bf16.msra.mxu0 0
  %1906 = vmatprep.subr.bf16.mxu0 0
  %1907 = vmatpush1.bf16.msra.mxu0 0
  %1908 = vmatprep.subr.bf16.mxu0 0
  %1909 = vmatpush1.bf16.msra.mxu0 0
  %1910 = vmatprep.subr.bf16.mxu0 0
  %1911 = vmatpush1.bf16.msra.mxu0 0
  %1912 = vmatprep.subr.bf16.mxu0 0
  %1913 = vmatpush1.bf16.msra.mxu0 0
  %1914 = vmatprep.subr.bf16.mxu0 0
  %1915 = vmatpush1.bf16.msra.mxu0 0
  %1916 = vmatprep.subr.bf16.mxu0 0
  %1917 = vmatpush1.bf16.msra.mxu0 0
  %1918 = vmatprep.mubr.bf16.mxu0 0
  %1919 = vmatmul.mubr.bf16.gmra.mrb[0].mxu0 %v1884
  %v1920 = vpop.f32.mrb[0].mxu0
  %v1921 = vadd.f32 %v759, %v1920
  %v1922 = vpop.f32.mrb[0].mxu0
  %v1923 = vpop.f32.mrb[0].mxu0
  %v1924 = vpop.f32.mrb[0].mxu0
  %1925 = vdwg.mxu0
  %v1926 = vxor.u32 %v1921, 2147483648
  %v1927 = vmul.f32 %v1926, 1.442695
  %v1928 = vpow.pop %v1927
  %v1929 = vadd.f32 %v1928, 1.0
  %v1930 = vrcp.pop %v1929
  %v1931 = vmul.f32 1.0, %v1930
  %1933 = vrot.lane.b32.xlu0 %v1921, 32
  %v1934 = vpop.permute.xlu0 %1933
  %v1936 = vmul.f32 %v1931, %v1934
  %1938 = vrot.lane.b32.xlu0 %v1936, 64
  %v1939 = vpop.permute.xlu0 %1938
  %v1941 = vadd.f32 %v1921, %v1939
  %v1942 = vtanh.pop %v1941
  %v1943 = vsub.f32 1.0, %v1931
  %1945 = vrot.lane.b32.xlu0 %v1942, 96
  %v1946 = vpop.permute.xlu0 %1945
  %v1948 = vmul.f32 %v1943, %v1946
  %v1949 = vmul.f32 %v1931, %v1619
  %v1950 = vadd.f32 %v1948, %v1949
  %v1951 = vpack.c.bf16 %v1950, %v1950
  %1953 = vrot.lane.b32.xlu0 %v1951, 96
  %v1954 = vpop.permute.xlu0 %1953
  %v1956 = vsel %vm42, %v1954, 0
  %1958 = vmatprep.subr.bf16.mxu0 0
  %1959 = vmatpush1.bf16.xpose.msra.mxu0 %v700
  %1960 = vmatprep.subr.bf16.mxu0 0
  %1961 = vmatpush1.bf16.xpose.msra.mxu0 0
  %1962 = vmatprep.subr.bf16.mxu0 0
  %1963 = vmatpush1.bf16.xpose.msra.mxu0 0
  %1964 = vmatprep.subr.bf16.mxu0 0
  %1965 = vmatpush1.bf16.xpose.msra.mxu0 0
  %1966 = vmatprep.subr.bf16.mxu0 0
  %1967 = vmatpush1.bf16.xpose.msra.mxu0 0
  %1968 = vmatprep.subr.bf16.mxu0 0
  %1969 = vmatpush1.bf16.xpose.msra.mxu0 0
  %1970 = vmatprep.subr.bf16.mxu0 0
  %1971 = vmatpush1.bf16.xpose.msra.mxu0 0
  %1972 = vmatprep.subr.bf16.mxu0 0
  %1973 = vmatpush1.bf16.xpose.msra.mxu0 0
  %1974 = vmatprep.subr.bf16.mxu0 0
  %1975 = vmatpush1.bf16.xpose.msra.mxu0 0
  %1976 = vmatprep.subr.bf16.mxu0 0
  %1977 = vmatpush1.bf16.xpose.msra.mxu0 0
  %1978 = vmatprep.subr.bf16.mxu0 0
  %1979 = vmatpush1.bf16.xpose.msra.mxu0 0
  %1980 = vmatprep.subr.bf16.mxu0 0
  %1981 = vmatpush1.bf16.xpose.msra.mxu0 0
  %1982 = vmatprep.subr.bf16.mxu0 0
  %1983 = vmatpush1.bf16.xpose.msra.mxu0 0
  %1984 = vmatprep.subr.bf16.mxu0 0
  %1985 = vmatpush1.bf16.xpose.msra.mxu0 0
  %1986 = vmatprep.subr.bf16.mxu0 0
  %1987 = vmatpush1.bf16.xpose.msra.mxu0 0
  %1988 = vmatprep.subr.bf16.mxu0 0
  %1989 = vmatpush1.bf16.xpose.msra.mxu0 0
  %1990 = vmatprep.mubr.bf16.mxu0 0
  %1991 = vmatmul.mubr.bf16.gmra.mrb[0].mxu0 %v1956
  %v1992 = vpop.f32.mrb[0].mxu0
  %v1993 = vadd.f32 0.0, %v1992
  %v1994 = vpop.f32.mrb[0].mxu0
  %v1995 = vpop.f32.mrb[0].mxu0
  %v1996 = vpop.f32.mrb[0].mxu0
  %1997 = vdwg.mxu0
  %v1998 = vsel %vm902, %v1993, -inf
  %1999 = vmax.xlane.f32.xlu0 %v1998
  %v2000 = vpop.xlane.xlu0 %1999
  %v2001 = vsub.f32 %v1993, %v2000
  %v2002 = vmul.f32 %v2001, 1.442695
  %v2003 = vpow.pop %v2002
  %v2004 = vsel %vm902, %v2003, 0.0
  %2005 = vadd.xlane.f32.xlu0 %v2004
  %v2006 = vpop.xlane.xlu0 %2005
  %v2007 = vpack.c.bf16 %v2003, %v2003
  %v2009 = vsel %vm913, %v2007, 0
  %2011 = vmatprep.subr.bf16.mxu0 0
  %2012 = vmatpush1.bf16.msra.mxu0 %v918
  %2013 = vmatprep.subr.bf16.mxu0 0
  %2014 = vmatpush1.bf16.msra.mxu0 0
  %2015 = vmatprep.subr.bf16.mxu0 0
  %2016 = vmatpush1.bf16.msra.mxu0 0
  %2017 = vmatprep.subr.bf16.mxu0 0
  %2018 = vmatpush1.bf16.msra.mxu0 0
  %2019 = vmatprep.subr.bf16.mxu0 0
  %2020 = vmatpush1.bf16.msra.mxu0 0
  %2021 = vmatprep.subr.bf16.mxu0 0
  %2022 = vmatpush1.bf16.msra.mxu0 0
  %2023 = vmatprep.subr.bf16.mxu0 0
  %2024 = vmatpush1.bf16.msra.mxu0 0
  %2025 = vmatprep.subr.bf16.mxu0 0
  %2026 = vmatpush1.bf16.msra.mxu0 0
  %2027 = vmatprep.subr.bf16.mxu0 0
  %2028 = vmatpush1.bf16.msra.mxu0 0
  %2029 = vmatprep.subr.bf16.mxu0 0
  %2030 = vmatpush1.bf16.msra.mxu0 0
  %2031 = vmatprep.subr.bf16.mxu0 0
  %2032 = vmatpush1.bf16.msra.mxu0 0
  %2033 = vmatprep.subr.bf16.mxu0 0
  %2034 = vmatpush1.bf16.msra.mxu0 0
  %2035 = vmatprep.subr.bf16.mxu0 0
  %2036 = vmatpush1.bf16.msra.mxu0 0
  %2037 = vmatprep.subr.bf16.mxu0 0
  %2038 = vmatpush1.bf16.msra.mxu0 0
  %2039 = vmatprep.subr.bf16.mxu0 0
  %2040 = vmatpush1.bf16.msra.mxu0 0
  %2041 = vmatprep.subr.bf16.mxu0 0
  %2042 = vmatpush1.bf16.msra.mxu0 0
  %2043 = vmatprep.mubr.bf16.mxu0 0
  %2044 = vmatmul.mubr.bf16.gmra.mrb[0].mxu0 %v2009
  %v2045 = vpop.f32.mrb[0].mxu0
  %v2046 = vadd.f32 0.0, %v2045
  %v2047 = vpop.f32.mrb[0].mxu0
  %v2048 = vpop.f32.mrb[0].mxu0
  %v2049 = vpop.f32.mrb[0].mxu0
  %2050 = vdwg.mxu0
  %v2051 = vrcp.pop %v2006
  %v2052 = vmul.f32 %v2046, %v2051
  %2053 = vmatprep.subr.bf16.mxu0 0
  %2054 = vmatpush1.bf16.msra.mxu0 %v974
  %2055 = vmatprep.subr.bf16.mxu0 0
  %2056 = vmatpush1.bf16.msra.mxu0 %v975
  %2057 = vmatprep.subr.bf16.mxu0 0
  %2058 = vmatpush1.bf16.msra.mxu0 0
  %2059 = vmatprep.subr.bf16.mxu0 0
  %2060 = vmatpush1.bf16.msra.mxu0 0
  %2061 = vmatprep.subr.bf16.mxu0 0
  %2062 = vmatpush1.bf16.msra.mxu0 0
  %2063 = vmatprep.subr.bf16.mxu0 0
  %2064 = vmatpush1.bf16.msra.mxu0 0
  %2065 = vmatprep.subr.bf16.mxu0 0
  %2066 = vmatpush1.bf16.msra.mxu0 0
  %2067 = vmatprep.subr.bf16.mxu0 0
  %2068 = vmatpush1.bf16.msra.mxu0 0
  %2069 = vmatprep.subr.bf16.mxu0 0
  %2070 = vmatpush1.bf16.msra.mxu0 0
  %2071 = vmatprep.subr.bf16.mxu0 0
  %2072 = vmatpush1.bf16.msra.mxu0 0
  %2073 = vmatprep.subr.bf16.mxu0 0
  %2074 = vmatpush1.bf16.msra.mxu0 0
  %2075 = vmatprep.subr.bf16.mxu0 0
  %2076 = vmatpush1.bf16.msra.mxu0 0
  %2077 = vmatprep.subr.bf16.mxu0 0
  %2078 = vmatpush1.bf16.msra.mxu0 0
  %2079 = vmatprep.subr.bf16.mxu0 0
  %2080 = vmatpush1.bf16.msra.mxu0 0
  %2081 = vmatprep.subr.bf16.mxu0 0
  %2082 = vmatpush1.bf16.msra.mxu0 0
  %2083 = vmatprep.subr.bf16.mxu0 0
  %2084 = vmatpush1.bf16.msra.mxu0 0
  %2085 = vmatprep.mubr.bf16.mxu0 0
  %2086 = vmatmul.mubr.bf16.gmra.mrb[0].mxu0 %v1956
  %v2087 = vpop.f32.mrb[0].mxu0
  %v2088 = vadd.f32 %v2052, %v2087
  %v2089 = vpop.f32.mrb[0].mxu0
  %v2090 = vpop.f32.mrb[0].mxu0
  %v2091 = vpop.f32.mrb[0].mxu0
  %2092 = vdwg.mxu0
  %v2093 = vadd.f32 %v2088, %v1018
  %v2094 = vtanh.pop %v2093
  %v2095 = vpack.c.bf16 %v2094, %v2094
  %v2097 = vsel %vm42, %v2095, 0
  %2099 = vmatprep.subr.bf16.mxu0 0
  %2100 = vmatpush1.bf16.msra.mxu0 %v1035
  %2101 = vmatprep.subr.bf16.mxu0 0
  %2102 = vmatpush1.bf16.msra.mxu0 %v1036
  %2103 = vmatprep.subr.bf16.mxu0 0
  %2104 = vmatpush1.bf16.msra.mxu0 0
  %2105 = vmatprep.subr.bf16.mxu0 0
  %2106 = vmatpush1.bf16.msra.mxu0 0
  %2107 = vmatprep.subr.bf16.mxu0 0
  %2108 = vmatpush1.bf16.msra.mxu0 0
  %2109 = vmatprep.subr.bf16.mxu0 0
  %2110 = vmatpush1.bf16.msra.mxu0 0
  %2111 = vmatprep.subr.bf16.mxu0 0
  %2112 = vmatpush1.bf16.msra.mxu0 0
  %2113 = vmatprep.subr.bf16.mxu0 0
  %2114 = vmatpush1.bf16.msra.mxu0 0
  %2115 = vmatprep.subr.bf16.mxu0 0
  %2116 = vmatpush1.bf16.msra.mxu0 0
  %2117 = vmatprep.subr.bf16.mxu0 0
  %2118 = vmatpush1.bf16.msra.mxu0 0
  %2119 = vmatprep.subr.bf16.mxu0 0
  %2120 = vmatpush1.bf16.msra.mxu0 0
  %2121 = vmatprep.subr.bf16.mxu0 0
  %2122 = vmatpush1.bf16.msra.mxu0 0
  %2123 = vmatprep.subr.bf16.mxu0 0
  %2124 = vmatpush1.bf16.msra.mxu0 0
  %2125 = vmatprep.subr.bf16.mxu0 0
  %2126 = vmatpush1.bf16.msra.mxu0 0
  %2127 = vmatprep.subr.bf16.mxu0 0
  %2128 = vmatpush1.bf16.msra.mxu0 0
  %2129 = vmatprep.subr.bf16.mxu0 0
  %2130 = vmatpush1.bf16.msra.mxu0 0
  %2131 = vmatprep.mubr.bf16.mxu0 0
  %2132 = vmatmul.mubr.bf16.gmra.mrb[0].mxu0 %v2097
  %v2133 = vpop.f32.mrb[0].mxu0
  %v2134 = vadd.f32 %v1026, %v2133
  %v2135 = vpop.f32.mrb[0].mxu0
  %v2136 = vpop.f32.mrb[0].mxu0
  %v2137 = vpop.f32.mrb[0].mxu0
  %2138 = vdwg.mxu0
  %v2139 = vsel %vm665, %v2134, -inf
  %2140 = vmax.xlane.f32.xlu0 %v2139
  %v2141 = vpop.xlane.xlu0 %2140
  %v2142 = vsub.f32 %v2134, %v2141
  %v2143 = vmul.f32 %v2142, 1.442695
  %v2144 = vpow.pop %v2143
  %v2145 = vsel %vm665, %v2144, 0.0
  %2146 = vadd.xlane.f32.xlu0 %v2145
  %v2147 = vpop.xlane.xlu0 %2146
  %v2148 = vrcp.pop %v2147
  %vm2149 = vcmp.ge.f32.partialorder %v2134, %v2141
  %v2150 = vsel %vm2149, %v744, 128
  %v2151 = vsel %vm665, %v2150, 2147483647
  %v2152 = vand.u32 %v2151, 65535
  %v2153 = vshra.s32 %v2151, 16
  %v2154 = vcvt.s32.f32 %v2152
  %v2155 = vcvt.s32.f32 %v2153
  %2156 = vmin.xlane.f32.xlu0 %v2155
  %v2157 = vpop.xlane.xlu0 %2156
  %vm2158 = vcmp.eq.f32.partialorder %v2155, %v2157
  %v2159 = vsel %vm2158, %v2154, inf
  %2160 = vmin.xlane.f32.xlu0 %v2159
  %v2161 = vpop.xlane.xlu0 %2160
  %v2162 = vcvt.f32.s32 %v2161
  %v2163 = vcvt.f32.s32 %v2157
  %v2164 = vshll.u32 %v2163, 16
  %v2165 = vadd.s32 %v2164, %v2162
  %vm2166 = vcmp.eq.s32.totalorder %v744, 3
  %v2167 = vsel %vm2166, %v2165, %v1836
  %v2168 = vsel %vm2166, %v2148, %v1837
  %vm2169 = vcmp.eq.s32.totalorder %v744, %v2165
  %v2170 = vsel %vm2169, 1.0, 0.0
  %v2171 = vpack.c.bf16 %v2170, %v2170
  %2172 = vmatprep.subr.bf16.mxu0 0
  %2173 = vmatpush1.bf16.msra.mxu0 %v1163
  %2174 = vmatprep.subr.bf16.mxu0 0
  %2175 = vmatpush1.bf16.msra.mxu0 %v1164
  %2176 = vmatprep.subr.bf16.mxu0 0
  %2177 = vmatpush1.bf16.msra.mxu0 %v1165
  %2178 = vmatprep.subr.bf16.mxu0 0
  %2179 = vmatpush1.bf16.msra.mxu0 %v1166
  %2180 = vmatprep.subr.bf16.mxu0 0
  %2181 = vmatpush1.bf16.msra.mxu0 %v1167
  %2182 = vmatprep.subr.bf16.mxu0 0
  %2183 = vmatpush1.bf16.msra.mxu0 %v1168
  %2184 = vmatprep.subr.bf16.mxu0 0
  %2185 = vmatpush1.bf16.msra.mxu0 %v1169
  %2186 = vmatprep.subr.bf16.mxu0 0
  %2187 = vmatpush1.bf16.msra.mxu0 %v1170
  %2188 = vmatprep.subr.bf16.mxu0 0
  %2189 = vmatpush1.bf16.msra.mxu0 0
  %2190 = vmatprep.subr.bf16.mxu0 0
  %2191 = vmatpush1.bf16.msra.mxu0 0
  %2192 = vmatprep.subr.bf16.mxu0 0
  %2193 = vmatpush1.bf16.msra.mxu0 0
  %2194 = vmatprep.subr.bf16.mxu0 0
  %2195 = vmatpush1.bf16.msra.mxu0 0
  %2196 = vmatprep.subr.bf16.mxu0 0
  %2197 = vmatpush1.bf16.msra.mxu0 0
  %2198 = vmatprep.subr.bf16.mxu0 0
  %2199 = vmatpush1.bf16.msra.mxu0 0
  %2200 = vmatprep.subr.bf16.mxu0 0
  %2201 = vmatpush1.bf16.msra.mxu0 0
  %2202 = vmatprep.subr.bf16.mxu0 0
  %2203 = vmatpush1.bf16.msra.mxu0 0
  %2204 = vmatprep.mubr.bf16.mxu0 0
  %2205 = vmatmul.mubr.bf16.gmra.mrb[0].mxu0 %v2171
  %v2206 = vpop.f32.mrb[0].mxu0
  %v2207 = vadd.f32 0.0, %v2206
  %v2208 = vpop.f32.mrb[0].mxu0
  %v2209 = vpop.f32.mrb[0].mxu0
  %v2210 = vpop.f32.mrb[0].mxu0
  %2211 = vdwg.mxu0
  %v2212 = vsel %vm42, %v2207, %v1950
  %v2213 = vpack.c.bf16 %v2212, %v2212
  %v2215 = vsel %vm78, %v2213, 0
  %2217 = vmatprep.subr.bf16.mxu0 0
  %2218 = vmatpush1.bf16.msra.mxu0 %v779
  %2219 = vmatprep.subr.bf16.mxu0 0
  %2220 = vmatpush1.bf16.msra.mxu0 %v780
  %2221 = vmatprep.subr.bf16.mxu0 0
  %2222 = vmatpush1.bf16.msra.mxu0 %v781
  %2223 = vmatprep.subr.bf16.mxu0 0
  %2224 = vmatpush1.bf16.msra.mxu0 %v782
  %2225 = vmatprep.subr.bf16.mxu0 0
  %2226 = vmatpush1.bf16.msra.mxu0 0
  %2227 = vmatprep.subr.bf16.mxu0 0
  %2228 = vmatpush1.bf16.msra.mxu0 0
  %2229 = vmatprep.subr.bf16.mxu0 0
  %2230 = vmatpush1.bf16.msra.mxu0 0
  %2231 = vmatprep.subr.bf16.mxu0 0
  %2232 = vmatpush1.bf16.msra.mxu0 0
  %2233 = vmatprep.subr.bf16.mxu0 0
  %2234 = vmatpush1.bf16.msra.mxu0 0
  %2235 = vmatprep.subr.bf16.mxu0 0
  %2236 = vmatpush1.bf16.msra.mxu0 0
  %2237 = vmatprep.subr.bf16.mxu0 0
  %2238 = vmatpush1.bf16.msra.mxu0 0
  %2239 = vmatprep.subr.bf16.mxu0 0
  %2240 = vmatpush1.bf16.msra.mxu0 0
  %2241 = vmatprep.subr.bf16.mxu0 0
  %2242 = vmatpush1.bf16.msra.mxu0 0
  %2243 = vmatprep.subr.bf16.mxu0 0
  %2244 = vmatpush1.bf16.msra.mxu0 0
  %2245 = vmatprep.subr.bf16.mxu0 0
  %2246 = vmatpush1.bf16.msra.mxu0 0
  %2247 = vmatprep.subr.bf16.mxu0 0
  %2248 = vmatpush1.bf16.msra.mxu0 0
  %2249 = vmatprep.mubr.bf16.mxu0 0
  %2250 = vmatmul.mubr.bf16.gmra.mrb[0].mxu0 %v2215
  %v2251 = vpop.f32.mrb[0].mxu0
  %v2252 = vadd.f32 %v759, %v2251
  %v2253 = vpop.f32.mrb[0].mxu0
  %v2254 = vpop.f32.mrb[0].mxu0
  %v2255 = vpop.f32.mrb[0].mxu0
  %2256 = vdwg.mxu0
  %v2257 = vxor.u32 %v2252, 2147483648
  %v2258 = vmul.f32 %v2257, 1.442695
  %v2259 = vpow.pop %v2258
  %v2260 = vadd.f32 %v2259, 1.0
  %v2261 = vrcp.pop %v2260
  %v2262 = vmul.f32 1.0, %v2261
  %2264 = vrot.lane.b32.xlu0 %v2252, 32
  %v2265 = vpop.permute.xlu0 %2264
  %v2267 = vmul.f32 %v2262, %v2265
  %2269 = vrot.lane.b32.xlu0 %v2267, 64
  %v2270 = vpop.permute.xlu0 %2269
  %v2272 = vadd.f32 %v2252, %v2270
  %v2273 = vtanh.pop %v2272
  %v2274 = vsub.f32 1.0, %v2262
  %2276 = vrot.lane.b32.xlu0 %v2273, 96
  %v2277 = vpop.permute.xlu0 %2276
  %v2279 = vmul.f32 %v2274, %v2277
  %v2280 = vmul.f32 %v2262, %v1950
  %v2281 = vadd.f32 %v2279, %v2280
  %v2282 = vpack.c.bf16 %v2281, %v2281
  %2284 = vrot.lane.b32.xlu0 %v2282, 96
  %v2285 = vpop.permute.xlu0 %2284
  %v2287 = vsel %vm42, %v2285, 0
  %2289 = vmatprep.subr.bf16.mxu0 0
  %2290 = vmatpush1.bf16.xpose.msra.mxu0 %v700
  %2291 = vmatprep.subr.bf16.mxu0 0
  %2292 = vmatpush1.bf16.xpose.msra.mxu0 0
  %2293 = vmatprep.subr.bf16.mxu0 0
  %2294 = vmatpush1.bf16.xpose.msra.mxu0 0
  %2295 = vmatprep.subr.bf16.mxu0 0
  %2296 = vmatpush1.bf16.xpose.msra.mxu0 0
  %2297 = vmatprep.subr.bf16.mxu0 0
  %2298 = vmatpush1.bf16.xpose.msra.mxu0 0
  %2299 = vmatprep.subr.bf16.mxu0 0
  %2300 = vmatpush1.bf16.xpose.msra.mxu0 0
  %2301 = vmatprep.subr.bf16.mxu0 0
  %2302 = vmatpush1.bf16.xpose.msra.mxu0 0
  %2303 = vmatprep.subr.bf16.mxu0 0
  %2304 = vmatpush1.bf16.xpose.msra.mxu0 0
  %2305 = vmatprep.subr.bf16.mxu0 0
  %2306 = vmatpush1.bf16.xpose.msra.mxu0 0
  %2307 = vmatprep.subr.bf16.mxu0 0
  %2308 = vmatpush1.bf16.xpose.msra.mxu0 0
  %2309 = vmatprep.subr.bf16.mxu0 0
  %2310 = vmatpush1.bf16.xpose.msra.mxu0 0
  %2311 = vmatprep.subr.bf16.mxu0 0
  %2312 = vmatpush1.bf16.xpose.msra.mxu0 0
  %2313 = vmatprep.subr.bf16.mxu0 0
  %2314 = vmatpush1.bf16.xpose.msra.mxu0 0
  %2315 = vmatprep.subr.bf16.mxu0 0
  %2316 = vmatpush1.bf16.xpose.msra.mxu0 0
  %2317 = vmatprep.subr.bf16.mxu0 0
  %2318 = vmatpush1.bf16.xpose.msra.mxu0 0
  %2319 = vmatprep.subr.bf16.mxu0 0
  %2320 = vmatpush1.bf16.xpose.msra.mxu0 0
  %2321 = vmatprep.mubr.bf16.mxu0 0
  %2322 = vmatmul.mubr.bf16.gmra.mrb[0].mxu0 %v2287
  %v2323 = vpop.f32.mrb[0].mxu0
  %v2324 = vadd.f32 0.0, %v2323
  %v2325 = vpop.f32.mrb[0].mxu0
  %v2326 = vpop.f32.mrb[0].mxu0
  %v2327 = vpop.f32.mrb[0].mxu0
  %2328 = vdwg.mxu0
  %v2329 = vsel %vm902, %v2324, -inf
  %2330 = vmax.xlane.f32.xlu0 %v2329
  %v2331 = vpop.xlane.xlu0 %2330
  %v2332 = vsub.f32 %v2324, %v2331
  %v2333 = vmul.f32 %v2332, 1.442695
  %v2334 = vpow.pop %v2333
  %v2335 = vsel %vm902, %v2334, 0.0
  %2336 = vadd.xlane.f32.xlu0 %v2335
  %v2337 = vpop.xlane.xlu0 %2336
  %v2338 = vpack.c.bf16 %v2334, %v2334
  %v2340 = vsel %vm913, %v2338, 0
  %2342 = vmatprep.subr.bf16.mxu0 0
  %2343 = vmatpush1.bf16.msra.mxu0 %v918
  %2344 = vmatprep.subr.bf16.mxu0 0
  %2345 = vmatpush1.bf16.msra.mxu0 0
  %2346 = vmatprep.subr.bf16.mxu0 0
  %2347 = vmatpush1.bf16.msra.mxu0 0
  %2348 = vmatprep.subr.bf16.mxu0 0
  %2349 = vmatpush1.bf16.msra.mxu0 0
  %2350 = vmatprep.subr.bf16.mxu0 0
  %2351 = vmatpush1.bf16.msra.mxu0 0
  %2352 = vmatprep.subr.bf16.mxu0 0
  %2353 = vmatpush1.bf16.msra.mxu0 0
  %2354 = vmatprep.subr.bf16.mxu0 0
  %2355 = vmatpush1.bf16.msra.mxu0 0
  %2356 = vmatprep.subr.bf16.mxu0 0
  %2357 = vmatpush1.bf16.msra.mxu0 0
  %2358 = vmatprep.subr.bf16.mxu0 0
  %2359 = vmatpush1.bf16.msra.mxu0 0
  %2360 = vmatprep.subr.bf16.mxu0 0
  %2361 = vmatpush1.bf16.msra.mxu0 0
  %2362 = vmatprep.subr.bf16.mxu0 0
  %2363 = vmatpush1.bf16.msra.mxu0 0
  %2364 = vmatprep.subr.bf16.mxu0 0
  %2365 = vmatpush1.bf16.msra.mxu0 0
  %2366 = vmatprep.subr.bf16.mxu0 0
  %2367 = vmatpush1.bf16.msra.mxu0 0
  %2368 = vmatprep.subr.bf16.mxu0 0
  %2369 = vmatpush1.bf16.msra.mxu0 0
  %2370 = vmatprep.subr.bf16.mxu0 0
  %2371 = vmatpush1.bf16.msra.mxu0 0
  %2372 = vmatprep.subr.bf16.mxu0 0
  %2373 = vmatpush1.bf16.msra.mxu0 0
  %2374 = vmatprep.mubr.bf16.mxu0 0
  %2375 = vmatmul.mubr.bf16.gmra.mrb[0].mxu0 %v2340
  %v2376 = vpop.f32.mrb[0].mxu0
  %v2377 = vadd.f32 0.0, %v2376
  %v2378 = vpop.f32.mrb[0].mxu0
  %v2379 = vpop.f32.mrb[0].mxu0
  %v2380 = vpop.f32.mrb[0].mxu0
  %2381 = vdwg.mxu0
  %v2382 = vrcp.pop %v2337
  %v2383 = vmul.f32 %v2377, %v2382
  %2384 = vmatprep.subr.bf16.mxu0 0
  %2385 = vmatpush1.bf16.msra.mxu0 %v974
  %2386 = vmatprep.subr.bf16.mxu0 0
  %2387 = vmatpush1.bf16.msra.mxu0 %v975
  %2388 = vmatprep.subr.bf16.mxu0 0
  %2389 = vmatpush1.bf16.msra.mxu0 0
  %2390 = vmatprep.subr.bf16.mxu0 0
  %2391 = vmatpush1.bf16.msra.mxu0 0
  %2392 = vmatprep.subr.bf16.mxu0 0
  %2393 = vmatpush1.bf16.msra.mxu0 0
  %2394 = vmatprep.subr.bf16.mxu0 0
  %2395 = vmatpush1.bf16.msra.mxu0 0
  %2396 = vmatprep.subr.bf16.mxu0 0
  %2397 = vmatpush1.bf16.msra.mxu0 0
  %2398 = vmatprep.subr.bf16.mxu0 0
  %2399 = vmatpush1.bf16.msra.mxu0 0
  %2400 = vmatprep.subr.bf16.mxu0 0
  %2401 = vmatpush1.bf16.msra.mxu0 0
  %2402 = vmatprep.subr.bf16.mxu0 0
  %2403 = vmatpush1.bf16.msra.mxu0 0
  %2404 = vmatprep.subr.bf16.mxu0 0
  %2405 = vmatpush1.bf16.msra.mxu0 0
  %2406 = vmatprep.subr.bf16.mxu0 0
  %2407 = vmatpush1.bf16.msra.mxu0 0
  %2408 = vmatprep.subr.bf16.mxu0 0
  %2409 = vmatpush1.bf16.msra.mxu0 0
  %2410 = vmatprep.subr.bf16.mxu0 0
  %2411 = vmatpush1.bf16.msra.mxu0 0
  %2412 = vmatprep.subr.bf16.mxu0 0
  %2413 = vmatpush1.bf16.msra.mxu0 0
  %2414 = vmatprep.subr.bf16.mxu0 0
  %2415 = vmatpush1.bf16.msra.mxu0 0
  %2416 = vmatprep.mubr.bf16.mxu0 0
  %2417 = vmatmul.mubr.bf16.gmra.mrb[0].mxu0 %v2287
  %v2418 = vpop.f32.mrb[0].mxu0
  %v2419 = vadd.f32 %v2383, %v2418
  %v2420 = vpop.f32.mrb[0].mxu0
  %v2421 = vpop.f32.mrb[0].mxu0
  %v2422 = vpop.f32.mrb[0].mxu0
  %2423 = vdwg.mxu0
  %v2424 = vadd.f32 %v2419, %v1018
  %v2425 = vtanh.pop %v2424
  %v2426 = vpack.c.bf16 %v2425, %v2425
  %v2428 = vsel %vm42, %v2426, 0
  %2430 = vmatprep.subr.bf16.mxu0 0
  %2431 = vmatpush1.bf16.msra.mxu0 %v1035
  %2432 = vmatprep.subr.bf16.mxu0 0
  %2433 = vmatpush1.bf16.msra.mxu0 %v1036
  %2434 = vmatprep.subr.bf16.mxu0 0
  %2435 = vmatpush1.bf16.msra.mxu0 0
  %2436 = vmatprep.subr.bf16.mxu0 0
  %2437 = vmatpush1.bf16.msra.mxu0 0
  %2438 = vmatprep.subr.bf16.mxu0 0
  %2439 = vmatpush1.bf16.msra.mxu0 0
  %2440 = vmatprep.subr.bf16.mxu0 0
  %2441 = vmatpush1.bf16.msra.mxu0 0
  %2442 = vmatprep.subr.bf16.mxu0 0
  %2443 = vmatpush1.bf16.msra.mxu0 0
  %2444 = vmatprep.subr.bf16.mxu0 0
  %2445 = vmatpush1.bf16.msra.mxu0 0
  %2446 = vmatprep.subr.bf16.mxu0 0
  %2447 = vmatpush1.bf16.msra.mxu0 0
  %2448 = vmatprep.subr.bf16.mxu0 0
  %2449 = vmatpush1.bf16.msra.mxu0 0
  %2450 = vmatprep.subr.bf16.mxu0 0
  %2451 = vmatpush1.bf16.msra.mxu0 0
  %2452 = vmatprep.subr.bf16.mxu0 0
  %2453 = vmatpush1.bf16.msra.mxu0 0
  %2454 = vmatprep.subr.bf16.mxu0 0
  %2455 = vmatpush1.bf16.msra.mxu0 0
  %2456 = vmatprep.subr.bf16.mxu0 0
  %2457 = vmatpush1.bf16.msra.mxu0 0
  %2458 = vmatprep.subr.bf16.mxu0 0
  %2459 = vmatpush1.bf16.msra.mxu0 0
  %2460 = vmatprep.subr.bf16.mxu0 0
  %2461 = vmatpush1.bf16.msra.mxu0 0
  %2462 = vmatprep.mubr.bf16.mxu0 0
  %2463 = vmatmul.mubr.bf16.gmra.mrb[0].mxu0 %v2428
  %v2464 = vpop.f32.mrb[0].mxu0
  %v2465 = vadd.f32 %v1026, %v2464
  %v2466 = vpop.f32.mrb[0].mxu0
  %v2467 = vpop.f32.mrb[0].mxu0
  %v2468 = vpop.f32.mrb[0].mxu0
  %2469 = vdwg.mxu0
  %v2470 = vsel %vm665, %v2465, -inf
  %2471 = vmax.xlane.f32.xlu0 %v2470
  %v2472 = vpop.xlane.xlu0 %2471
  %v2473 = vsub.f32 %v2465, %v2472
  %v2474 = vmul.f32 %v2473, 1.442695
  %v2475 = vpow.pop %v2474
  %v2476 = vsel %vm665, %v2475, 0.0
  %2477 = vadd.xlane.f32.xlu0 %v2476
  %v2478 = vpop.xlane.xlu0 %2477
  %v2479 = vrcp.pop %v2478
  %vm2480 = vcmp.ge.f32.partialorder %v2465, %v2472
  %v2481 = vsel %vm2480, %v744, 128
  %v2482 = vsel %vm665, %v2481, 2147483647
  %v2483 = vand.u32 %v2482, 65535
  %v2484 = vshra.s32 %v2482, 16
  %v2485 = vcvt.s32.f32 %v2483
  %v2486 = vcvt.s32.f32 %v2484
  %2487 = vmin.xlane.f32.xlu0 %v2486
  %v2488 = vpop.xlane.xlu0 %2487
  %vm2489 = vcmp.eq.f32.partialorder %v2486, %v2488
  %v2490 = vsel %vm2489, %v2485, inf
  %2491 = vmin.xlane.f32.xlu0 %v2490
  %v2492 = vpop.xlane.xlu0 %2491
  %v2493 = vcvt.f32.s32 %v2492
  %v2494 = vcvt.f32.s32 %v2488
  %v2495 = vshll.u32 %v2494, 16
  %v2496 = vadd.s32 %v2495, %v2493
  %vm2497 = vcmp.eq.s32.totalorder %v744, 4
  %v2498 = vsel %vm2497, %v2496, %v2167
  %v2499 = vsel %vm2497, %v2479, %v2168
  %vm2500 = vcmp.eq.s32.totalorder %v744, %v2496
  %v2501 = vsel %vm2500, 1.0, 0.0
  %v2502 = vpack.c.bf16 %v2501, %v2501
  %2503 = vmatprep.subr.bf16.mxu0 0
  %2504 = vmatpush1.bf16.msra.mxu0 %v1163
  %2505 = vmatprep.subr.bf16.mxu0 0
  %2506 = vmatpush1.bf16.msra.mxu0 %v1164
  %2507 = vmatprep.subr.bf16.mxu0 0
  %2508 = vmatpush1.bf16.msra.mxu0 %v1165
  %2509 = vmatprep.subr.bf16.mxu0 0
  %2510 = vmatpush1.bf16.msra.mxu0 %v1166
  %2511 = vmatprep.subr.bf16.mxu0 0
  %2512 = vmatpush1.bf16.msra.mxu0 %v1167
  %2513 = vmatprep.subr.bf16.mxu0 0
  %2514 = vmatpush1.bf16.msra.mxu0 %v1168
  %2515 = vmatprep.subr.bf16.mxu0 0
  %2516 = vmatpush1.bf16.msra.mxu0 %v1169
  %2517 = vmatprep.subr.bf16.mxu0 0
  %2518 = vmatpush1.bf16.msra.mxu0 %v1170
  %2519 = vmatprep.subr.bf16.mxu0 0
  %2520 = vmatpush1.bf16.msra.mxu0 0
  %2521 = vmatprep.subr.bf16.mxu0 0
  %2522 = vmatpush1.bf16.msra.mxu0 0
  %2523 = vmatprep.subr.bf16.mxu0 0
  %2524 = vmatpush1.bf16.msra.mxu0 0
  %2525 = vmatprep.subr.bf16.mxu0 0
  %2526 = vmatpush1.bf16.msra.mxu0 0
  %2527 = vmatprep.subr.bf16.mxu0 0
  %2528 = vmatpush1.bf16.msra.mxu0 0
  %2529 = vmatprep.subr.bf16.mxu0 0
  %2530 = vmatpush1.bf16.msra.mxu0 0
  %2531 = vmatprep.subr.bf16.mxu0 0
  %2532 = vmatpush1.bf16.msra.mxu0 0
  %2533 = vmatprep.subr.bf16.mxu0 0
  %2534 = vmatpush1.bf16.msra.mxu0 0
  %2535 = vmatprep.mubr.bf16.mxu0 0
  %2536 = vmatmul.mubr.bf16.gmra.mrb[0].mxu0 %v2502
  %v2537 = vpop.f32.mrb[0].mxu0
  %v2538 = vadd.f32 0.0, %v2537
  %v2539 = vpop.f32.mrb[0].mxu0
  %v2540 = vpop.f32.mrb[0].mxu0
  %v2541 = vpop.f32.mrb[0].mxu0
  %2542 = vdwg.mxu0
  %v2543 = vsel %vm42, %v2538, %v2281
  %v2544 = vpack.c.bf16 %v2543, %v2543
  %v2546 = vsel %vm78, %v2544, 0
  %2548 = vmatprep.subr.bf16.mxu0 0
  %2549 = vmatpush1.bf16.msra.mxu0 %v779
  %2550 = vmatprep.subr.bf16.mxu0 0
  %2551 = vmatpush1.bf16.msra.mxu0 %v780
  %2552 = vmatprep.subr.bf16.mxu0 0
  %2553 = vmatpush1.bf16.msra.mxu0 %v781
  %2554 = vmatprep.subr.bf16.mxu0 0
  %2555 = vmatpush1.bf16.msra.mxu0 %v782
  %2556 = vmatprep.subr.bf16.mxu0 0
  %2557 = vmatpush1.bf16.msra.mxu0 0
  %2558 = vmatprep.subr.bf16.mxu0 0
  %2559 = vmatpush1.bf16.msra.mxu0 0
  %2560 = vmatprep.subr.bf16.mxu0 0
  %2561 = vmatpush1.bf16.msra.mxu0 0
  %2562 = vmatprep.subr.bf16.mxu0 0
  %2563 = vmatpush1.bf16.msra.mxu0 0
  %2564 = vmatprep.subr.bf16.mxu0 0
  %2565 = vmatpush1.bf16.msra.mxu0 0
  %2566 = vmatprep.subr.bf16.mxu0 0
  %2567 = vmatpush1.bf16.msra.mxu0 0
  %2568 = vmatprep.subr.bf16.mxu0 0
  %2569 = vmatpush1.bf16.msra.mxu0 0
  %2570 = vmatprep.subr.bf16.mxu0 0
  %2571 = vmatpush1.bf16.msra.mxu0 0
  %2572 = vmatprep.subr.bf16.mxu0 0
  %2573 = vmatpush1.bf16.msra.mxu0 0
  %2574 = vmatprep.subr.bf16.mxu0 0
  %2575 = vmatpush1.bf16.msra.mxu0 0
  %2576 = vmatprep.subr.bf16.mxu0 0
  %2577 = vmatpush1.bf16.msra.mxu0 0
  %2578 = vmatprep.subr.bf16.mxu0 0
  %2579 = vmatpush1.bf16.msra.mxu0 0
  %2580 = vmatprep.mubr.bf16.mxu0 0
  %2581 = vmatmul.mubr.bf16.gmra.mrb[0].mxu0 %v2546
  %v2582 = vpop.f32.mrb[0].mxu0
  %v2583 = vadd.f32 %v759, %v2582
  %v2584 = vpop.f32.mrb[0].mxu0
  %v2585 = vpop.f32.mrb[0].mxu0
  %v2586 = vpop.f32.mrb[0].mxu0
  %2587 = vdwg.mxu0
  %v2588 = vxor.u32 %v2583, 2147483648
  %v2589 = vmul.f32 %v2588, 1.442695
  %v2590 = vpow.pop %v2589
  %v2591 = vadd.f32 %v2590, 1.0
  %v2592 = vrcp.pop %v2591
  %v2593 = vmul.f32 1.0, %v2592
  %2595 = vrot.lane.b32.xlu0 %v2583, 32
  %v2596 = vpop.permute.xlu0 %2595
  %v2598 = vmul.f32 %v2593, %v2596
  %2600 = vrot.lane.b32.xlu0 %v2598, 64
  %v2601 = vpop.permute.xlu0 %2600
  %v2603 = vadd.f32 %v2583, %v2601
  %v2604 = vtanh.pop %v2603
  %v2605 = vsub.f32 1.0, %v2593
  %2607 = vrot.lane.b32.xlu0 %v2604, 96
  %v2608 = vpop.permute.xlu0 %2607
  %v2610 = vmul.f32 %v2605, %v2608
  %v2611 = vmul.f32 %v2593, %v2281
  %v2612 = vadd.f32 %v2610, %v2611
  %v2613 = vpack.c.bf16 %v2612, %v2612
  %2615 = vrot.lane.b32.xlu0 %v2613, 96
  %v2616 = vpop.permute.xlu0 %2615
  %v2618 = vsel %vm42, %v2616, 0
  %2620 = vmatprep.subr.bf16.mxu0 0
  %2621 = vmatpush1.bf16.xpose.msra.mxu0 %v700
  %2622 = vmatprep.subr.bf16.mxu0 0
  %2623 = vmatpush1.bf16.xpose.msra.mxu0 0
  %2624 = vmatprep.subr.bf16.mxu0 0
  %2625 = vmatpush1.bf16.xpose.msra.mxu0 0
  %2626 = vmatprep.subr.bf16.mxu0 0
  %2627 = vmatpush1.bf16.xpose.msra.mxu0 0
  %2628 = vmatprep.subr.bf16.mxu0 0
  %2629 = vmatpush1.bf16.xpose.msra.mxu0 0
  %2630 = vmatprep.subr.bf16.mxu0 0
  %2631 = vmatpush1.bf16.xpose.msra.mxu0 0
  %2632 = vmatprep.subr.bf16.mxu0 0
  %2633 = vmatpush1.bf16.xpose.msra.mxu0 0
  %2634 = vmatprep.subr.bf16.mxu0 0
  %2635 = vmatpush1.bf16.xpose.msra.mxu0 0
  %2636 = vmatprep.subr.bf16.mxu0 0
  %2637 = vmatpush1.bf16.xpose.msra.mxu0 0
  %2638 = vmatprep.subr.bf16.mxu0 0
  %2639 = vmatpush1.bf16.xpose.msra.mxu0 0
  %2640 = vmatprep.subr.bf16.mxu0 0
  %2641 = vmatpush1.bf16.xpose.msra.mxu0 0
  %2642 = vmatprep.subr.bf16.mxu0 0
  %2643 = vmatpush1.bf16.xpose.msra.mxu0 0
  %2644 = vmatprep.subr.bf16.mxu0 0
  %2645 = vmatpush1.bf16.xpose.msra.mxu0 0
  %2646 = vmatprep.subr.bf16.mxu0 0
  %2647 = vmatpush1.bf16.xpose.msra.mxu0 0
  %2648 = vmatprep.subr.bf16.mxu0 0
  %2649 = vmatpush1.bf16.xpose.msra.mxu0 0
  %2650 = vmatprep.subr.bf16.mxu0 0
  %2651 = vmatpush1.bf16.xpose.msra.mxu0 0
  %2652 = vmatprep.mubr.bf16.mxu0 0
  %2653 = vmatmul.mubr.bf16.gmra.mrb[0].mxu0 %v2618
  %v2654 = vpop.f32.mrb[0].mxu0
  %v2655 = vadd.f32 0.0, %v2654
  %v2656 = vpop.f32.mrb[0].mxu0
  %v2657 = vpop.f32.mrb[0].mxu0
  %v2658 = vpop.f32.mrb[0].mxu0
  %2659 = vdwg.mxu0
  %v2660 = vsel %vm902, %v2655, -inf
  %2661 = vmax.xlane.f32.xlu0 %v2660
  %v2662 = vpop.xlane.xlu0 %2661
  %v2663 = vsub.f32 %v2655, %v2662
  %v2664 = vmul.f32 %v2663, 1.442695
  %v2665 = vpow.pop %v2664
  %v2666 = vsel %vm902, %v2665, 0.0
  %2667 = vadd.xlane.f32.xlu0 %v2666
  %v2668 = vpop.xlane.xlu0 %2667
  %v2669 = vpack.c.bf16 %v2665, %v2665
  %v2671 = vsel %vm913, %v2669, 0
  %2673 = vmatprep.subr.bf16.mxu0 0
  %2674 = vmatpush1.bf16.msra.mxu0 %v918
  %2675 = vmatprep.subr.bf16.mxu0 0
  %2676 = vmatpush1.bf16.msra.mxu0 0
  %2677 = vmatprep.subr.bf16.mxu0 0
  %2678 = vmatpush1.bf16.msra.mxu0 0
  %2679 = vmatprep.subr.bf16.mxu0 0
  %2680 = vmatpush1.bf16.msra.mxu0 0
  %2681 = vmatprep.subr.bf16.mxu0 0
  %2682 = vmatpush1.bf16.msra.mxu0 0
  %2683 = vmatprep.subr.bf16.mxu0 0
  %2684 = vmatpush1.bf16.msra.mxu0 0
  %2685 = vmatprep.subr.bf16.mxu0 0
  %2686 = vmatpush1.bf16.msra.mxu0 0
  %2687 = vmatprep.subr.bf16.mxu0 0
  %2688 = vmatpush1.bf16.msra.mxu0 0
  %2689 = vmatprep.subr.bf16.mxu0 0
  %2690 = vmatpush1.bf16.msra.mxu0 0
  %2691 = vmatprep.subr.bf16.mxu0 0
  %2692 = vmatpush1.bf16.msra.mxu0 0
  %2693 = vmatprep.subr.bf16.mxu0 0
  %2694 = vmatpush1.bf16.msra.mxu0 0
  %2695 = vmatprep.subr.bf16.mxu0 0
  %2696 = vmatpush1.bf16.msra.mxu0 0
  %2697 = vmatprep.subr.bf16.mxu0 0
  %2698 = vmatpush1.bf16.msra.mxu0 0
  %2699 = vmatprep.subr.bf16.mxu0 0
  %2700 = vmatpush1.bf16.msra.mxu0 0
  %2701 = vmatprep.subr.bf16.mxu0 0
  %2702 = vmatpush1.bf16.msra.mxu0 0
  %2703 = vmatprep.subr.bf16.mxu0 0
  %2704 = vmatpush1.bf16.msra.mxu0 0
  %2705 = vmatprep.mubr.bf16.mxu0 0
  %2706 = vmatmul.mubr.bf16.gmra.mrb[0].mxu0 %v2671
  %v2707 = vpop.f32.mrb[0].mxu0
  %v2708 = vadd.f32 0.0, %v2707
  %v2709 = vpop.f32.mrb[0].mxu0
  %v2710 = vpop.f32.mrb[0].mxu0
  %v2711 = vpop.f32.mrb[0].mxu0
  %2712 = vdwg.mxu0
  %v2713 = vrcp.pop %v2668
  %v2714 = vmul.f32 %v2708, %v2713
  %2715 = vmatprep.subr.bf16.mxu0 0
  %2716 = vmatpush1.bf16.msra.mxu0 %v974
  %2717 = vmatprep.subr.bf16.mxu0 0
  %2718 = vmatpush1.bf16.msra.mxu0 %v975
  %2719 = vmatprep.subr.bf16.mxu0 0
  %2720 = vmatpush1.bf16.msra.mxu0 0
  %2721 = vmatprep.subr.bf16.mxu0 0
  %2722 = vmatpush1.bf16.msra.mxu0 0
  %2723 = vmatprep.subr.bf16.mxu0 0
  %2724 = vmatpush1.bf16.msra.mxu0 0
  %2725 = vmatprep.subr.bf16.mxu0 0
  %2726 = vmatpush1.bf16.msra.mxu0 0
  %2727 = vmatprep.subr.bf16.mxu0 0
  %2728 = vmatpush1.bf16.msra.mxu0 0
  %2729 = vmatprep.subr.bf16.mxu0 0
  %2730 = vmatpush1.bf16.msra.mxu0 0
  %2731 = vmatprep.subr.bf16.mxu0 0
  %2732 = vmatpush1.bf16.msra.mxu0 0
  %2733 = vmatprep.subr.bf16.mxu0 0
  %2734 = vmatpush1.bf16.msra.mxu0 0
  %2735 = vmatprep.subr.bf16.mxu0 0
  %2736 = vmatpush1.bf16.msra.mxu0 0
  %2737 = vmatprep.subr.bf16.mxu0 0
  %2738 = vmatpush1.bf16.msra.mxu0 0
  %2739 = vmatprep.subr.bf16.mxu0 0
  %2740 = vmatpush1.bf16.msra.mxu0 0
  %2741 = vmatprep.subr.bf16.mxu0 0
  %2742 = vmatpush1.bf16.msra.mxu0 0
  %2743 = vmatprep.subr.bf16.mxu0 0
  %2744 = vmatpush1.bf16.msra.mxu0 0
  %2745 = vmatprep.subr.bf16.mxu0 0
  %2746 = vmatpush1.bf16.msra.mxu0 0
  %2747 = vmatprep.mubr.bf16.mxu0 0
  %2748 = vmatmul.mubr.bf16.gmra.mrb[0].mxu0 %v2618
  %v2749 = vpop.f32.mrb[0].mxu0
  %v2750 = vadd.f32 %v2714, %v2749
  %v2751 = vpop.f32.mrb[0].mxu0
  %v2752 = vpop.f32.mrb[0].mxu0
  %v2753 = vpop.f32.mrb[0].mxu0
  %2754 = vdwg.mxu0
  %v2755 = vadd.f32 %v2750, %v1018
  %v2756 = vtanh.pop %v2755
  %v2757 = vpack.c.bf16 %v2756, %v2756
  %v2759 = vsel %vm42, %v2757, 0
  %2761 = vmatprep.subr.bf16.mxu0 0
  %2762 = vmatpush1.bf16.msra.mxu0 %v1035
  %2763 = vmatprep.subr.bf16.mxu0 0
  %2764 = vmatpush1.bf16.msra.mxu0 %v1036
  %2765 = vmatprep.subr.bf16.mxu0 0
  %2766 = vmatpush1.bf16.msra.mxu0 0
  %2767 = vmatprep.subr.bf16.mxu0 0
  %2768 = vmatpush1.bf16.msra.mxu0 0
  %2769 = vmatprep.subr.bf16.mxu0 0
  %2770 = vmatpush1.bf16.msra.mxu0 0
  %2771 = vmatprep.subr.bf16.mxu0 0
  %2772 = vmatpush1.bf16.msra.mxu0 0
  %2773 = vmatprep.subr.bf16.mxu0 0
  %2774 = vmatpush1.bf16.msra.mxu0 0
  %2775 = vmatprep.subr.bf16.mxu0 0
  %2776 = vmatpush1.bf16.msra.mxu0 0
  %2777 = vmatprep.subr.bf16.mxu0 0
  %2778 = vmatpush1.bf16.msra.mxu0 0
  %2779 = vmatprep.subr.bf16.mxu0 0
  %2780 = vmatpush1.bf16.msra.mxu0 0
  %2781 = vmatprep.subr.bf16.mxu0 0
  %2782 = vmatpush1.bf16.msra.mxu0 0
  %2783 = vmatprep.subr.bf16.mxu0 0
  %2784 = vmatpush1.bf16.msra.mxu0 0
  %2785 = vmatprep.subr.bf16.mxu0 0
  %2786 = vmatpush1.bf16.msra.mxu0 0
  %2787 = vmatprep.subr.bf16.mxu0 0
  %2788 = vmatpush1.bf16.msra.mxu0 0
  %2789 = vmatprep.subr.bf16.mxu0 0
  %2790 = vmatpush1.bf16.msra.mxu0 0
  %2791 = vmatprep.subr.bf16.mxu0 0
  %2792 = vmatpush1.bf16.msra.mxu0 0
  %2793 = vmatprep.mubr.bf16.mxu0 0
  %2794 = vmatmul.mubr.bf16.gmra.mrb[0].mxu0 %v2759
  %v2795 = vpop.f32.mrb[0].mxu0
  %v2796 = vadd.f32 %v1026, %v2795
  %v2797 = vpop.f32.mrb[0].mxu0
  %v2798 = vpop.f32.mrb[0].mxu0
  %v2799 = vpop.f32.mrb[0].mxu0
  %2800 = vdwg.mxu0
  %v2801 = vsel %vm665, %v2796, -inf
  %2802 = vmax.xlane.f32.xlu0 %v2801
  %v2803 = vpop.xlane.xlu0 %2802
  %v2804 = vsub.f32 %v2796, %v2803
  %v2805 = vmul.f32 %v2804, 1.442695
  %v2806 = vpow.pop %v2805
  %v2807 = vsel %vm665, %v2806, 0.0
  %2808 = vadd.xlane.f32.xlu0 %v2807
  %v2809 = vpop.xlane.xlu0 %2808
  %v2810 = vrcp.pop %v2809
  %vm2811 = vcmp.ge.f32.partialorder %v2796, %v2803
  %v2812 = vsel %vm2811, %v744, 128
  %v2813 = vsel %vm665, %v2812, 2147483647
  %v2814 = vand.u32 %v2813, 65535
  %v2815 = vshra.s32 %v2813, 16
  %v2816 = vcvt.s32.f32 %v2814
  %v2817 = vcvt.s32.f32 %v2815
  %2818 = vmin.xlane.f32.xlu0 %v2817
  %v2819 = vpop.xlane.xlu0 %2818
  %vm2820 = vcmp.eq.f32.partialorder %v2817, %v2819
  %v2821 = vsel %vm2820, %v2816, inf
  %2822 = vmin.xlane.f32.xlu0 %v2821
  %v2823 = vpop.xlane.xlu0 %2822
  %v2824 = vcvt.f32.s32 %v2823
  %v2825 = vcvt.f32.s32 %v2819
  %v2826 = vshll.u32 %v2825, 16
  %v2827 = vadd.s32 %v2826, %v2824
  %vm2828 = vcmp.eq.s32.totalorder %v744, 5
  %v2829 = vsel %vm2828, %v2827, %v2498
  %v2830 = vsel %vm2828, %v2810, %v2499
  %vm2831 = vcmp.eq.s32.totalorder %v744, %v2827
  %v2832 = vsel %vm2831, 1.0, 0.0
  %v2833 = vpack.c.bf16 %v2832, %v2832
  %2834 = vmatprep.subr.bf16.mxu0 0
  %2835 = vmatpush1.bf16.msra.mxu0 %v1163
  %2836 = vmatprep.subr.bf16.mxu0 0
  %2837 = vmatpush1.bf16.msra.mxu0 %v1164
  %2838 = vmatprep.subr.bf16.mxu0 0
  %2839 = vmatpush1.bf16.msra.mxu0 %v1165
  %2840 = vmatprep.subr.bf16.mxu0 0
  %2841 = vmatpush1.bf16.msra.mxu0 %v1166
  %2842 = vmatprep.subr.bf16.mxu0 0
  %2843 = vmatpush1.bf16.msra.mxu0 %v1167
  %2844 = vmatprep.subr.bf16.mxu0 0
  %2845 = vmatpush1.bf16.msra.mxu0 %v1168
  %2846 = vmatprep.subr.bf16.mxu0 0
  %2847 = vmatpush1.bf16.msra.mxu0 %v1169
  %2848 = vmatprep.subr.bf16.mxu0 0
  %2849 = vmatpush1.bf16.msra.mxu0 %v1170
  %2850 = vmatprep.subr.bf16.mxu0 0
  %2851 = vmatpush1.bf16.msra.mxu0 0
  %2852 = vmatprep.subr.bf16.mxu0 0
  %2853 = vmatpush1.bf16.msra.mxu0 0
  %2854 = vmatprep.subr.bf16.mxu0 0
  %2855 = vmatpush1.bf16.msra.mxu0 0
  %2856 = vmatprep.subr.bf16.mxu0 0
  %2857 = vmatpush1.bf16.msra.mxu0 0
  %2858 = vmatprep.subr.bf16.mxu0 0
  %2859 = vmatpush1.bf16.msra.mxu0 0
  %2860 = vmatprep.subr.bf16.mxu0 0
  %2861 = vmatpush1.bf16.msra.mxu0 0
  %2862 = vmatprep.subr.bf16.mxu0 0
  %2863 = vmatpush1.bf16.msra.mxu0 0
  %2864 = vmatprep.subr.bf16.mxu0 0
  %2865 = vmatpush1.bf16.msra.mxu0 0
  %2866 = vmatprep.mubr.bf16.mxu0 0
  %2867 = vmatmul.mubr.bf16.gmra.mrb[0].mxu0 %v2833
  %v2868 = vpop.f32.mrb[0].mxu0
  %v2869 = vadd.f32 0.0, %v2868
  %v2870 = vpop.f32.mrb[0].mxu0
  %v2871 = vpop.f32.mrb[0].mxu0
  %v2872 = vpop.f32.mrb[0].mxu0
  %2873 = vdwg.mxu0
  %v2874 = vsel %vm42, %v2869, %v2612
  %v2875 = vpack.c.bf16 %v2874, %v2874
  %v2877 = vsel %vm78, %v2875, 0
  %2879 = vmatprep.subr.bf16.mxu0 0
  %2880 = vmatpush1.bf16.msra.mxu0 %v779
  %2881 = vmatprep.subr.bf16.mxu0 0
  %2882 = vmatpush1.bf16.msra.mxu0 %v780
  %2883 = vmatprep.subr.bf16.mxu0 0
  %2884 = vmatpush1.bf16.msra.mxu0 %v781
  %2885 = vmatprep.subr.bf16.mxu0 0
  %2886 = vmatpush1.bf16.msra.mxu0 %v782
  %2887 = vmatprep.subr.bf16.mxu0 0
  %2888 = vmatpush1.bf16.msra.mxu0 0
  %2889 = vmatprep.subr.bf16.mxu0 0
  %2890 = vmatpush1.bf16.msra.mxu0 0
  %2891 = vmatprep.subr.bf16.mxu0 0
  %2892 = vmatpush1.bf16.msra.mxu0 0
  %2893 = vmatprep.subr.bf16.mxu0 0
  %2894 = vmatpush1.bf16.msra.mxu0 0
  %2895 = vmatprep.subr.bf16.mxu0 0
  %2896 = vmatpush1.bf16.msra.mxu0 0
  %2897 = vmatprep.subr.bf16.mxu0 0
  %2898 = vmatpush1.bf16.msra.mxu0 0
  %2899 = vmatprep.subr.bf16.mxu0 0
  %2900 = vmatpush1.bf16.msra.mxu0 0
  %2901 = vmatprep.subr.bf16.mxu0 0
  %2902 = vmatpush1.bf16.msra.mxu0 0
  %2903 = vmatprep.subr.bf16.mxu0 0
  %2904 = vmatpush1.bf16.msra.mxu0 0
  %2905 = vmatprep.subr.bf16.mxu0 0
  %2906 = vmatpush1.bf16.msra.mxu0 0
  %2907 = vmatprep.subr.bf16.mxu0 0
  %2908 = vmatpush1.bf16.msra.mxu0 0
  %2909 = vmatprep.subr.bf16.mxu0 0
  %2910 = vmatpush1.bf16.msra.mxu0 0
  %2911 = vmatprep.mubr.bf16.mxu0 0
  %2912 = vmatmul.mubr.bf16.gmra.mrb[0].mxu0 %v2877
  %v2913 = vpop.f32.mrb[0].mxu0
  %v2914 = vadd.f32 %v759, %v2913
  %v2915 = vpop.f32.mrb[0].mxu0
  %v2916 = vpop.f32.mrb[0].mxu0
  %v2917 = vpop.f32.mrb[0].mxu0
  %2918 = vdwg.mxu0
  %v2919 = vxor.u32 %v2914, 2147483648
  %v2920 = vmul.f32 %v2919, 1.442695
  %v2921 = vpow.pop %v2920
  %v2922 = vadd.f32 %v2921, 1.0
  %v2923 = vrcp.pop %v2922
  %v2924 = vmul.f32 1.0, %v2923
  %2926 = vrot.lane.b32.xlu0 %v2914, 32
  %v2927 = vpop.permute.xlu0 %2926
  %v2929 = vmul.f32 %v2924, %v2927
  %2931 = vrot.lane.b32.xlu0 %v2929, 64
  %v2932 = vpop.permute.xlu0 %2931
  %v2934 = vadd.f32 %v2914, %v2932
  %v2935 = vtanh.pop %v2934
  %v2936 = vsub.f32 1.0, %v2924
  %2938 = vrot.lane.b32.xlu0 %v2935, 96
  %v2939 = vpop.permute.xlu0 %2938
  %v2941 = vmul.f32 %v2936, %v2939
  %v2942 = vmul.f32 %v2924, %v2612
  %v2943 = vadd.f32 %v2941, %v2942
  %v2944 = vpack.c.bf16 %v2943, %v2943
  %2946 = vrot.lane.b32.xlu0 %v2944, 96
  %v2947 = vpop.permute.xlu0 %2946
  %v2949 = vsel %vm42, %v2947, 0
  %2951 = vmatprep.subr.bf16.mxu0 0
  %2952 = vmatpush1.bf16.xpose.msra.mxu0 %v700
  %2953 = vmatprep.subr.bf16.mxu0 0
  %2954 = vmatpush1.bf16.xpose.msra.mxu0 0
  %2955 = vmatprep.subr.bf16.mxu0 0
  %2956 = vmatpush1.bf16.xpose.msra.mxu0 0
  %2957 = vmatprep.subr.bf16.mxu0 0
  %2958 = vmatpush1.bf16.xpose.msra.mxu0 0
  %2959 = vmatprep.subr.bf16.mxu0 0
  %2960 = vmatpush1.bf16.xpose.msra.mxu0 0
  %2961 = vmatprep.subr.bf16.mxu0 0
  %2962 = vmatpush1.bf16.xpose.msra.mxu0 0
  %2963 = vmatprep.subr.bf16.mxu0 0
  %2964 = vmatpush1.bf16.xpose.msra.mxu0 0
  %2965 = vmatprep.subr.bf16.mxu0 0
  %2966 = vmatpush1.bf16.xpose.msra.mxu0 0
  %2967 = vmatprep.subr.bf16.mxu0 0
  %2968 = vmatpush1.bf16.xpose.msra.mxu0 0
  %2969 = vmatprep.subr.bf16.mxu0 0
  %2970 = vmatpush1.bf16.xpose.msra.mxu0 0
  %2971 = vmatprep.subr.bf16.mxu0 0
  %2972 = vmatpush1.bf16.xpose.msra.mxu0 0
  %2973 = vmatprep.subr.bf16.mxu0 0
  %2974 = vmatpush1.bf16.xpose.msra.mxu0 0
  %2975 = vmatprep.subr.bf16.mxu0 0
  %2976 = vmatpush1.bf16.xpose.msra.mxu0 0
  %2977 = vmatprep.subr.bf16.mxu0 0
  %2978 = vmatpush1.bf16.xpose.msra.mxu0 0
  %2979 = vmatprep.subr.bf16.mxu0 0
  %2980 = vmatpush1.bf16.xpose.msra.mxu0 0
  %2981 = vmatprep.subr.bf16.mxu0 0
  %2982 = vmatpush1.bf16.xpose.msra.mxu0 0
  %2983 = vmatprep.mubr.bf16.mxu0 0
  %2984 = vmatmul.mubr.bf16.gmra.mrb[0].mxu0 %v2949
  %v2985 = vpop.f32.mrb[0].mxu0
  %v2986 = vadd.f32 0.0, %v2985
  %v2987 = vpop.f32.mrb[0].mxu0
  %v2988 = vpop.f32.mrb[0].mxu0
  %v2989 = vpop.f32.mrb[0].mxu0
  %2990 = vdwg.mxu0
  %v2991 = vsel %vm902, %v2986, -inf
  %2992 = vmax.xlane.f32.xlu0 %v2991
  %v2993 = vpop.xlane.xlu0 %2992
  %v2994 = vsub.f32 %v2986, %v2993
  %v2995 = vmul.f32 %v2994, 1.442695
  %v2996 = vpow.pop %v2995
  %v2997 = vsel %vm902, %v2996, 0.0
  %2998 = vadd.xlane.f32.xlu0 %v2997
  %v2999 = vpop.xlane.xlu0 %2998
  %v3000 = vpack.c.bf16 %v2996, %v2996
  %v3002 = vsel %vm913, %v3000, 0
  %3004 = vmatprep.subr.bf16.mxu0 0
  %3005 = vmatpush1.bf16.msra.mxu0 %v918
  %3006 = vmatprep.subr.bf16.mxu0 0
  %3007 = vmatpush1.bf16.msra.mxu0 0
  %3008 = vmatprep.subr.bf16.mxu0 0
  %3009 = vmatpush1.bf16.msra.mxu0 0
  %3010 = vmatprep.subr.bf16.mxu0 0
  %3011 = vmatpush1.bf16.msra.mxu0 0
  %3012 = vmatprep.subr.bf16.mxu0 0
  %3013 = vmatpush1.bf16.msra.mxu0 0
  %3014 = vmatprep.subr.bf16.mxu0 0
  %3015 = vmatpush1.bf16.msra.mxu0 0
  %3016 = vmatprep.subr.bf16.mxu0 0
  %3017 = vmatpush1.bf16.msra.mxu0 0
  %3018 = vmatprep.subr.bf16.mxu0 0
  %3019 = vmatpush1.bf16.msra.mxu0 0
  %3020 = vmatprep.subr.bf16.mxu0 0
  %3021 = vmatpush1.bf16.msra.mxu0 0
  %3022 = vmatprep.subr.bf16.mxu0 0
  %3023 = vmatpush1.bf16.msra.mxu0 0
  %3024 = vmatprep.subr.bf16.mxu0 0
  %3025 = vmatpush1.bf16.msra.mxu0 0
  %3026 = vmatprep.subr.bf16.mxu0 0
  %3027 = vmatpush1.bf16.msra.mxu0 0
  %3028 = vmatprep.subr.bf16.mxu0 0
  %3029 = vmatpush1.bf16.msra.mxu0 0
  %3030 = vmatprep.subr.bf16.mxu0 0
  %3031 = vmatpush1.bf16.msra.mxu0 0
  %3032 = vmatprep.subr.bf16.mxu0 0
  %3033 = vmatpush1.bf16.msra.mxu0 0
  %3034 = vmatprep.subr.bf16.mxu0 0
  %3035 = vmatpush1.bf16.msra.mxu0 0
  %3036 = vmatprep.mubr.bf16.mxu0 0
  %3037 = vmatmul.mubr.bf16.gmra.mrb[0].mxu0 %v3002
  %v3038 = vpop.f32.mrb[0].mxu0
  %v3039 = vadd.f32 0.0, %v3038
  %v3040 = vpop.f32.mrb[0].mxu0
  %v3041 = vpop.f32.mrb[0].mxu0
  %v3042 = vpop.f32.mrb[0].mxu0
  %3043 = vdwg.mxu0
  %v3044 = vrcp.pop %v2999
  %v3045 = vmul.f32 %v3039, %v3044
  %3046 = vmatprep.subr.bf16.mxu0 0
  %3047 = vmatpush1.bf16.msra.mxu0 %v974
  %3048 = vmatprep.subr.bf16.mxu0 0
  %3049 = vmatpush1.bf16.msra.mxu0 %v975
  %3050 = vmatprep.subr.bf16.mxu0 0
  %3051 = vmatpush1.bf16.msra.mxu0 0
  %3052 = vmatprep.subr.bf16.mxu0 0
  %3053 = vmatpush1.bf16.msra.mxu0 0
  %3054 = vmatprep.subr.bf16.mxu0 0
  %3055 = vmatpush1.bf16.msra.mxu0 0
  %3056 = vmatprep.subr.bf16.mxu0 0
  %3057 = vmatpush1.bf16.msra.mxu0 0
  %3058 = vmatprep.subr.bf16.mxu0 0
  %3059 = vmatpush1.bf16.msra.mxu0 0
  %3060 = vmatprep.subr.bf16.mxu0 0
  %3061 = vmatpush1.bf16.msra.mxu0 0
  %3062 = vmatprep.subr.bf16.mxu0 0
  %3063 = vmatpush1.bf16.msra.mxu0 0
  %3064 = vmatprep.subr.bf16.mxu0 0
  %3065 = vmatpush1.bf16.msra.mxu0 0
  %3066 = vmatprep.subr.bf16.mxu0 0
  %3067 = vmatpush1.bf16.msra.mxu0 0
  %3068 = vmatprep.subr.bf16.mxu0 0
  %3069 = vmatpush1.bf16.msra.mxu0 0
  %3070 = vmatprep.subr.bf16.mxu0 0
  %3071 = vmatpush1.bf16.msra.mxu0 0
  %3072 = vmatprep.subr.bf16.mxu0 0
  %3073 = vmatpush1.bf16.msra.mxu0 0
  %3074 = vmatprep.subr.bf16.mxu0 0
  %3075 = vmatpush1.bf16.msra.mxu0 0
  %3076 = vmatprep.subr.bf16.mxu0 0
  %3077 = vmatpush1.bf16.msra.mxu0 0
  %3078 = vmatprep.mubr.bf16.mxu0 0
  %3079 = vmatmul.mubr.bf16.gmra.mrb[0].mxu0 %v2949
  %v3080 = vpop.f32.mrb[0].mxu0
  %v3081 = vadd.f32 %v3045, %v3080
  %v3082 = vpop.f32.mrb[0].mxu0
  %v3083 = vpop.f32.mrb[0].mxu0
  %v3084 = vpop.f32.mrb[0].mxu0
  %3085 = vdwg.mxu0
  %v3086 = vadd.f32 %v3081, %v1018
  %v3087 = vtanh.pop %v3086
  %v3088 = vpack.c.bf16 %v3087, %v3087
  %v3090 = vsel %vm42, %v3088, 0
  %3092 = vmatprep.subr.bf16.mxu0 0
  %3093 = vmatpush1.bf16.msra.mxu0 %v1035
  %3094 = vmatprep.subr.bf16.mxu0 0
  %3095 = vmatpush1.bf16.msra.mxu0 %v1036
  %3096 = vmatprep.subr.bf16.mxu0 0
  %3097 = vmatpush1.bf16.msra.mxu0 0
  %3098 = vmatprep.subr.bf16.mxu0 0
  %3099 = vmatpush1.bf16.msra.mxu0 0
  %3100 = vmatprep.subr.bf16.mxu0 0
  %3101 = vmatpush1.bf16.msra.mxu0 0
  %3102 = vmatprep.subr.bf16.mxu0 0
  %3103 = vmatpush1.bf16.msra.mxu0 0
  %3104 = vmatprep.subr.bf16.mxu0 0
  %3105 = vmatpush1.bf16.msra.mxu0 0
  %3106 = vmatprep.subr.bf16.mxu0 0
  %3107 = vmatpush1.bf16.msra.mxu0 0
  %3108 = vmatprep.subr.bf16.mxu0 0
  %3109 = vmatpush1.bf16.msra.mxu0 0
  %3110 = vmatprep.subr.bf16.mxu0 0
  %3111 = vmatpush1.bf16.msra.mxu0 0
  %3112 = vmatprep.subr.bf16.mxu0 0
  %3113 = vmatpush1.bf16.msra.mxu0 0
  %3114 = vmatprep.subr.bf16.mxu0 0
  %3115 = vmatpush1.bf16.msra.mxu0 0
  %3116 = vmatprep.subr.bf16.mxu0 0
  %3117 = vmatpush1.bf16.msra.mxu0 0
  %3118 = vmatprep.subr.bf16.mxu0 0
  %3119 = vmatpush1.bf16.msra.mxu0 0
  %3120 = vmatprep.subr.bf16.mxu0 0
  %3121 = vmatpush1.bf16.msra.mxu0 0
  %3122 = vmatprep.subr.bf16.mxu0 0
  %3123 = vmatpush1.bf16.msra.mxu0 0
  %3124 = vmatprep.mubr.bf16.mxu0 0
  %3125 = vmatmul.mubr.bf16.gmra.mrb[0].mxu0 %v3090
  %v3126 = vpop.f32.mrb[0].mxu0
  %v3127 = vadd.f32 %v1026, %v3126
  %v3128 = vpop.f32.mrb[0].mxu0
  %v3129 = vpop.f32.mrb[0].mxu0
  %v3130 = vpop.f32.mrb[0].mxu0
  %3131 = vdwg.mxu0
  %v3132 = vsel %vm665, %v3127, -inf
  %3133 = vmax.xlane.f32.xlu0 %v3132
  %v3134 = vpop.xlane.xlu0 %3133
  %v3135 = vsub.f32 %v3127, %v3134
  %v3136 = vmul.f32 %v3135, 1.442695
  %v3137 = vpow.pop %v3136
  %v3138 = vsel %vm665, %v3137, 0.0
  %3139 = vadd.xlane.f32.xlu0 %v3138
  %v3140 = vpop.xlane.xlu0 %3139
  %v3141 = vrcp.pop %v3140
  %vm3142 = vcmp.ge.f32.partialorder %v3127, %v3134
  %v3143 = vsel %vm3142, %v744, 128
  %v3144 = vsel %vm665, %v3143, 2147483647
  %v3145 = vand.u32 %v3144, 65535
  %v3146 = vshra.s32 %v3144, 16
  %v3147 = vcvt.s32.f32 %v3145
  %v3148 = vcvt.s32.f32 %v3146
  %3149 = vmin.xlane.f32.xlu0 %v3148
  %v3150 = vpop.xlane.xlu0 %3149
  %vm3151 = vcmp.eq.f32.partialorder %v3148, %v3150
  %v3152 = vsel %vm3151, %v3147, inf
  %3153 = vmin.xlane.f32.xlu0 %v3152
  %v3154 = vpop.xlane.xlu0 %3153
  %v3155 = vcvt.f32.s32 %v3154
  %v3156 = vcvt.f32.s32 %v3150
  %v3157 = vshll.u32 %v3156, 16
  %v3158 = vadd.s32 %v3157, %v3155
  %vm3159 = vcmp.eq.s32.totalorder %v744, 6
  %v3160 = vsel %vm3159, %v3158, %v2829
  %v3161 = vsel %vm3159, %v3141, %v2830
  %vm3162 = vcmp.eq.s32.totalorder %v744, %v3158
  %v3163 = vsel %vm3162, 1.0, 0.0
  %v3164 = vpack.c.bf16 %v3163, %v3163
  %3165 = vmatprep.subr.bf16.mxu0 0
  %3166 = vmatpush1.bf16.msra.mxu0 %v1163
  %3167 = vmatprep.subr.bf16.mxu0 0
  %3168 = vmatpush1.bf16.msra.mxu0 %v1164
  %3169 = vmatprep.subr.bf16.mxu0 0
  %3170 = vmatpush1.bf16.msra.mxu0 %v1165
  %3171 = vmatprep.subr.bf16.mxu0 0
  %3172 = vmatpush1.bf16.msra.mxu0 %v1166
  %3173 = vmatprep.subr.bf16.mxu0 0
  %3174 = vmatpush1.bf16.msra.mxu0 %v1167
  %3175 = vmatprep.subr.bf16.mxu0 0
  %3176 = vmatpush1.bf16.msra.mxu0 %v1168
  %3177 = vmatprep.subr.bf16.mxu0 0
  %3178 = vmatpush1.bf16.msra.mxu0 %v1169
  %3179 = vmatprep.subr.bf16.mxu0 0
  %3180 = vmatpush1.bf16.msra.mxu0 %v1170
  %3181 = vmatprep.subr.bf16.mxu0 0
  %3182 = vmatpush1.bf16.msra.mxu0 0
  %3183 = vmatprep.subr.bf16.mxu0 0
  %3184 = vmatpush1.bf16.msra.mxu0 0
  %3185 = vmatprep.subr.bf16.mxu0 0
  %3186 = vmatpush1.bf16.msra.mxu0 0
  %3187 = vmatprep.subr.bf16.mxu0 0
  %3188 = vmatpush1.bf16.msra.mxu0 0
  %3189 = vmatprep.subr.bf16.mxu0 0
  %3190 = vmatpush1.bf16.msra.mxu0 0
  %3191 = vmatprep.subr.bf16.mxu0 0
  %3192 = vmatpush1.bf16.msra.mxu0 0
  %3193 = vmatprep.subr.bf16.mxu0 0
  %3194 = vmatpush1.bf16.msra.mxu0 0
  %3195 = vmatprep.subr.bf16.mxu0 0
  %3196 = vmatpush1.bf16.msra.mxu0 0
  %3197 = vmatprep.mubr.bf16.mxu0 0
  %3198 = vmatmul.mubr.bf16.gmra.mrb[0].mxu0 %v3164
  %v3199 = vpop.f32.mrb[0].mxu0
  %v3200 = vadd.f32 0.0, %v3199
  %v3201 = vpop.f32.mrb[0].mxu0
  %v3202 = vpop.f32.mrb[0].mxu0
  %v3203 = vpop.f32.mrb[0].mxu0
  %3204 = vdwg.mxu0
  %v3205 = vsel %vm42, %v3200, %v2943
  %v3206 = vpack.c.bf16 %v3205, %v3205
  %v3208 = vsel %vm78, %v3206, 0
  %3210 = vmatprep.subr.bf16.mxu0 0
  %3211 = vmatpush1.bf16.msra.mxu0 %v779
  %3212 = vmatprep.subr.bf16.mxu0 0
  %3213 = vmatpush1.bf16.msra.mxu0 %v780
  %3214 = vmatprep.subr.bf16.mxu0 0
  %3215 = vmatpush1.bf16.msra.mxu0 %v781
  %3216 = vmatprep.subr.bf16.mxu0 0
  %3217 = vmatpush1.bf16.msra.mxu0 %v782
  %3218 = vmatprep.subr.bf16.mxu0 0
  %3219 = vmatpush1.bf16.msra.mxu0 0
  %3220 = vmatprep.subr.bf16.mxu0 0
  %3221 = vmatpush1.bf16.msra.mxu0 0
  %3222 = vmatprep.subr.bf16.mxu0 0
  %3223 = vmatpush1.bf16.msra.mxu0 0
  %3224 = vmatprep.subr.bf16.mxu0 0
  %3225 = vmatpush1.bf16.msra.mxu0 0
  %3226 = vmatprep.subr.bf16.mxu0 0
  %3227 = vmatpush1.bf16.msra.mxu0 0
  %3228 = vmatprep.subr.bf16.mxu0 0
  %3229 = vmatpush1.bf16.msra.mxu0 0
  %3230 = vmatprep.subr.bf16.mxu0 0
  %3231 = vmatpush1.bf16.msra.mxu0 0
  %3232 = vmatprep.subr.bf16.mxu0 0
  %3233 = vmatpush1.bf16.msra.mxu0 0
  %3234 = vmatprep.subr.bf16.mxu0 0
  %3235 = vmatpush1.bf16.msra.mxu0 0
  %3236 = vmatprep.subr.bf16.mxu0 0
  %3237 = vmatpush1.bf16.msra.mxu0 0
  %3238 = vmatprep.subr.bf16.mxu0 0
  %3239 = vmatpush1.bf16.msra.mxu0 0
  %3240 = vmatprep.subr.bf16.mxu0 0
  %3241 = vmatpush1.bf16.msra.mxu0 0
  %3242 = vmatprep.mubr.bf16.mxu0 0
  %3243 = vmatmul.mubr.bf16.gmra.mrb[0].mxu0 %v3208
  %v3244 = vpop.f32.mrb[0].mxu0
  %v3245 = vadd.f32 %v759, %v3244
  %v3246 = vpop.f32.mrb[0].mxu0
  %v3247 = vpop.f32.mrb[0].mxu0
  %v3248 = vpop.f32.mrb[0].mxu0
  %3249 = vdwg.mxu0
  %v3250 = vxor.u32 %v3245, 2147483648
  %v3251 = vmul.f32 %v3250, 1.442695
  %v3252 = vpow.pop %v3251
  %v3253 = vadd.f32 %v3252, 1.0
  %v3254 = vrcp.pop %v3253
  %v3255 = vmul.f32 1.0, %v3254
  %3257 = vrot.lane.b32.xlu0 %v3245, 32
  %v3258 = vpop.permute.xlu0 %3257
  %v3260 = vmul.f32 %v3255, %v3258
  %3262 = vrot.lane.b32.xlu0 %v3260, 64
  %v3263 = vpop.permute.xlu0 %3262
  %v3265 = vadd.f32 %v3245, %v3263
  %v3266 = vtanh.pop %v3265
  %v3267 = vsub.f32 1.0, %v3255
  %3269 = vrot.lane.b32.xlu0 %v3266, 96
  %v3270 = vpop.permute.xlu0 %3269
  %v3272 = vmul.f32 %v3267, %v3270
  %v3273 = vmul.f32 %v3255, %v2943
  %v3274 = vadd.f32 %v3272, %v3273
  %v3275 = vpack.c.bf16 %v3274, %v3274
  %3277 = vrot.lane.b32.xlu0 %v3275, 96
  %v3278 = vpop.permute.xlu0 %3277
  %v3280 = vsel %vm42, %v3278, 0
  %3282 = vmatprep.subr.bf16.mxu0 0
  %3283 = vmatpush1.bf16.xpose.msra.mxu0 %v700
  %3284 = vmatprep.subr.bf16.mxu0 0
  %3285 = vmatpush1.bf16.xpose.msra.mxu0 0
  %3286 = vmatprep.subr.bf16.mxu0 0
  %3287 = vmatpush1.bf16.xpose.msra.mxu0 0
  %3288 = vmatprep.subr.bf16.mxu0 0
  %3289 = vmatpush1.bf16.xpose.msra.mxu0 0
  %3290 = vmatprep.subr.bf16.mxu0 0
  %3291 = vmatpush1.bf16.xpose.msra.mxu0 0
  %3292 = vmatprep.subr.bf16.mxu0 0
  %3293 = vmatpush1.bf16.xpose.msra.mxu0 0
  %3294 = vmatprep.subr.bf16.mxu0 0
  %3295 = vmatpush1.bf16.xpose.msra.mxu0 0
  %3296 = vmatprep.subr.bf16.mxu0 0
  %3297 = vmatpush1.bf16.xpose.msra.mxu0 0
  %3298 = vmatprep.subr.bf16.mxu0 0
  %3299 = vmatpush1.bf16.xpose.msra.mxu0 0
  %3300 = vmatprep.subr.bf16.mxu0 0
  %3301 = vmatpush1.bf16.xpose.msra.mxu0 0
  %3302 = vmatprep.subr.bf16.mxu0 0
  %3303 = vmatpush1.bf16.xpose.msra.mxu0 0
  %3304 = vmatprep.subr.bf16.mxu0 0
  %3305 = vmatpush1.bf16.xpose.msra.mxu0 0
  %3306 = vmatprep.subr.bf16.mxu0 0
  %3307 = vmatpush1.bf16.xpose.msra.mxu0 0
  %3308 = vmatprep.subr.bf16.mxu0 0
  %3309 = vmatpush1.bf16.xpose.msra.mxu0 0
  %3310 = vmatprep.subr.bf16.mxu0 0
  %3311 = vmatpush1.bf16.xpose.msra.mxu0 0
  %3312 = vmatprep.subr.bf16.mxu0 0
  %3313 = vmatpush1.bf16.xpose.msra.mxu0 0
  %3314 = vmatprep.mubr.bf16.mxu0 0
  %3315 = vmatmul.mubr.bf16.gmra.mrb[0].mxu0 %v3280
  %v3316 = vpop.f32.mrb[0].mxu0
  %v3317 = vadd.f32 0.0, %v3316
  %v3318 = vpop.f32.mrb[0].mxu0
  %v3319 = vpop.f32.mrb[0].mxu0
  %v3320 = vpop.f32.mrb[0].mxu0
  %3321 = vdwg.mxu0
  %v3322 = vsel %vm902, %v3317, -inf
  %3323 = vmax.xlane.f32.xlu0 %v3322
  %v3324 = vpop.xlane.xlu0 %3323
  %v3325 = vsub.f32 %v3317, %v3324
  %v3326 = vmul.f32 %v3325, 1.442695
  %v3327 = vpow.pop %v3326
  %v3328 = vsel %vm902, %v3327, 0.0
  %3329 = vadd.xlane.f32.xlu0 %v3328
  %v3330 = vpop.xlane.xlu0 %3329
  %v3331 = vpack.c.bf16 %v3327, %v3327
  %v3333 = vsel %vm913, %v3331, 0
  %3335 = vmatprep.subr.bf16.mxu0 0
  %3336 = vmatpush1.bf16.msra.mxu0 %v918
  %3337 = vmatprep.subr.bf16.mxu0 0
  %3338 = vmatpush1.bf16.msra.mxu0 0
  %3339 = vmatprep.subr.bf16.mxu0 0
  %3340 = vmatpush1.bf16.msra.mxu0 0
  %3341 = vmatprep.subr.bf16.mxu0 0
  %3342 = vmatpush1.bf16.msra.mxu0 0
  %3343 = vmatprep.subr.bf16.mxu0 0
  %3344 = vmatpush1.bf16.msra.mxu0 0
  %3345 = vmatprep.subr.bf16.mxu0 0
  %3346 = vmatpush1.bf16.msra.mxu0 0
  %3347 = vmatprep.subr.bf16.mxu0 0
  %3348 = vmatpush1.bf16.msra.mxu0 0
  %3349 = vmatprep.subr.bf16.mxu0 0
  %3350 = vmatpush1.bf16.msra.mxu0 0
  %3351 = vmatprep.subr.bf16.mxu0 0
  %3352 = vmatpush1.bf16.msra.mxu0 0
  %3353 = vmatprep.subr.bf16.mxu0 0
  %3354 = vmatpush1.bf16.msra.mxu0 0
  %3355 = vmatprep.subr.bf16.mxu0 0
  %3356 = vmatpush1.bf16.msra.mxu0 0
  %3357 = vmatprep.subr.bf16.mxu0 0
  %3358 = vmatpush1.bf16.msra.mxu0 0
  %3359 = vmatprep.subr.bf16.mxu0 0
  %3360 = vmatpush1.bf16.msra.mxu0 0
  %3361 = vmatprep.subr.bf16.mxu0 0
  %3362 = vmatpush1.bf16.msra.mxu0 0
  %3363 = vmatprep.subr.bf16.mxu0 0
  %3364 = vmatpush1.bf16.msra.mxu0 0
  %3365 = vmatprep.subr.bf16.mxu0 0
  %3366 = vmatpush1.bf16.msra.mxu0 0
  %3367 = vmatprep.mubr.bf16.mxu0 0
  %3368 = vmatmul.mubr.bf16.gmra.mrb[0].mxu0 %v3333
  %v3369 = vpop.f32.mrb[0].mxu0
  %v3370 = vadd.f32 0.0, %v3369
  %v3371 = vpop.f32.mrb[0].mxu0
  %v3372 = vpop.f32.mrb[0].mxu0
  %v3373 = vpop.f32.mrb[0].mxu0
  %3374 = vdwg.mxu0
  %v3375 = vrcp.pop %v3330
  %v3376 = vmul.f32 %v3370, %v3375
  %3377 = vmatprep.subr.bf16.mxu0 0
  %3378 = vmatpush1.bf16.msra.mxu0 %v974
  %3379 = vmatprep.subr.bf16.mxu0 0
  %3380 = vmatpush1.bf16.msra.mxu0 %v975
  %3381 = vmatprep.subr.bf16.mxu0 0
  %3382 = vmatpush1.bf16.msra.mxu0 0
  %3383 = vmatprep.subr.bf16.mxu0 0
  %3384 = vmatpush1.bf16.msra.mxu0 0
  %3385 = vmatprep.subr.bf16.mxu0 0
  %3386 = vmatpush1.bf16.msra.mxu0 0
  %3387 = vmatprep.subr.bf16.mxu0 0
  %3388 = vmatpush1.bf16.msra.mxu0 0
  %3389 = vmatprep.subr.bf16.mxu0 0
  %3390 = vmatpush1.bf16.msra.mxu0 0
  %3391 = vmatprep.subr.bf16.mxu0 0
  %3392 = vmatpush1.bf16.msra.mxu0 0
  %3393 = vmatprep.subr.bf16.mxu0 0
  %3394 = vmatpush1.bf16.msra.mxu0 0
  %3395 = vmatprep.subr.bf16.mxu0 0
  %3396 = vmatpush1.bf16.msra.mxu0 0
  %3397 = vmatprep.subr.bf16.mxu0 0
  %3398 = vmatpush1.bf16.msra.mxu0 0
  %3399 = vmatprep.subr.bf16.mxu0 0
  %3400 = vmatpush1.bf16.msra.mxu0 0
  %3401 = vmatprep.subr.bf16.mxu0 0
  %3402 = vmatpush1.bf16.msra.mxu0 0
  %3403 = vmatprep.subr.bf16.mxu0 0
  %3404 = vmatpush1.bf16.msra.mxu0 0
  %3405 = vmatprep.subr.bf16.mxu0 0
  %3406 = vmatpush1.bf16.msra.mxu0 0
  %3407 = vmatprep.subr.bf16.mxu0 0
  %3408 = vmatpush1.bf16.msra.mxu0 0
  %3409 = vmatprep.mubr.bf16.mxu0 0
  %3410 = vmatmul.mubr.bf16.gmra.mrb[0].mxu0 %v3280
  %v3411 = vpop.f32.mrb[0].mxu0
  %v3412 = vadd.f32 %v3376, %v3411
  %v3413 = vpop.f32.mrb[0].mxu0
  %v3414 = vpop.f32.mrb[0].mxu0
  %v3415 = vpop.f32.mrb[0].mxu0
  %3416 = vdwg.mxu0
  %v3417 = vadd.f32 %v3412, %v1018
  %v3418 = vtanh.pop %v3417
  %v3419 = vpack.c.bf16 %v3418, %v3418
  %v3421 = vsel %vm42, %v3419, 0
  %3423 = vmatprep.subr.bf16.mxu0 0
  %3424 = vmatpush1.bf16.msra.mxu0 %v1035
  %3425 = vmatprep.subr.bf16.mxu0 0
  %3426 = vmatpush1.bf16.msra.mxu0 %v1036
  %3427 = vmatprep.subr.bf16.mxu0 0
  %3428 = vmatpush1.bf16.msra.mxu0 0
  %3429 = vmatprep.subr.bf16.mxu0 0
  %3430 = vmatpush1.bf16.msra.mxu0 0
  %3431 = vmatprep.subr.bf16.mxu0 0
  %3432 = vmatpush1.bf16.msra.mxu0 0
  %3433 = vmatprep.subr.bf16.mxu0 0
  %3434 = vmatpush1.bf16.msra.mxu0 0
  %3435 = vmatprep.subr.bf16.mxu0 0
  %3436 = vmatpush1.bf16.msra.mxu0 0
  %3437 = vmatprep.subr.bf16.mxu0 0
  %3438 = vmatpush1.bf16.msra.mxu0 0
  %3439 = vmatprep.subr.bf16.mxu0 0
  %3440 = vmatpush1.bf16.msra.mxu0 0
  %3441 = vmatprep.subr.bf16.mxu0 0
  %3442 = vmatpush1.bf16.msra.mxu0 0
  %3443 = vmatprep.subr.bf16.mxu0 0
  %3444 = vmatpush1.bf16.msra.mxu0 0
  %3445 = vmatprep.subr.bf16.mxu0 0
  %3446 = vmatpush1.bf16.msra.mxu0 0
  %3447 = vmatprep.subr.bf16.mxu0 0
  %3448 = vmatpush1.bf16.msra.mxu0 0
  %3449 = vmatprep.subr.bf16.mxu0 0
  %3450 = vmatpush1.bf16.msra.mxu0 0
  %3451 = vmatprep.subr.bf16.mxu0 0
  %3452 = vmatpush1.bf16.msra.mxu0 0
  %3453 = vmatprep.subr.bf16.mxu0 0
  %3454 = vmatpush1.bf16.msra.mxu0 0
  %3455 = vmatprep.mubr.bf16.mxu0 0
  %3456 = vmatmul.mubr.bf16.gmra.mrb[0].mxu0 %v3421
  %v3457 = vpop.f32.mrb[0].mxu0
  %v3458 = vadd.f32 %v1026, %v3457
  %v3459 = vpop.f32.mrb[0].mxu0
  %v3460 = vpop.f32.mrb[0].mxu0
  %v3461 = vpop.f32.mrb[0].mxu0
  %3462 = vdwg.mxu0
  %v3463 = vsel %vm665, %v3458, -inf
  %3464 = vmax.xlane.f32.xlu0 %v3463
  %v3465 = vpop.xlane.xlu0 %3464
  %v3466 = vsub.f32 %v3458, %v3465
  %v3467 = vmul.f32 %v3466, 1.442695
  %v3468 = vpow.pop %v3467
  %v3469 = vsel %vm665, %v3468, 0.0
  %3470 = vadd.xlane.f32.xlu0 %v3469
  %v3471 = vpop.xlane.xlu0 %3470
  %v3472 = vrcp.pop %v3471
  %vm3473 = vcmp.ge.f32.partialorder %v3458, %v3465
  %v3474 = vsel %vm3473, %v744, 128
  %v3475 = vsel %vm665, %v3474, 2147483647
  %v3476 = vand.u32 %v3475, 65535
  %v3477 = vshra.s32 %v3475, 16
  %v3478 = vcvt.s32.f32 %v3476
  %v3479 = vcvt.s32.f32 %v3477
  %3480 = vmin.xlane.f32.xlu0 %v3479
  %v3481 = vpop.xlane.xlu0 %3480
  %vm3482 = vcmp.eq.f32.partialorder %v3479, %v3481
  %v3483 = vsel %vm3482, %v3478, inf
  %3484 = vmin.xlane.f32.xlu0 %v3483
  %v3485 = vpop.xlane.xlu0 %3484
  %v3486 = vcvt.f32.s32 %v3485
  %v3487 = vcvt.f32.s32 %v3481
  %v3488 = vshll.u32 %v3487, 16
  %v3489 = vadd.s32 %v3488, %v3486
  %vm3490 = vcmp.eq.s32.totalorder %v744, 7
  %v3491 = vsel %vm3490, %v3489, %v3160
  %v3492 = vsel %vm3490, %v3472, %v3161
  %3493 = vst [vmem:[%s11] sm:$0x1] %v3491
  %3494 = vst [vmem:[%s12] sm:$0x1] %v3492
  // Predicated region
  $region46: #{greedy_search_decode.1} parent=0 // pred_check
    _
  $region47: #{greedy_search_decode.1} parent=0 // pred_check_branch
    %3496 = sbr.rel (0) target = $region49
  $region48: #{greedy_search_decode.1} parent=0 // pred_region
    _
  $region49: #{greedy_search_decode.1} parent=0 // pred_fallthru
    _
  // Predicated region
  $region50: #{greedy_search_decode.1} parent=0 // pred_check
    _
  $region51: #{greedy_search_decode.1} parent=0 // pred_check_branch
    %3498 = sbr.rel (0) target = $region53
  $region52: #{greedy_search_decode.1} parent=0 // pred_region
    _
  $region53: #{greedy_search_decode.1} parent=0 // pred_fallthru
    _
  // Predicated region
  $region54: #{greedy_search_decode.1} parent=0 // pred_check
    _
  $region55: #{greedy_search_decode.1} parent=0 // pred_check_branch
    %3500 = sbr.rel (0) target = $region57
  $region56: #{greedy_search_decode.1} parent=0 // pred_region
    _
  $region57: #{greedy_search_decode.1} parent=0 // pred_fallthru
    _
  // Predicated region
  $region58: #{greedy_search_decode.1} parent=0 // pred_check
    _
  $region59: #{greedy_search_decode.1} parent=0 // pred_check_branch
    %3502 = sbr.rel (0) target = $region61
  $region60: #{greedy_search_decode.1} parent=0 // pred_region
    _
  $region61: #{greedy_search_decode.1} parent=0 // pred_fallthru
    _

</llo_original>
